<compile_context>
chip_gen: v6e
topology: v6e:2x2x1
jax: 0.10.0
libtpu: 0.0.40
codegen_flags: <defaults>
</compile_context>

<pallas_src>
import functools
import math

import jax
import jax.numpy as jnp
from jax import lax
from jax.experimental import pallas as pl
from jax.experimental.pallas import tpu as pltpu


# ----------------------------------------------------------------------------
# Helpers.
# ----------------------------------------------------------------------------
def _block_diag(blocks):
    e = sum(b.shape[0] for b in blocks)
    out = jnp.zeros((e, e), dtype=blocks[0].dtype)
    off = 0
    for b in blocks:
        h = b.shape[0]
        out = out.at[off:off + h, off:off + h].set(b)
        off += h
    return out


def _compiler_params(vmem_estimate_bytes):
    # Explicit scoped-VMEM budget (2x headroom), clamped so it also fits v7x.
    limit = int(min(max(2 * vmem_estimate_bytes, 32 * 1024 * 1024),
                    64 * 1024 * 1024))
    return pltpu.CompilerParams(dimension_semantics=("parallel",),
                                vmem_limit_bytes=limit)


def _pick_block_b(batch, seq_len):
    blk = max(1, min(batch, 512 // max(seq_len, 1)))
    while batch % blk:
        blk -= 1
    return blk


def _pick_block_p(pool, batch):
    target = max(1, min(pool, 256 // max(batch, 1)))
    for pb in range(target, 0, -1):
        if pool % pb == 0 and (pb * batch) % 8 == 0:
            return pb
    return pool   # full block is always legal


# ----------------------------------------------------------------------------
# Fused multi-scale encoder kernel (gridded over the batch axis).
# ----------------------------------------------------------------------------
def _encoder_kernel(x_ref, w1_ref, b1_ref, w2_ref, b2_ref, out_ref, *,
                    seq_len, pool_size, compute_dtype):
    L, P = seq_len, pool_size
    bt, _, cin = x_ref.shape
    E = out_ref.shape[-1]
    win = L // P
    R = bt * L
    cdt = compute_dtype

    x = x_ref[...].reshape(R, cin)                      # f32 rows (b, l)
    row = lax.broadcasted_iota(jnp.int32, (R, 1), 0)
    no_prev = (row % L) == 0                            # l == 0      -> zero-pad left
    no_next = (row % L) == (L - 1)                      # l == L - 1  -> zero-pad right

    def conv3_bn_relu(t, w_ref, b_ref):
        # conv1d(k=3, padding=1) as a 3-tap shift-accumulate (BN folded in w/b).
        prev = jnp.where(no_prev, 0.0, pltpu.roll(t, 1, 0))       # t[l-1]
        nxt = jnp.where(no_next, 0.0, pltpu.roll(t, R - 1, 0))    # t[l+1]
        acc = jnp.dot(t.astype(cdt), w_ref[1], preferred_element_type=jnp.float32)
        acc = acc + jnp.dot(prev.astype(cdt), w_ref[0],
                            preferred_element_type=jnp.float32)
        acc = acc + jnp.dot(nxt.astype(cdt), w_ref[2],
                            preferred_element_type=jnp.float32)
        return jnp.maximum(acc + b_ref[...], 0.0)

    # conv1 of all encoders fused along N; conv2 fused block-diagonally, so the
    # result is already the concatenated feature slab (no per-encoder concat).
    y = conv3_bn_relu(x, w1_ref, b1_ref)                # (R, E) f32
    z = conv3_bn_relu(y, w2_ref, b2_ref)                # (R, E) f32
    # AdaptiveAvgPool1d with equal windows -> reshape + mean.
    out_ref[...] = z.reshape(bt, P, win, E).mean(axis=2)


def encode_scales(x, enc_params, pool_sizes, *, compute_dtype=jnp.float32,
                  block_b=None):
    B, L, Cin = x.shape
    P = pool_sizes[0]
    assert all(ps == P for ps in pool_sizes), "torch.cat requires equal pool sizes"
    assert L % P == 0, "AdaptiveAvgPool1d reproduced only for L % pool_size == 0"

    # Fold eval-mode BatchNorm into conv weights/bias; fuse encoders.
    w1_list, b1_list, w2_list, b2_list, hidden_dims = [], [], [], [], []
    for (w1, b1, s1, t1, w2, b2, s2, t2) in enc_params:
        hidden_dims.append(w1.shape[-1])
        w1_list.append(w1 * s1)                         # (3, Cin, H)
        b1_list.append(b1 * s1 + t1)                    # (1, H)
        w2_list.append(w2 * s2)                         # (3, H, H)
        b2_list.append(b2 * s2 + t2)                    # (1, H)
    E = sum(hidden_dims)
    w1_all = jnp.concatenate(w1_list, axis=-1).astype(compute_dtype)      # (3,Cin,E)
    b1_all = jnp.concatenate(b1_list, axis=-1)                            # (1,E) f32
    w2_all = jnp.stack(
        [_block_diag([w[k] for w in w2_list]) for k in range(3)],
        axis=0).astype(compute_dtype)                                     # (3,E,E)
    b2_all = jnp.concatenate(b2_list, axis=-1)                            # (1,E) f32

    bt = block_b if block_b is not None else _pick_block_b(B, L)
    assert B % bt == 0

    wbytes = jnp.dtype(compute_dtype).itemsize
    vmem_est = (2 * (bt * L * Cin * 4 + bt * P * E * 4)
                + (3 * Cin * E + 3 * E * E) * wbytes + 2 * E * 4
                + 10 * bt * L * E * 4)
    flops = 2 * B * L * (3 * Cin * E + 3 * E * E)
    bytes_accessed = (x.nbytes + w1_all.nbytes + b1_all.nbytes + w2_all.nbytes
                      + b2_all.nbytes + B * P * E * 4)

    kernel = functools.partial(_encoder_kernel, seq_len=L, pool_size=P,
                               compute_dtype=compute_dtype)
    return pl.pallas_call(
        kernel,
        out_shape=jax.ShapeDtypeStruct((B, P, E), jnp.float32),
        grid=(B // bt,),
        in_specs=[
            pl.BlockSpec((bt, L, Cin), lambda i: (i, 0, 0)),
            pl.BlockSpec((3, Cin, E), lambda i: (0, 0, 0)),   # weights: constant
            pl.BlockSpec((1, E), lambda i: (0, 0)),           # blocks stay resident
            pl.BlockSpec((3, E, E), lambda i: (0, 0, 0)),
            pl.BlockSpec((1, E), lambda i: (0, 0)),
        ],
        out_specs=pl.BlockSpec((bt, P, E), lambda i: (i, 0, 0)),
        compiler_params=_compiler_params(vmem_est),
        cost_estimate=pl.CostEstimate(flops=flops, transcendentals=0,
                                      bytes_accessed=bytes_accessed),
    )(x, w1_all, b1_all, w2_all, b2_all)


# ----------------------------------------------------------------------------
# CrossScaleAttention kernel: 4-head self-attention over the B axis (per pooled
# position p), gridded over p, fused with Wo and the output projection.
# ----------------------------------------------------------------------------
def _fusion_kernel(x_ref, wq_ref, wk_ref, wv_ref, bqkv_ref, wo_ref, bo_ref,
                   wp_ref, bp_ref, out_ref, aw_ref, *, num_heads,
                   compute_dtype, fast_recip):
    pb, B, E = x_ref.shape
    nh = num_heads
    hd = E // nh
    cdt = compute_dtype
    scale = 1.0 / math.sqrt(hd)

    x2 = x_ref[...].reshape(pb * B, E)                  # rows ordered p*B + b
    # Shared-row Q/K/V projections (three dots sharing x2 -> no packed-QKV
    # lane slices at non-128 offsets).
    q = jnp.dot(x2, wq_ref[...], preferred_element_type=jnp.float32) + bqkv_ref[0:1, :]
    k = jnp.dot(x2, wk_ref[...], preferred_element_type=jnp.float32) + bqkv_ref[1:2, :]
    v = jnp.dot(x2, wv_ref[...], preferred_element_type=jnp.float32) + bqkv_ref[2:3, :]
    q = (q * scale).astype(cdt)
    k = k.astype(cdt)
    v = v.astype(cdt)

    # Per-head score slabs batched over p (4 static iterations), then ONE
    # softmax + ONE batched PV dot over the whole (nh*pb, B, B) slab.
    s_parts, v_parts = [], []
    for h in range(nh):
        lo = h * hd
        qh = q[:, lo:lo + hd].reshape(pb, B, hd)
        kh = k[:, lo:lo + hd].reshape(pb, B, hd)
        vh = v[:, lo:lo + hd].reshape(pb, B, hd)
        s_parts.append(lax.dot_general(qh, kh, (((2,), (2,)), ((0,), (0,))),
                                       preferred_element_type=jnp.float32))
        v_parts.append(vh)
    s = jnp.concatenate(s_parts, axis=0)                # (nh*pb, B, B) f32
    vv = jnp.concatenate(v_parts, axis=0)               # (nh*pb, B, hd)

    s = s - jnp.max(s, axis=-1, keepdims=True)
    e = jnp.exp(s)
    denom = jnp.sum(e, axis=-1, keepdims=True)
    probs = e * pl.reciprocal(denom, approx=fast_recip)  # EUP reciprocal
    ctx = lax.dot_general(probs.astype(cdt), vv, (((2,), (1,)), ((0,), (0,))),
                          preferred_element_type=jnp.float32)   # (nh*pb, B, hd)

    ctx_parts = [ctx[h * pb:(h + 1) * pb].reshape(pb * B, hd) for h in range(nh)]
    ctx2 = jnp.concatenate(ctx_parts, axis=-1).astype(cdt)      # (pb*B, E)

    attn = jnp.dot(ctx2, wo_ref[...], preferred_element_type=jnp.float32) + bo_ref[...]
    out = jnp.dot(attn.astype(cdt), wp_ref[...], preferred_element_type=jnp.float32) + bp_ref[...]
    out_ref[...] = out                                  # (pb*B, Hout), lane-dense
    # Head-averaged attention weights, lane-dense (pb*B, B).
    aw_ref[...] = probs.reshape(nh, pb * B, B).mean(axis=0)


def cross_scale_attention(concat, attn_params, num_heads, *,
                          compute_dtype=jnp.float32, block_p=None):
    B, P, E = concat.shape
    wq, bq, wk, bk, wv, bv, wo, bo, wp, bp = attn_params
    Hout = wp.shape[0]
    cdt = compute_dtype
    fast = jnp.dtype(cdt) != jnp.dtype(jnp.float32)

    # Pre-transpose weights so the kernel does plain row-major dots.
    wq_t = wq.T.astype(cdt)                              # (E, E)
    wk_t = wk.T.astype(cdt)
    wv_t = wv.T.astype(cdt)
    bqkv = jnp.concatenate([bq, bk, bv], axis=0)         # (3, E) f32
    wo_t = wo.T.astype(cdt)                              # (E, E)
    wp_t = wp.T.astype(cdt)                              # (E, Hout)

    # (P, B, E)-ordered slab so per-p attention needs no in-kernel transposes.
    xt = jnp.transpose(concat, (1, 0, 2)).astype(cdt)    # tiny layout plumbing

    pb = block_p if block_p is not None else _pick_block_p(P, B)
    assert P % pb == 0 and ((pb * B) % 8 == 0 or pb == P)

    wbytes = jnp.dtype(cdt).itemsize
    vmem_est = (2 * (pb * B * E * wbytes + pb * B * Hout * 4 + pb * B * B * 4)
                + (4 * E * E + E * Hout) * wbytes + (4 * E + Hout) * 4
                + 16 * pb * B * E * 4)
    flops = (2 * P * B * E * (3 * E + E + Hout)
             + 4 * P * num_heads * B * B * (E // num_heads))
    trans = P * num_heads * B * B
    bytes_accessed = 4 * (P * B * E + 4 * E * E + E * Hout + 4 * E + Hout
                          + P * B * Hout + P * B * B)

    kernel = functools.partial(_fusion_kernel, num_heads=num_heads,
                               compute_dtype=cdt, fast_recip=fast)
    out2, aw2 = pl.pallas_call(
        kernel,
        out_shape=(jax.ShapeDtypeStruct((P * B, Hout), jnp.float32),
                   jax.ShapeDtypeStruct((P * B, B), jnp.float32)),
        grid=(P // pb,),
        in_specs=[
            pl.BlockSpec((pb, B, E), lambda j: (j, 0, 0)),
            pl.BlockSpec((E, E), lambda j: (0, 0)),
            pl.BlockSpec((E, E), lambda j: (0, 0)),
            pl.BlockSpec((E, E), lambda j: (0, 0)),
            pl.BlockSpec((3, E), lambda j: (0, 0)),
            pl.BlockSpec((E, E), lambda j: (0, 0)),
            pl.BlockSpec((1, E), lambda j: (0, 0)),
            pl.BlockSpec((E, Hout), lambda j: (0, 0)),
            pl.BlockSpec((1, Hout), lambda j: (0, 0)),
        ],
        out_specs=(pl.BlockSpec((pb * B, Hout), lambda j: (j, 0)),
                   pl.BlockSpec((pb * B, B), lambda j: (j, 0))),
        compiler_params=_compiler_params(vmem_est),
        cost_estimate=pl.CostEstimate(flops=flops, transcendentals=trans,
                                      bytes_accessed=bytes_accessed),
    )(xt, wq_t, wk_t, wv_t, bqkv, wo_t, bo, wp_t, bp)

    fused = jnp.transpose(out2.reshape(P, B, Hout), (1, 0, 2))   # (B, P, Hout)
    attn_w = aw2.reshape(P, B, B)
    return fused, attn_w


def multiscale_encoder(x, enc_params, attn_params, pool_sizes, num_heads, *,
                       compute_dtype=jnp.float32, block_b=None, block_p=None):
    concat = encode_scales(x, enc_params, pool_sizes,
                           compute_dtype=compute_dtype, block_b=block_b)
    return cross_scale_attention(concat, attn_params, num_heads,
                                 compute_dtype=compute_dtype, block_p=block_p)


# ----------------------------------------------------------------------------
# Pure-JAX reference (independent of the kernels) for correctness checking.
# ----------------------------------------------------------------------------
def _ref_scale_encoder(x, params, pool_size):
    w1, b1, s1, t1, w2, b2, s2, t2 = params
    dn = ('NWC', 'WIO', 'NWC')
    y = lax.conv_general_dilated(x, w1, (1,), [(1, 1)], dimension_numbers=dn) + b1
    y = jnp.maximum(y * s1 + t1, 0.0)
    z = lax.conv_general_dilated(y, w2, (1,), [(1, 1)], dimension_numbers=dn) + b2
    z = jnp.maximum(z * s2 + t2, 0.0)
    B, L, C = z.shape
    return z.reshape(B, pool_size, L // pool_size, C).mean(axis=2)


def _ref_fusion(concat, attn_params, num_heads):
    wq, bq, wk, bk, wv, bv, wo, bo, wp, bp = attn_params
    B, P, E = concat.shape
    hd = E // num_heads
    q = concat @ wq.T + bq
    k = concat @ wk.T + bk
    v = concat @ wv.T + bv

    def split(t):  # (B, P, E) -> (h, P, B, hd)
        return t.reshape(B, P, num_heads, hd).transpose(2, 1, 0, 3)

    qh, kh, vh = split(q), split(k), split(v)
    s = jnp.einsum('hpqd,hpkd->hpqk', qh, kh) / math.sqrt(hd)
    p = jax.nn.softmax(s, axis=-1)
    ctx = jnp.einsum('hpqk,hpkd->hpqd', p, vh)
    ctx = ctx.transpose(2, 1, 0, 3).reshape(B, P, E)
    attn_out = ctx @ wo.T + bo
    fused = attn_out @ wp.T + bp
    return fused, p.mean(axis=0)


def multiscale_encoder_ref(x, enc_params, attn_params, pool_sizes, num_heads):
    feats = [_ref_scale_encoder(x, p, ps) for p, ps in zip(enc_params, pool_sizes)]
    concat = jnp.concatenate(feats, axis=-1)
    return _ref_fusion(concat, attn_params, num_heads)


# ----------------------------------------------------------------------------
# Deterministic parameter init (synthetic, no checkpoint).
# ----------------------------------------------------------------------------
def init_params(key, input_dim, hidden_dims, pool_sizes):
    eps = 1e-5
    enc_params = []
    for i, h in enumerate(hidden_dims):
        cin = input_dim if i == 0 else hidden_dims[i - 1]
        # Reference forward feeds raw x to every encoder -> cin must equal input_dim.
        assert cin == input_dim, "config must satisfy hidden_dims[i-1] == input_dim"
        key, *ks = jax.random.split(key, 9)
        w1 = jax.random.normal(ks[0], (3, cin, h), jnp.float32) * 0.2
        b1 = jax.random.normal(ks[1], (1, h), jnp.float32) * 0.1
        g1 = 1.0 + 0.1 * jax.random.normal(ks[2], (1, h), jnp.float32)
        be1 = 0.1 * jax.random.normal(ks[3], (1, h), jnp.float32)
        s1 = g1 / jnp.sqrt(1.0 + eps)        # BN eval: running_mean=0, running_var=1
        t1 = be1
        w2 = jax.random.normal(ks[4], (3, h, h), jnp.float32) * 0.2
        b2 = jax.random.normal(ks[5], (1, h), jnp.float32) * 0.1
        g2 = 1.0 + 0.1 * jax.random.normal(ks[6], (1, h), jnp.float32)
        be2 = 0.1 * jax.random.normal(ks[7], (1, h), jnp.float32)
        s2 = g2 / jnp.sqrt(1.0 + eps)
        t2 = be2
        enc_params.append((w1, b1, s1, t1, w2, b2, s2, t2))

    E = sum(hidden_dims)
    Hout = hidden_dims[-1]
    key, *ks = jax.random.split(key, 11)
    sc = 1.0 / math.sqrt(E)
    wq = jax.random.normal(ks[0], (E, E), jnp.float32) * sc
    wk = jax.random.normal(ks[1], (E, E), jnp.float32) * sc
    wv = jax.random.normal(ks[2], (E, E), jnp.float32) * sc
    bq = jax.random.normal(ks[3], (1, E), jnp.float32) * 0.05
    bk = jax.random.normal(ks[4], (1, E), jnp.float32) * 0.05
    bv = jax.random.normal(ks[5], (1, E), jnp.float32) * 0.05
    wo = jax.random.normal(ks[6], (E, E), jnp.float32) * sc
    bo = jax.random.normal(ks[7], (1, E), jnp.float32) * 0.05
    wp = jax.random.normal(ks[8], (Hout, E), jnp.float32) * sc
    bp = jax.random.normal(ks[9], (1, Hout), jnp.float32) * 0.05
    attn_params = (wq, bq, wk, bk, wv, bv, wo, bo, wp, bp)
    return enc_params, attn_params


if __name__ == "__main__":
    # Small, self-consistent config: the reference module only runs when all
    # pool_sizes are equal (torch.cat) and hidden_dims[i-1] == input_dim
    # (every encoder is applied to the raw x).
    B, L, D = 4, 32, 8
    hidden_dims = [8, 8, 16]       # sum = 32, divisible by num_heads=4
    pool_sizes = [16, 16, 16]
    num_heads = 4

    key = jax.random.PRNGKey(0)
    kx, kp = jax.random.split(key)
    x = jax.random.normal(kx, (B, L, D), jnp.float32)
    enc_params, attn_params = init_params(kp, D, hidden_dims, pool_sizes)

    fused_ref, attn_ref = multiscale_encoder_ref(x, enc_params, attn_params,
                                                 pool_sizes, num_heads)

    # Strict logic check: f32 compute path (exact softmax reciprocal).
    run_f32 = jax.jit(functools.partial(
        multiscale_encoder, pool_sizes=tuple(pool_sizes), num_heads=num_heads,
        compute_dtype=jnp.float32, block_b=1, block_p=4))
    fused32, aw32 = run_f32(x, enc_params, attn_params)
    jax.block_until_ready((fused32, aw32))
    assert fused32.shape == (B, pool_sizes[0], hidden_dims[-1])
    assert aw32.shape == (pool_sizes[0], B, B)
    assert jnp.allclose(fused32, fused_ref, rtol=1e-3, atol=1e-3)
    assert jnp.allclose(aw32, attn_ref, rtol=1e-3, atol=1e-3)

    # Fast path: bf16 MXU inputs (f32 accumulation) + approx EUP reciprocal.
    run_bf16 = jax.jit(functools.partial(
        multiscale_encoder, pool_sizes=tuple(pool_sizes), num_heads=num_heads,
        compute_dtype=jnp.bfloat16, block_b=1, block_p=4))
    fused16, aw16 = run_bf16(x, enc_params, attn_params)
    jax.block_until_ready((fused16, aw16))
    assert jnp.allclose(fused16, fused_ref, rtol=7e-2, atol=7e-2)
    assert jnp.allclose(aw16, attn_ref, rtol=7e-2, atol=7e-2)

    print("KERNEL_OK")
</pallas_src>

<mosaic_0001>
module attributes {stable_mosaic.version = 11 : i64} {
  func.func @_encoder_kernel(%arg0: i32, %arg1: memref<1x32x8xf32, #tpu.memory_space<vmem>>, %arg2: memref<3x8x32xf32, #tpu.memory_space<vmem>>, %arg3: memref<1x32xf32, #tpu.memory_space<vmem>>, %arg4: memref<3x32x32xf32, #tpu.memory_space<vmem>>, %arg5: memref<1x32xf32, #tpu.memory_space<vmem>>, %arg6: memref<1x16x32xf32, #tpu.memory_space<vmem>>) attributes {dimension_semantics = [#tpu.dimension_semantics<parallel>], iteration_bounds = array<i64: 4>, scalar_prefetch = 0 : i64, scratch_operands = 0 : i64, tpu.core_type = #tpu.core_type<tc>, window_params = [{transform_indices = @transform_0, window_bounds = array<i64: 1, 32, 8>}, {pipeline_mode = #tpu.pipeline_mode<synchronous>, transform_indices = @transform_1, window_bounds = array<i64: 3, 8, 32>}, {pipeline_mode = #tpu.pipeline_mode<synchronous>, transform_indices = @transform_2, window_bounds = array<i64: 1, 32>}, {pipeline_mode = #tpu.pipeline_mode<synchronous>, transform_indices = @transform_3, window_bounds = array<i64: 3, 32, 32>}, {pipeline_mode = #tpu.pipeline_mode<synchronous>, transform_indices = @transform_4, window_bounds = array<i64: 1, 32>}, {transform_indices = @transform_5, window_bounds = array<i64: 1, 16, 32>}]} {
    %c0 = arith.constant 0 : index
    %c0_0 = arith.constant 0 : index
    %c0_1 = arith.constant 0 : index
    %0 = vector.load %arg1[%c0, %c0_0, %c0_1] : memref<1x32x8xf32, #tpu.memory_space<vmem>>, vector<1x32x8xf32>
    %1 = vector.shape_cast %0 : vector<1x32x8xf32> to vector<32x8xf32>
    %2 = tpu.iota {dimensions = array<i32: 0>} : vector<32x1xi32>
    %c32_i32 = arith.constant 32 : i32
    %c0_i32 = arith.constant 0 : i32
    %3 = arith.cmpi eq, %c32_i32, %c0_i32 : i32
    %c1_i32 = arith.constant 1 : i32
    %4 = arith.select %3, %c1_i32, %c32_i32 : i32
    %5 = vector.broadcast %4 : i32 to vector<32x1xi32>
    %6 = arith.remsi %2, %5 : vector<32x1xi32>
    %c0_i32_2 = arith.constant 0 : i32
    %7 = vector.broadcast %c0_i32_2 : i32 to vector<32x1xi32>
    %8 = arith.cmpi ne, %6, %7 : vector<32x1xi32>
    %c0_i32_3 = arith.constant 0 : i32
    %9 = vector.broadcast %c0_i32_3 : i32 to vector<32x1xi32>
    %10 = arith.cmpi slt, %6, %9 : vector<32x1xi32>
    %c0_i32_4 = arith.constant 0 : i32
    %11 = arith.cmpi slt, %4, %c0_i32_4 : i32
    %12 = vector.broadcast %11 : i1 to vector<32x1xi1>
    %13 = vector.broadcast %12 : vector<32x1xi1> to vector<32x1xi1>
    %14 = arith.xori %10, %13 : vector<32x1xi1>
    %15 = arith.andi %14, %8 : vector<32x1xi1>
    %16 = vector.broadcast %4 : i32 to vector<32x1xi32>
    %17 = arith.addi %6, %16 : vector<32x1xi32>
    %18 = arith.select %15, %17, %6 : vector<32x1xi1>, vector<32x1xi32>
    %c0_i32_5 = arith.constant 0 : i32
    %19 = vector.broadcast %c0_i32_5 : i32 to vector<32x1xi32>
    %20 = arith.cmpi eq, %18, %19 : vector<32x1xi32>
    %c32_i32_6 = arith.constant 32 : i32
    %c0_i32_7 = arith.constant 0 : i32
    %21 = arith.cmpi eq, %c32_i32_6, %c0_i32_7 : i32
    %c1_i32_8 = arith.constant 1 : i32
    %22 = arith.select %21, %c1_i32_8, %c32_i32_6 : i32
    %23 = vector.broadcast %22 : i32 to vector<32x1xi32>
    %24 = arith.remsi %2, %23 : vector<32x1xi32>
    %c0_i32_9 = arith.constant 0 : i32
    %25 = vector.broadcast %c0_i32_9 : i32 to vector<32x1xi32>
    %26 = arith.cmpi ne, %24, %25 : vector<32x1xi32>
    %c0_i32_10 = arith.constant 0 : i32
    %27 = vector.broadcast %c0_i32_10 : i32 to vector<32x1xi32>
    %28 = arith.cmpi slt, %24, %27 : vector<32x1xi32>
    %c0_i32_11 = arith.constant 0 : i32
    %29 = arith.cmpi slt, %22, %c0_i32_11 : i32
    %30 = vector.broadcast %29 : i1 to vector<32x1xi1>
    %31 = vector.broadcast %30 : vector<32x1xi1> to vector<32x1xi1>
    %32 = arith.xori %28, %31 : vector<32x1xi1>
    %33 = arith.andi %32, %26 : vector<32x1xi1>
    %34 = vector.broadcast %22 : i32 to vector<32x1xi32>
    %35 = arith.addi %24, %34 : vector<32x1xi32>
    %36 = arith.select %33, %35, %24 : vector<32x1xi1>, vector<32x1xi32>
    %c31_i32 = arith.constant 31 : i32
    %37 = vector.broadcast %c31_i32 : i32 to vector<32x1xi32>
    %38 = arith.cmpi eq, %36, %37 : vector<32x1xi32>
    %c1_i32_12 = arith.constant 1 : i32
    %39 = tpu.dynamic_rotate %1 by %c1_i32_12 dim 0 : vector<32x8xf32>, i32 -> vector<32x8xf32>
    %cst = arith.constant 0.000000e+00 : f32
    %40 = vector.shape_cast %20 : vector<32x1xi1> to vector<32x1xi1>
    %41 = vector.broadcast %40 : vector<32x1xi1> to vector<32x8xi1>
    %42 = vector.broadcast %cst : f32 to vector<32x8xf32>
    %43 = arith.select %41, %42, %39 : vector<32x8xi1>, vector<32x8xf32>
    %c31_i32_13 = arith.constant 31 : i32
    %44 = tpu.dynamic_rotate %1 by %c31_i32_13 dim 0 : vector<32x8xf32>, i32 -> vector<32x8xf32>
    %cst_14 = arith.constant 0.000000e+00 : f32
    %45 = vector.shape_cast %38 : vector<32x1xi1> to vector<32x1xi1>
    %46 = vector.broadcast %45 : vector<32x1xi1> to vector<32x8xi1>
    %47 = vector.broadcast %cst_14 : f32 to vector<32x8xf32>
    %48 = arith.select %46, %47, %44 : vector<32x8xi1>, vector<32x8xf32>
    %c1 = arith.constant 1 : index
    %c0_15 = arith.constant 0 : index
    %c0_16 = arith.constant 0 : index
    %49 = vector.load %arg2[%c1, %c0_15, %c0_16] : memref<3x8x32xf32, #tpu.memory_space<vmem>>, vector<1x8x32xf32>
    %50 = vector.shape_cast %49 : vector<1x8x32xf32> to vector<8x32xf32>
    %cst_17 = arith.constant dense<0.000000e+00> : vector<32x32xf32>
    %51 = tpu.matmul %1, %50, %cst_17 {dimension_numbers = #tpu.dot_dimension_numbers<[1], [0], [0], [1], [0, 0, 1, 1], [], []>} : vector<32x8xf32>, vector<8x32xf32>, vector<32x32xf32> -> vector<32x32xf32>
    %c0_18 = arith.constant 0 : index
    %c0_19 = arith.constant 0 : index
    %c0_20 = arith.constant 0 : index
    %52 = vector.load %arg2[%c0_18, %c0_19, %c0_20] : memref<3x8x32xf32, #tpu.memory_space<vmem>>, vector<1x8x32xf32>
    %53 = vector.shape_cast %52 : vector<1x8x32xf32> to vector<8x32xf32>
    %cst_21 = arith.constant dense<0.000000e+00> : vector<32x32xf32>
    %54 = tpu.matmul %43, %53, %cst_21 {dimension_numbers = #tpu.dot_dimension_numbers<[1], [0], [0], [1], [0, 0, 1, 1], [], []>} : vector<32x8xf32>, vector<8x32xf32>, vector<32x32xf32> -> vector<32x32xf32>
    %55 = arith.addf %51, %54 : vector<32x32xf32>
    %c2 = arith.constant 2 : index
    %c0_22 = arith.constant 0 : index
    %c0_23 = arith.constant 0 : index
    %56 = vector.load %arg2[%c2, %c0_22, %c0_23] : memref<3x8x32xf32, #tpu.memory_space<vmem>>, vector<1x8x32xf32>
    %57 = vector.shape_cast %56 : vector<1x8x32xf32> to vector<8x32xf32>
    %cst_24 = arith.constant dense<0.000000e+00> : vector<32x32xf32>
    %58 = tpu.matmul %48, %57, %cst_24 {dimension_numbers = #tpu.dot_dimension_numbers<[1], [0], [0], [1], [0, 0, 1, 1], [], []>} : vector<32x8xf32>, vector<8x32xf32>, vector<32x32xf32> -> vector<32x32xf32>
    %59 = arith.addf %55, %58 : vector<32x32xf32>
    %c0_25 = arith.constant 0 : index
    %c0_26 = arith.constant 0 : index
    %60 = vector.load %arg3[%c0_25, %c0_26] : memref<1x32xf32, #tpu.memory_space<vmem>>, vector<1x32xf32>
    %61 = vector.broadcast %60 : vector<1x32xf32> to vector<32x32xf32>
    %62 = arith.addf %59, %61 : vector<32x32xf32>
    %cst_27 = arith.constant 0.000000e+00 : f32
    %63 = vector.broadcast %cst_27 : f32 to vector<32x32xf32>
    %64 = arith.maximumf %62, %63 : vector<32x32xf32>
    %c1_i32_28 = arith.constant 1 : i32
    %65 = tpu.dynamic_rotate %64 by %c1_i32_28 dim 0 : vector<32x32xf32>, i32 -> vector<32x32xf32>
    %cst_29 = arith.constant 0.000000e+00 : f32
    %66 = vector.shape_cast %20 : vector<32x1xi1> to vector<32x1xi1>
    %67 = vector.broadcast %66 : vector<32x1xi1> to vector<32x32xi1>
    %68 = vector.broadcast %cst_29 : f32 to vector<32x32xf32>
    %69 = arith.select %67, %68, %65 : vector<32x32xi1>, vector<32x32xf32>
    %c31_i32_30 = arith.constant 31 : i32
    %70 = tpu.dynamic_rotate %64 by %c31_i32_30 dim 0 : vector<32x32xf32>, i32 -> vector<32x32xf32>
    %cst_31 = arith.constant 0.000000e+00 : f32
    %71 = vector.shape_cast %38 : vector<32x1xi1> to vector<32x1xi1>
    %72 = vector.broadcast %71 : vector<32x1xi1> to vector<32x32xi1>
    %73 = vector.broadcast %cst_31 : f32 to vector<32x32xf32>
    %74 = arith.select %72, %73, %70 : vector<32x32xi1>, vector<32x32xf32>
    %c1_32 = arith.constant 1 : index
    %c0_33 = arith.constant 0 : index
    %c0_34 = arith.constant 0 : index
    %75 = vector.load %arg4[%c1_32, %c0_33, %c0_34] : memref<3x32x32xf32, #tpu.memory_space<vmem>>, vector<1x32x32xf32>
    %76 = vector.shape_cast %75 : vector<1x32x32xf32> to vector<32x32xf32>
    %cst_35 = arith.constant dense<0.000000e+00> : vector<32x32xf32>
    %77 = tpu.matmul %64, %76, %cst_35 {dimension_numbers = #tpu.dot_dimension_numbers<[1], [0], [0], [1], [0, 0, 1, 1], [], []>} : vector<32x32xf32>, vector<32x32xf32>, vector<32x32xf32> -> vector<32x32xf32>
    %c0_36 = arith.constant 0 : index
    %c0_37 = arith.constant 0 : index
    %c0_38 = arith.constant 0 : index
    %78 = vector.load %arg4[%c0_36, %c0_37, %c0_38] : memref<3x32x32xf32, #tpu.memory_space<vmem>>, vector<1x32x32xf32>
    %79 = vector.shape_cast %78 : vector<1x32x32xf32> to vector<32x32xf32>
    %cst_39 = arith.constant dense<0.000000e+00> : vector<32x32xf32>
    %80 = tpu.matmul %69, %79, %cst_39 {dimension_numbers = #tpu.dot_dimension_numbers<[1], [0], [0], [1], [0, 0, 1, 1], [], []>} : vector<32x32xf32>, vector<32x32xf32>, vector<32x32xf32> -> vector<32x32xf32>
    %81 = arith.addf %77, %80 : vector<32x32xf32>
    %c2_40 = arith.constant 2 : index
    %c0_41 = arith.constant 0 : index
    %c0_42 = arith.constant 0 : index
    %82 = vector.load %arg4[%c2_40, %c0_41, %c0_42] : memref<3x32x32xf32, #tpu.memory_space<vmem>>, vector<1x32x32xf32>
    %83 = vector.shape_cast %82 : vector<1x32x32xf32> to vector<32x32xf32>
    %cst_43 = arith.constant dense<0.000000e+00> : vector<32x32xf32>
    %84 = tpu.matmul %74, %83, %cst_43 {dimension_numbers = #tpu.dot_dimension_numbers<[1], [0], [0], [1], [0, 0, 1, 1], [], []>} : vector<32x32xf32>, vector<32x32xf32>, vector<32x32xf32> -> vector<32x32xf32>
    %85 = arith.addf %81, %84 : vector<32x32xf32>
    %c0_44 = arith.constant 0 : index
    %c0_45 = arith.constant 0 : index
    %86 = vector.load %arg5[%c0_44, %c0_45] : memref<1x32xf32, #tpu.memory_space<vmem>>, vector<1x32xf32>
    %87 = vector.broadcast %86 : vector<1x32xf32> to vector<32x32xf32>
    %88 = arith.addf %85, %87 : vector<32x32xf32>
    %cst_46 = arith.constant 0.000000e+00 : f32
    %89 = vector.broadcast %cst_46 : f32 to vector<32x32xf32>
    %90 = arith.maximumf %88, %89 : vector<32x32xf32>
    %91 = vector.shape_cast %90 : vector<32x32xf32> to vector<1x16x2x32xf32>
    %cst_47 = arith.constant dense<0.000000e+00> : vector<1x16x32xf32>
    %92 = vector.multi_reduction <add>, %91, %cst_47 [2] : vector<1x16x2x32xf32> to vector<1x16x32xf32>
    %cst_48 = arith.constant 2.000000e+00 : f32
    %93 = vector.broadcast %cst_48 : f32 to vector<1x16x32xf32>
    %94 = arith.divf %92, %93 : vector<1x16x32xf32>
    %c0_49 = arith.constant 0 : index
    %c0_50 = arith.constant 0 : index
    %c0_51 = arith.constant 0 : index
    %95 = vector.load %arg6[%c0_49, %c0_50, %c0_51] : memref<1x16x32xf32, #tpu.memory_space<vmem>>, vector<1x16x32xf32>
    tpu.vector_store %arg6[%c0_49, %c0_50, %c0_51], %94 {strides = array<i32>} : memref<1x16x32xf32, #tpu.memory_space<vmem>>, vector<1x16x32xf32>,
    return
  }
  func.func @transform_0(%arg0: i32) -> (i32, i32, i32) {
    %c0_i32 = arith.constant 0 : i32
    %c0_i32_0 = arith.constant 0 : i32
    %c0_i32_1 = arith.constant 0 : i32
    return %arg0, %c0_i32, %c0_i32_0 : i32, i32, i32
  }
  func.func @transform_1(%arg0: i32) -> (i32, i32, i32) {
    %c0_i32 = arith.constant 0 : i32
    %c0_i32_0 = arith.constant 0 : i32
    %c0_i32_1 = arith.constant 0 : i32
    %c0_i32_2 = arith.constant 0 : i32
    return %c0_i32, %c0_i32_0, %c0_i32_1 : i32, i32, i32
  }
  func.func @transform_2(%arg0: i32) -> (i32, i32) {
    %c0_i32 = arith.constant 0 : i32
    %c0_i32_0 = arith.constant 0 : i32
    %c0_i32_1 = arith.constant 0 : i32
    return %c0_i32, %c0_i32_0 : i32, i32
  }
  func.func @transform_3(%arg0: i32) -> (i32, i32, i32) {
    %c0_i32 = arith.constant 0 : i32
    %c0_i32_0 = arith.constant 0 : i32
    %c0_i32_1 = arith.constant 0 : i32
    %c0_i32_2 = arith.constant 0 : i32
    return %c0_i32, %c0_i32_0, %c0_i32_1 : i32, i32, i32
  }
  func.func @transform_4(%arg0: i32) -> (i32, i32) {
    %c0_i32 = arith.constant 0 : i32
    %c0_i32_0 = arith.constant 0 : i32
    %c0_i32_1 = arith.constant 0 : i32
    return %c0_i32, %c0_i32_0 : i32, i32
  }
  func.func @transform_5(%arg0: i32) -> (i32, i32, i32) {
    %c0_i32 = arith.constant 0 : i32
    %c0_i32_0 = arith.constant 0 : i32
    %c0_i32_1 = arith.constant 0 : i32
    return %arg0, %c0_i32, %c0_i32_0 : i32, i32, i32
  }
}

module attributes {stable_mosaic.version = 11 : i64} {
  func.func @_fusion_kernel(%arg0: i32, %arg1: memref<4x4x32xf32, #tpu.memory_space<vmem>>, %arg2: memref<32x32xf32, #tpu.memory_space<vmem>>, %arg3: memref<32x32xf32, #tpu.memory_space<vmem>>, %arg4: memref<32x32xf32, #tpu.memory_space<vmem>>, %arg5: memref<3x32xf32, #tpu.memory_space<vmem>>, %arg6: memref<32x32xf32, #tpu.memory_space<vmem>>, %arg7: memref<1x32xf32, #tpu.memory_space<vmem>>, %arg8: memref<32x16xf32, #tpu.memory_space<vmem>>, %arg9: memref<1x16xf32, #tpu.memory_space<vmem>>, %arg10: memref<16x16xf32, #tpu.memory_space<vmem>>, %arg11: memref<16x4xf32, #tpu.memory_space<vmem>>) attributes {dimension_semantics = [#tpu.dimension_semantics<parallel>], iteration_bounds = array<i64: 4>, scalar_prefetch = 0 : i64, scratch_operands = 0 : i64, tpu.core_type = #tpu.core_type<tc>, window_params = [{transform_indices = @transform_0, window_bounds = array<i64: 4, 4, 32>}, {pipeline_mode = #tpu.pipeline_mode<synchronous>, transform_indices = @transform_1, window_bounds = array<i64: 32, 32>}, {pipeline_mode = #tpu.pipeline_mode<synchronous>, transform_indices = @transform_2, window_bounds = array<i64: 32, 32>}, {pipeline_mode = #tpu.pipeline_mode<synchronous>, transform_indices = @transform_3, window_bounds = array<i64: 32, 32>}, {pipeline_mode = #tpu.pipeline_mode<synchronous>, transform_indices = @transform_4, window_bounds = array<i64: 3, 32>}, {pipeline_mode = #tpu.pipeline_mode<synchronous>, transform_indices = @transform_5, window_bounds = array<i64: 32, 32>}, {pipeline_mode = #tpu.pipeline_mode<synchronous>, transform_indices = @transform_6, window_bounds = array<i64: 1, 32>}, {pipeline_mode = #tpu.pipeline_mode<synchronous>, transform_indices = @transform_7, window_bounds = array<i64: 32, 16>}, {pipeline_mode = #tpu.pipeline_mode<synchronous>, transform_indices = @transform_8, window_bounds = array<i64: 1, 16>}, {transform_indices = @transform_9, window_bounds = array<i64: 16, 16>}, {transform_indices = @transform_10, window_bounds = array<i64: 16, 4>}]} {
    %c0 = arith.constant 0 : index
    %c0_0 = arith.constant 0 : index
    %c0_1 = arith.constant 0 : index
    %0 = vector.load %arg1[%c0, %c0_0, %c0_1] : memref<4x4x32xf32, #tpu.memory_space<vmem>>, vector<4x4x32xf32>
    %1 = vector.shape_cast %0 : vector<4x4x32xf32> to vector<16x32xf32>
    %c0_2 = arith.constant 0 : index
    %c0_3 = arith.constant 0 : index
    %2 = vector.load %arg2[%c0_2, %c0_3] : memref<32x32xf32, #tpu.memory_space<vmem>>, vector<32x32xf32>
    %cst = arith.constant dense<0.000000e+00> : vector<16x32xf32>
    %3 = tpu.matmul %1, %2, %cst {dimension_numbers = #tpu.dot_dimension_numbers<[1], [0], [0], [1], [0, 0, 1, 1], [], []>} : vector<16x32xf32>, vector<32x32xf32>, vector<16x32xf32> -> vector<16x32xf32>
    %c0_4 = arith.constant 0 : index
    %c0_5 = arith.constant 0 : index
    %4 = vector.load %arg5[%c0_4, %c0_5] : memref<3x32xf32, #tpu.memory_space<vmem>>, vector<1x32xf32>
    %5 = vector.broadcast %4 : vector<1x32xf32> to vector<16x32xf32>
    %6 = arith.addf %3, %5 : vector<16x32xf32>
    %c0_6 = arith.constant 0 : index
    %c0_7 = arith.constant 0 : index
    %7 = vector.load %arg3[%c0_6, %c0_7] : memref<32x32xf32, #tpu.memory_space<vmem>>, vector<32x32xf32>
    %cst_8 = arith.constant dense<0.000000e+00> : vector<16x32xf32>
    %8 = tpu.matmul %1, %7, %cst_8 {dimension_numbers = #tpu.dot_dimension_numbers<[1], [0], [0], [1], [0, 0, 1, 1], [], []>} : vector<16x32xf32>, vector<32x32xf32>, vector<16x32xf32> -> vector<16x32xf32>
    %c1 = arith.constant 1 : index
    %c0_9 = arith.constant 0 : index
    %9 = vector.load %arg5[%c1, %c0_9] : memref<3x32xf32, #tpu.memory_space<vmem>>, vector<1x32xf32>
    %10 = vector.broadcast %9 : vector<1x32xf32> to vector<16x32xf32>
    %11 = arith.addf %8, %10 : vector<16x32xf32>
    %c0_10 = arith.constant 0 : index
    %c0_11 = arith.constant 0 : index
    %12 = vector.load %arg4[%c0_10, %c0_11] : memref<32x32xf32, #tpu.memory_space<vmem>>, vector<32x32xf32>
    %cst_12 = arith.constant dense<0.000000e+00> : vector<16x32xf32>
    %13 = tpu.matmul %1, %12, %cst_12 {dimension_numbers = #tpu.dot_dimension_numbers<[1], [0], [0], [1], [0, 0, 1, 1], [], []>} : vector<16x32xf32>, vector<32x32xf32>, vector<16x32xf32> -> vector<16x32xf32>
    %c2 = arith.constant 2 : index
    %c0_13 = arith.constant 0 : index
    %14 = vector.load %arg5[%c2, %c0_13] : memref<3x32xf32, #tpu.memory_space<vmem>>, vector<1x32xf32>
    %15 = vector.broadcast %14 : vector<1x32xf32> to vector<16x32xf32>
    %16 = arith.addf %13, %15 : vector<16x32xf32>
    %cst_14 = arith.constant 0.353553385 : f32
    %17 = vector.broadcast %cst_14 : f32 to vector<16x32xf32>
    %18 = arith.mulf %6, %17 : vector<16x32xf32>
    %19 = vector.extract_strided_slice %18 {offsets = [0, 0], sizes = [16, 8], strides = [1, 1]} : vector<16x32xf32> to vector<16x8xf32>
    %20 = vector.shape_cast %19 : vector<16x8xf32> to vector<4x4x8xf32>
    %21 = vector.extract_strided_slice %11 {offsets = [0, 0], sizes = [16, 8], strides = [1, 1]} : vector<16x32xf32> to vector<16x8xf32>
    %22 = vector.shape_cast %21 : vector<16x8xf32> to vector<4x4x8xf32>
    %23 = vector.extract_strided_slice %16 {offsets = [0, 0], sizes = [16, 8], strides = [1, 1]} : vector<16x32xf32> to vector<16x8xf32>
    %24 = vector.shape_cast %23 : vector<16x8xf32> to vector<4x4x8xf32>
    %cst_15 = arith.constant dense<0.000000e+00> : vector<4x4x4xf32>
    %25 = tpu.matmul %20, %22, %cst_15 {dimension_numbers = #tpu.dot_dimension_numbers<[2], [2], [1], [1], [0, 0, 0, 1, 1, 1], [0], [0]>} : vector<4x4x8xf32>, vector<4x4x8xf32>, vector<4x4x4xf32> -> vector<4x4x4xf32>
    %26 = vector.extract_strided_slice %18 {offsets = [0, 8], sizes = [16, 8], strides = [1, 1]} : vector<16x32xf32> to vector<16x8xf32>
    %27 = vector.shape_cast %26 : vector<16x8xf32> to vector<4x4x8xf32>
    %28 = vector.extract_strided_slice %11 {offsets = [0, 8], sizes = [16, 8], strides = [1, 1]} : vector<16x32xf32> to vector<16x8xf32>
    %29 = vector.shape_cast %28 : vector<16x8xf32> to vector<4x4x8xf32>
    %30 = vector.extract_strided_slice %16 {offsets = [0, 8], sizes = [16, 8], strides = [1, 1]} : vector<16x32xf32> to vector<16x8xf32>
    %31 = vector.shape_cast %30 : vector<16x8xf32> to vector<4x4x8xf32>
    %cst_16 = arith.constant dense<0.000000e+00> : vector<4x4x4xf32>
    %32 = tpu.matmul %27, %29, %cst_16 {dimension_numbers = #tpu.dot_dimension_numbers<[2], [2], [1], [1], [0, 0, 0, 1, 1, 1], [0], [0]>} : vector<4x4x8xf32>, vector<4x4x8xf32>, vector<4x4x4xf32> -> vector<4x4x4xf32>
    %33 = vector.extract_strided_slice %18 {offsets = [0, 16], sizes = [16, 8], strides = [1, 1]} : vector<16x32xf32> to vector<16x8xf32>
    %34 = vector.shape_cast %33 : vector<16x8xf32> to vector<4x4x8xf32>
    %35 = vector.extract_strided_slice %11 {offsets = [0, 16], sizes = [16, 8], strides = [1, 1]} : vector<16x32xf32> to vector<16x8xf32>
    %36 = vector.shape_cast %35 : vector<16x8xf32> to vector<4x4x8xf32>
    %37 = vector.extract_strided_slice %16 {offsets = [0, 16], sizes = [16, 8], strides = [1, 1]} : vector<16x32xf32> to vector<16x8xf32>
    %38 = vector.shape_cast %37 : vector<16x8xf32> to vector<4x4x8xf32>
    %cst_17 = arith.constant dense<0.000000e+00> : vector<4x4x4xf32>
    %39 = tpu.matmul %34, %36, %cst_17 {dimension_numbers = #tpu.dot_dimension_numbers<[2], [2], [1], [1], [0, 0, 0, 1, 1, 1], [0], [0]>} : vector<4x4x8xf32>, vector<4x4x8xf32>, vector<4x4x4xf32> -> vector<4x4x4xf32>
    %40 = vector.extract_strided_slice %18 {offsets = [0, 24], sizes = [16, 8], strides = [1, 1]} : vector<16x32xf32> to vector<16x8xf32>
    %41 = vector.shape_cast %40 : vector<16x8xf32> to vector<4x4x8xf32>
    %42 = vector.extract_strided_slice %11 {offsets = [0, 24], sizes = [16, 8], strides = [1, 1]} : vector<16x32xf32> to vector<16x8xf32>
    %43 = vector.shape_cast %42 : vector<16x8xf32> to vector<4x4x8xf32>
    %44 = vector.extract_strided_slice %16 {offsets = [0, 24], sizes = [16, 8], strides = [1, 1]} : vector<16x32xf32> to vector<16x8xf32>
    %45 = vector.shape_cast %44 : vector<16x8xf32> to vector<4x4x8xf32>
    %cst_18 = arith.constant dense<0.000000e+00> : vector<4x4x4xf32>
    %46 = tpu.matmul %41, %43, %cst_18 {dimension_numbers = #tpu.dot_dimension_numbers<[2], [2], [1], [1], [0, 0, 0, 1, 1, 1], [0], [0]>} : vector<4x4x8xf32>, vector<4x4x8xf32>, vector<4x4x4xf32> -> vector<4x4x4xf32>
    %47 = tpu.concatenate %25, %32, %39, %46 in 0 : vector<4x4x4xf32>, vector<4x4x4xf32>, vector<4x4x4xf32>, vector<4x4x4xf32> -> vector<16x4x4xf32>
    %48 = tpu.concatenate %24, %31, %38, %45 in 0 : vector<4x4x8xf32>, vector<4x4x8xf32>, vector<4x4x8xf32>, vector<4x4x8xf32> -> vector<16x4x8xf32>
    %cst_19 = arith.constant dense<0xFF800000> : vector<16x4xf32>
    %49 = vector.multi_reduction <maximumf>, %47, %cst_19 [2] : vector<16x4x4xf32> to vector<16x4xf32>
    %50 = vector.shape_cast %49 : vector<16x4xf32> to vector<16x4x1xf32>
    %51 = vector.broadcast %50 : vector<16x4x1xf32> to vector<16x4x4xf32>
    %52 = arith.subf %47, %51 : vector<16x4x4xf32>
    %53 = math.exp %52 : vector<16x4x4xf32>
    %cst_20 = arith.constant dense<0.000000e+00> : vector<16x4xf32>
    %54 = vector.multi_reduction <add>, %53, %cst_20 [2] : vector<16x4x4xf32> to vector<16x4xf32>
    %55 = vector.shape_cast %54 : vector<16x4xf32> to vector<16x4x1xf32>
    %56 = tpu.reciprocal %55 : vector<16x4x1xf32> -> vector<16x4x1xf32>
    %57 = vector.broadcast %56 : vector<16x4x1xf32> to vector<16x4x4xf32>
    %58 = arith.mulf %53, %57 : vector<16x4x4xf32>
    %cst_21 = arith.constant dense<0.000000e+00> : vector<16x4x8xf32>
    %59 = tpu.matmul %58, %48, %cst_21 {dimension_numbers = #tpu.dot_dimension_numbers<[2], [1], [1], [2], [0, 0, 0, 1, 1, 2], [0], [0]>} : vector<16x4x4xf32>, vector<16x4x8xf32>, vector<16x4x8xf32> -> vector<16x4x8xf32>
    %60 = vector.extract_strided_slice %59 {offsets = [0, 0, 0], sizes = [4, 4, 8], strides = [1, 1, 1]} : vector<16x4x8xf32> to vector<4x4x8xf32>
    %61 = vector.shape_cast %60 : vector<4x4x8xf32> to vector<16x8xf32>
    %62 = vector.extract_strided_slice %59 {offsets = [4, 0, 0], sizes = [4, 4, 8], strides = [1, 1, 1]} : vector<16x4x8xf32> to vector<4x4x8xf32>
    %63 = vector.shape_cast %62 : vector<4x4x8xf32> to vector<16x8xf32>
    %64 = vector.extract_strided_slice %59 {offsets = [8, 0, 0], sizes = [4, 4, 8], strides = [1, 1, 1]} : vector<16x4x8xf32> to vector<4x4x8xf32>
    %65 = vector.shape_cast %64 : vector<4x4x8xf32> to vector<16x8xf32>
    %66 = vector.extract_strided_slice %59 {offsets = [12, 0, 0], sizes = [4, 4, 8], strides = [1, 1, 1]} : vector<16x4x8xf32> to vector<4x4x8xf32>
    %67 = vector.shape_cast %66 : vector<4x4x8xf32> to vector<16x8xf32>
    %68 = tpu.concatenate %61, %63, %65, %67 in 1 : vector<16x8xf32>, vector<16x8xf32>, vector<16x8xf32>, vector<16x8xf32> -> vector<16x32xf32>
    %c0_22 = arith.constant 0 : index
    %c0_23 = arith.constant 0 : index
    %69 = vector.load %arg6[%c0_22, %c0_23] : memref<32x32xf32, #tpu.memory_space<vmem>>, vector<32x32xf32>
    %cst_24 = arith.constant dense<0.000000e+00> : vector<16x32xf32>
    %70 = tpu.matmul %68, %69, %cst_24 {dimension_numbers = #tpu.dot_dimension_numbers<[1], [0], [0], [1], [0, 0, 1, 1], [], []>} : vector<16x32xf32>, vector<32x32xf32>, vector<16x32xf32> -> vector<16x32xf32>
    %c0_25 = arith.constant 0 : index
    %c0_26 = arith.constant 0 : index
    %71 = vector.load %arg7[%c0_25, %c0_26] : memref<1x32xf32, #tpu.memory_space<vmem>>, vector<1x32xf32>
    %72 = vector.broadcast %71 : vector<1x32xf32> to vector<16x32xf32>
    %73 = arith.addf %70, %72 : vector<16x32xf32>
    %c0_27 = arith.constant 0 : index
    %c0_28 = arith.constant 0 : index
    %74 = vector.load %arg8[%c0_27, %c0_28] : memref<32x16xf32, #tpu.memory_space<vmem>>, vector<32x16xf32>
    %cst_29 = arith.constant dense<0.000000e+00> : vector<16x16xf32>
    %75 = tpu.matmul %73, %74, %cst_29 {dimension_numbers = #tpu.dot_dimension_numbers<[1], [0], [0], [1], [0, 0, 1, 1], [], []>} : vector<16x32xf32>, vector<32x16xf32>, vector<16x16xf32> -> vector<16x16xf32>
    %c0_30 = arith.constant 0 : index
    %c0_31 = arith.constant 0 : index
    %76 = vector.load %arg9[%c0_30, %c0_31] : memref<1x16xf32, #tpu.memory_space<vmem>>, vector<1x16xf32>
    %77 = vector.broadcast %76 : vector<1x16xf32> to vector<16x16xf32>
    %78 = arith.addf %75, %77 : vector<16x16xf32>
    %c0_32 = arith.constant 0 : index
    %c0_33 = arith.constant 0 : index
    %79 = vector.load %arg10[%c0_32, %c0_33] : memref<16x16xf32, #tpu.memory_space<vmem>>, vector<16x16xf32>
    tpu.vector_store %arg10[%c0_32, %c0_33], %78 {strides = array<i32>} : memref<16x16xf32, #tpu.memory_space<vmem>>, vector<16x16xf32>,
    %80 = vector.shape_cast %58 : vector<16x4x4xf32> to vector<4x16x4xf32>
    %cst_34 = arith.constant dense<0.000000e+00> : vector<16x4xf32>
    %81 = vector.multi_reduction <add>, %80, %cst_34 [0] : vector<4x16x4xf32> to vector<16x4xf32>
    %cst_35 = arith.constant 4.000000e+00 : f32
    %82 = vector.broadcast %cst_35 : f32 to vector<16x4xf32>
    %83 = arith.divf %81, %82 : vector<16x4xf32>
    %c0_36 = arith.constant 0 : index
    %c0_37 = arith.constant 0 : index
    %84 = vector.load %arg11[%c0_36, %c0_37] : memref<16x4xf32, #tpu.memory_space<vmem>>, vector<16x4xf32>
    tpu.vector_store %arg11[%c0_36, %c0_37], %83 {strides = array<i32>} : memref<16x4xf32, #tpu.memory_space<vmem>>, vector<16x4xf32>,
    return
  }
  func.func @transform_0(%arg0: i32) -> (i32, i32, i32) {
    %c0_i32 = arith.constant 0 : i32
    %c0_i32_0 = arith.constant 0 : i32
    %c0_i32_1 = arith.constant 0 : i32
    return %arg0, %c0_i32, %c0_i32_0 : i32, i32, i32
  }
  func.func @transform_1(%arg0: i32) -> (i32, i32) {
    %c0_i32 = arith.constant 0 : i32
    %c0_i32_0 = arith.constant 0 : i32
    %c0_i32_1 = arith.constant 0 : i32
    return %c0_i32, %c0_i32_0 : i32, i32
  }
  func.func @transform_2(%arg0: i32) -> (i32, i32) {
    %c0_i32 = arith.constant 0 : i32
    %c0_i32_0 = arith.constant 0 : i32
    %c0_i32_1 = arith.constant 0 : i32
    return %c0_i32, %c0_i32_0 : i32, i32
  }
  func.func @transform_3(%arg0: i32) -> (i32, i32) {
    %c0_i32 = arith.constant 0 : i32
    %c0_i32_0 = arith.constant 0 : i32
    %c0_i32_1 = arith.constant 0 : i32
    return %c0_i32, %c0_i32_0 : i32, i32
  }
  func.func @transform_4(%arg0: i32) -> (i32, i32) {
    %c0_i32 = arith.constant 0 : i32
    %c0_i32_0 = arith.constant 0 : i32
    %c0_i32_1 = arith.constant 0 : i32
    return %c0_i32, %c0_i32_0 : i32, i32
  }
  func.func @transform_5(%arg0: i32) -> (i32, i32) {
    %c0_i32 = arith.constant 0 : i32
    %c0_i32_0 = arith.constant 0 : i32
    %c0_i32_1 = arith.constant 0 : i32
    return %c0_i32, %c0_i32_0 : i32, i32
  }
  func.func @transform_6(%arg0: i32) -> (i32, i32) {
    %c0_i32 = arith.constant 0 : i32
    %c0_i32_0 = arith.constant 0 : i32
    %c0_i32_1 = arith.constant 0 : i32
    return %c0_i32, %c0_i32_0 : i32, i32
  }
  func.func @transform_7(%arg0: i32) -> (i32, i32) {
    %c0_i32 = arith.constant 0 : i32
    %c0_i32_0 = arith.constant 0 : i32
    %c0_i32_1 = arith.constant 0 : i32
    return %c0_i32, %c0_i32_0 : i32, i32
  }
  func.func @transform_8(%arg0: i32) -> (i32, i32) {
    %c0_i32 = arith.constant 0 : i32
    %c0_i32_0 = arith.constant 0 : i32
    %c0_i32_1 = arith.constant 0 : i32
    return %c0_i32, %c0_i32_0 : i32, i32
  }
  func.func @transform_9(%arg0: i32) -> (i32, i32) {
    %c0_i32 = arith.constant 0 : i32
    %c0_i32_0 = arith.constant 0 : i32
    return %arg0, %c0_i32 : i32, i32
  }
  func.func @transform_10(%arg0: i32) -> (i32, i32) {
    %c0_i32 = arith.constant 0 : i32
    %c0_i32_0 = arith.constant 0 : i32
    return %arg0, %c0_i32 : i32, i32
  }
}

</mosaic_0001>

<llo_original>
// kernel: multiscale_encoder.2
$region0: #{multiscale_encoder.2}
  #allocation0 [shape = 'u32[]', space=smem, size = 0x4, offset = 0x4, fixed_abs, tag = 'smem constant byte address 0x4 - core index']
  #allocation1 [shape = 'u32[144,128]{1,0:T(1,128)}', space=vmem, size = 0x12000, scoped, tag = 'internal scratch']
  %s0 = inlined_call_operand.vmem [shape: f32[4,32,8], index: 0, kind: input, shape index: {}]
  %s1 = inlined_call_operand.vmem [shape: f32[3,8,32], index: 1, kind: input, shape index: {}]
  %s2 = inlined_call_operand.vmem [shape: f32[1,32], index: 2, kind: input, shape index: {}]
  %s3 = inlined_call_operand.vmem [shape: f32[3,32,32], index: 3, kind: input, shape index: {}]
  %s4 = inlined_call_operand.vmem [shape: f32[1,32], index: 4, kind: input, shape index: {}]
  %s5 = inlined_call_operand.vmem [shape: f32[4,16,32], index: 5, kind: output, shape index: {}]
  %s6 = sld [smem:[#allocation0]]
  $region53: #{multiscale_encoder.2} parent=0
    _
  %s8 = ssub.s32 1, %s6
  %s9 = scalar_select 0, %s8, %s6
  loop: start=0, step=1, limit=6
  $region2: #{multiscale_encoder.2} parent=0 // loop_pre_header
    _
  $region3: #{multiscale_encoder.2} parent=0 // loop_header
    %s11 = sphi 0, %s15
    %p12 = scmp.ge.s32.totalorder %s11, 6
    %s21 = sphi 0, %s23
    %s24 = sphi 0, %s21
    %s25 = sphi 0, %s24
    %s41 = sphi 0, %s25
    %s45 = sphi 0, %s45
    %s47 = sphi 0, %s45
    %s48 = sphi 0, %s47
    %s62 = sphi 0, %s48
    %s66 = sphi 0, %s66
    %s68 = sphi 0, %s66
    %s69 = sphi 0, %s68
    %s83 = sphi 0, %s69
    %s87 = sphi 0, %s87
    %s89 = sphi 0, %s87
    %s90 = sphi 0, %s89
    %s104 = sphi 0, %s90
    %s108 = sphi 0, %s108
    %s110 = sphi 0, %s108
    %s111 = sphi 0, %s110
    %s125 = sphi 0, %s111
    %s131 = sphi 0, %s133
    %s134 = sphi 0, %s131
    %s135 = sphi 0, %s134
    %s151 = sphi 0, %s135
  $region4: #{multiscale_encoder.2} parent=0 // loop_header_branch
    %14 = sbr.rel (%p12) target = $region8
  $region5: #{multiscale_encoder.2} parent=0 // loop_body
    %s16 = ssub.s32 %s11, 1
    %s17 = ssub.s32 %s11, 2
    %s18 = sadd.s32 %s11, 1
    %s19 = ssub.s32 %s11, %s18
    %p20 = scmp.eq.s32.totalorder %s19, 0
    %s22 = sadd.s32 %s21, 1
    %s23 = scalar_select %p20, %s21, %s22
    %p26 = pneg %p20
    %p27 = scmp.eq.s32.totalorder %s11, 3
    %p28 = por %p26, %p27
    %p29 = scmp.ne.s32.totalorder %s21, %s24
    %p30 = scmp.eq.s32.totalorder %s11, 0
    %p31 = por %p29, %p30
    %p32 = scmp.ne.s32.totalorder %s21, %s24
    %p33 = scmp.eq.s32.totalorder %s16, 3
    %p34 = por %p32, %p33
    %p35 = scmp.ne.s32.totalorder %s24, %s25
    %p36 = scmp.eq.s32.totalorder %s16, 0
    %p37 = por %p35, %p36
    %p38 = scmp.ne.s32.totalorder %s24, %s25
    %p39 = scmp.eq.s32.totalorder %s17, 3
    %p40 = por %p38, %p39
    %p42 = scmp.ne.s32.totalorder %s25, %s41
    %p43 = scmp.eq.s32.totalorder %s17, 0
    %p44 = por %p42, %p43
    %s46 = sadd.s32 %s45, 1
    %p49 = scmp.eq.s32.totalorder %s11, 3
    %p50 = scmp.ne.s32.totalorder %s45, %s47
    %p51 = scmp.eq.s32.totalorder %s11, 0
    %p52 = por %p50, %p51
    %p53 = scmp.ne.s32.totalorder %s45, %s47
    %p54 = scmp.eq.s32.totalorder %s16, 3
    %p55 = por %p53, %p54
    %p56 = scmp.ne.s32.totalorder %s47, %s48
    %p57 = scmp.eq.s32.totalorder %s16, 0
    %p58 = por %p56, %p57
    %p59 = scmp.ne.s32.totalorder %s47, %s48
    %p60 = scmp.eq.s32.totalorder %s17, 3
    %p61 = por %p59, %p60
    %p63 = scmp.ne.s32.totalorder %s48, %s62
    %p64 = scmp.eq.s32.totalorder %s17, 0
    %p65 = por %p63, %p64
    %s67 = sadd.s32 %s66, 1
    %p70 = scmp.eq.s32.totalorder %s11, 3
    %p71 = scmp.ne.s32.totalorder %s66, %s68
    %p72 = scmp.eq.s32.totalorder %s11, 0
    %p73 = por %p71, %p72
    %p74 = scmp.ne.s32.totalorder %s66, %s68
    %p75 = scmp.eq.s32.totalorder %s16, 3
    %p76 = por %p74, %p75
    %p77 = scmp.ne.s32.totalorder %s68, %s69
    %p78 = scmp.eq.s32.totalorder %s16, 0
    %p79 = por %p77, %p78
    %p80 = scmp.ne.s32.totalorder %s68, %s69
    %p81 = scmp.eq.s32.totalorder %s17, 3
    %p82 = por %p80, %p81
    %p84 = scmp.ne.s32.totalorder %s69, %s83
    %p85 = scmp.eq.s32.totalorder %s17, 0
    %p86 = por %p84, %p85
    %s88 = sadd.s32 %s87, 1
    %p91 = scmp.eq.s32.totalorder %s11, 3
    %p92 = scmp.ne.s32.totalorder %s87, %s89
    %p93 = scmp.eq.s32.totalorder %s11, 0
    %p94 = por %p92, %p93
    %p95 = scmp.ne.s32.totalorder %s87, %s89
    %p96 = scmp.eq.s32.totalorder %s16, 3
    %p97 = por %p95, %p96
    %p98 = scmp.ne.s32.totalorder %s89, %s90
    %p99 = scmp.eq.s32.totalorder %s16, 0
    %p100 = por %p98, %p99
    %p101 = scmp.ne.s32.totalorder %s89, %s90
    %p102 = scmp.eq.s32.totalorder %s17, 3
    %p103 = por %p101, %p102
    %p105 = scmp.ne.s32.totalorder %s90, %s104
    %p106 = scmp.eq.s32.totalorder %s17, 0
    %p107 = por %p105, %p106
    %s109 = sadd.s32 %s108, 1
    %p112 = scmp.eq.s32.totalorder %s11, 3
    %p113 = scmp.ne.s32.totalorder %s108, %s110
    %p114 = scmp.eq.s32.totalorder %s11, 0
    %p115 = por %p113, %p114
    %p116 = scmp.ne.s32.totalorder %s108, %s110
    %p117 = scmp.eq.s32.totalorder %s16, 3
    %p118 = por %p116, %p117
    %p119 = scmp.ne.s32.totalorder %s110, %s111
    %p120 = scmp.eq.s32.totalorder %s16, 0
    %p121 = por %p119, %p120
    %p122 = scmp.ne.s32.totalorder %s110, %s111
    %p123 = scmp.eq.s32.totalorder %s17, 3
    %p124 = por %p122, %p123
    %p126 = scmp.ne.s32.totalorder %s111, %s125
    %p127 = scmp.eq.s32.totalorder %s17, 0
    %p128 = por %p126, %p127
    %s129 = ssub.s32 %s11, %s18
    %p130 = scmp.eq.s32.totalorder %s129, 0
    %s132 = sadd.s32 %s131, 1
    %s133 = scalar_select %p130, %s131, %s132
    %p136 = pneg %p130
    %p137 = scmp.eq.s32.totalorder %s11, 3
    %p138 = por %p136, %p137
    %p139 = scmp.ne.s32.totalorder %s131, %s134
    %p140 = scmp.eq.s32.totalorder %s11, 0
    %p141 = por %p139, %p140
    %p142 = scmp.ne.s32.totalorder %s131, %s134
    %p143 = scmp.eq.s32.totalorder %s16, 3
    %p144 = por %p142, %p143
    %p145 = scmp.ne.s32.totalorder %s134, %s135
    %p146 = scmp.eq.s32.totalorder %s16, 0
    %p147 = por %p145, %p146
    %p148 = scmp.ne.s32.totalorder %s134, %s135
    %p149 = scmp.eq.s32.totalorder %s17, 3
    %p150 = por %p148, %p149
    %p152 = scmp.ne.s32.totalorder %s135, %s151
    %p153 = scmp.eq.s32.totalorder %s17, 0
    %p154 = por %p152, %p153
    %p155 = scmp.le.s32.totalorder 1, %s11
    %p156 = scmp.lt.s32.totalorder %s11, 5
    %p157 = pnand %p155, %p156
    %p158 = pneg %p157
    // Predicated region
    $region9: #{multiscale_encoder.2} parent=5 // pred_check
      _
    $region10: #{multiscale_encoder.2} parent=5 // pred_check_branch
      %160 = sbr.rel (%p157) target = $region12
    $region11: #{multiscale_encoder.2} parent=5 // pred_region
      %s161 = ssub.s32 %s11, 1
      // Predicated region
      $region13: #{multiscale_encoder.2} parent=11 // pred_check
        %p162 = pneg %p58
      $region14: #{multiscale_encoder.2} parent=11 // pred_check_branch
        %164 = sbr.rel (%p162) target = $region16
      $region15: #{multiscale_encoder.2} parent=11 // pred_region
        _
      $region16: #{multiscale_encoder.2} parent=11 // pred_fallthru
        _
      // Predicated region
      $region17: #{multiscale_encoder.2} parent=11 // pred_check
        %p165 = pneg %p79
      $region18: #{multiscale_encoder.2} parent=11 // pred_check_branch
        %167 = sbr.rel (%p165) target = $region20
      $region19: #{multiscale_encoder.2} parent=11 // pred_region
        _
      $region20: #{multiscale_encoder.2} parent=11 // pred_fallthru
        _
      // Predicated region
      $region21: #{multiscale_encoder.2} parent=11 // pred_check
        %p168 = pneg %p100
      $region22: #{multiscale_encoder.2} parent=11 // pred_check_branch
        %170 = sbr.rel (%p168) target = $region24
      $region23: #{multiscale_encoder.2} parent=11 // pred_region
        _
      $region24: #{multiscale_encoder.2} parent=11 // pred_fallthru
        _
      // Predicated region
      $region25: #{multiscale_encoder.2} parent=11 // pred_check
        %p171 = pneg %p121
      $region26: #{multiscale_encoder.2} parent=11 // pred_check_branch
        %173 = sbr.rel (%p171) target = $region28
      $region27: #{multiscale_encoder.2} parent=11 // pred_region
        _
      $region28: #{multiscale_encoder.2} parent=11 // pred_fallthru
        _
    $region12: #{multiscale_encoder.2} parent=5 // pred_fallthru
      _
    %p174 = scmp.lt.s32.totalorder %s11, 4
    // Predicated region
    $region29: #{multiscale_encoder.2} parent=5 // pred_check
      %p175 = pneg %p174
    $region30: #{multiscale_encoder.2} parent=5 // pred_check_branch
      %177 = sbr.rel (%p175) target = $region32
    $region31: #{multiscale_encoder.2} parent=5 // pred_region
      // Predicated region
      $region33: #{multiscale_encoder.2} parent=31 // pred_check
        %p178 = pneg %p31
      $region34: #{multiscale_encoder.2} parent=31 // pred_check_branch
        %180 = sbr.rel (%p178) target = $region36
      $region35: #{multiscale_encoder.2} parent=31 // pred_region
        %p181 = scmp.lt.s32.totalorder %s11, 3
        %s182 = scalar_select %p181, %s11, 3
        %s183 = smul.addr %s182, 4
        %s184 = smul.addr %s183, 8
        %s185 = scalar_lea.vmem %s0, %s184
      $region36: #{multiscale_encoder.2} parent=31 // pred_fallthru
        _
    $region32: #{multiscale_encoder.2} parent=5 // pred_fallthru
      _
    %p186 = scmp.le.s32.totalorder 1, %s11
    %p187 = scmp.lt.s32.totalorder %s11, 5
    %p188 = pnand %p186, %p187
    %p189 = pneg %p188
    // Predicated region
    $region37: #{multiscale_encoder.2} parent=5 // pred_check
      _
    $region38: #{multiscale_encoder.2} parent=5 // pred_check_branch
      %191 = sbr.rel (%p188) target = $region40
    $region39: #{multiscale_encoder.2} parent=5 // pred_region
      %s192 = ssub.s32 %s11, 1
      %p193 = scmp.lt.s32.totalorder %s16, 3
      %s194 = scalar_select %p193, %s16, 3
      %s195 = smul.addr %s194, 4
      %s196 = smul.addr %s195, 8
      %s197 = scalar_lea.vmem %s0, %s196
      %p198 = pneg %p37
      %p199 = pneg %p34
      %p200 = pneg %p58
      %p201 = pneg %p55
      %p202 = pneg %p79
      %p203 = pneg %p76
      %p204 = pneg %p100
      %p205 = pneg %p97
      %p206 = pneg %p121
      %p207 = pneg %p118
      %p208 = pneg %p147
      %p209 = pneg %p144
      %p210 = scmp.lt.s32.totalorder %s16, 3
      %s211 = scalar_select %p210, %s16, 3
      %s212 = smul.addr %s211, 2
      %s213 = smul.addr %s212, 8
      %s214 = scalar_lea.vmem %s5, %s213
      %p215 = scmp.lt.s32.totalorder %s16, 3
      %s216 = scalar_select %p215, %s16, 3
      %s217 = smul.addr %s216, 4
      %s218 = smul.addr %s217, 8
      %s219 = scalar_lea.vmem %s0, %s218
      %p220 = scmp.lt.s32.totalorder %s16, 3
      %s221 = scalar_select %p220, %s16, 3
      %s222 = smul.addr %s221, 2
      %s223 = smul.addr %s222, 8
      %s224 = scalar_lea.vmem %s5, %s223
      %v225 = vld [vmem:[%s219] sm:$0xff]
      %v226 = vld [vmem:[%s219 + $0x8] sm:$0xff]
      %v227 = vld [vmem:[%s219 + $0x10] sm:$0xff]
      %v228 = vld [vmem:[%s219 + $0x18] sm:$0xff]
      %v229 = vlaneseq
      %v230 = vshrl.u32 %v229, 7
      %v231 = vadd.s32 %v230, 8
      %v232 = vadd.s32 %v230, 16
      %v233 = vadd.s32 %v230, 24
      %vm234 = vcmp.lt.s32.totalorder %v230, 0
      %v235 = vsub.s32 0, %v230
      %v236 = vsel %vm234, %v235, %v230
      %v237 = vshrl.u32 %v236, 5
      %v238 = vand.u32 %v236, 31
      %v239 = vsub.s32 0, %v238
      %v240 = vsel %vm234, %v239, %v238
      %vm241 = vcmp.lt.s32.totalorder %v231, 0
      %v242 = vsub.s32 0, %v231
      %v243 = vsel %vm241, %v242, %v231
      %v244 = vshrl.u32 %v243, 5
      %v245 = vand.u32 %v243, 31
      %v246 = vsub.s32 0, %v245
      %v247 = vsel %vm241, %v246, %v245
      %vm248 = vcmp.lt.s32.totalorder %v232, 0
      %v249 = vsub.s32 0, %v232
      %v250 = vsel %vm248, %v249, %v232
      %v251 = vshrl.u32 %v250, 5
      %v252 = vand.u32 %v250, 31
      %v253 = vsub.s32 0, %v252
      %v254 = vsel %vm248, %v253, %v252
      %vm255 = vcmp.lt.s32.totalorder %v233, 0
      %v256 = vsub.s32 0, %v233
      %v257 = vsel %vm255, %v256, %v233
      %v258 = vshrl.u32 %v257, 5
      %v259 = vand.u32 %v257, 31
      %v260 = vsub.s32 0, %v259
      %v261 = vsel %vm255, %v260, %v259
      %vm262 = vcmp.ne.s32.totalorder %v240, 0
      %vm263 = vcmp.ne.s32.totalorder %v247, 0
      %vm264 = vcmp.ne.s32.totalorder %v254, 0
      %vm265 = vcmp.ne.s32.totalorder %v261, 0
      %vm266 = vcmp.lt.s32.totalorder %v240, 0
      %vm267 = vcmp.lt.s32.totalorder %v247, 0
      %vm268 = vcmp.lt.s32.totalorder %v254, 0
      %vm269 = vcmp.lt.s32.totalorder %v261, 0
      %vm270 = vmand %vm266, %vm262
      %vm271 = vmand %vm267, %vm263
      %vm272 = vmand %vm268, %vm264
      %vm273 = vmand %vm269, %vm265
      %v274 = vadd.s32 %v240, 32
      %v275 = vadd.s32 %v247, 32
      %v276 = vadd.s32 %v254, 32
      %v277 = vadd.s32 %v261, 32
      %v278 = vsel %vm270, %v274, %v240
      %v279 = vsel %vm271, %v275, %v247
      %v280 = vsel %vm272, %v276, %v254
      %v281 = vsel %vm273, %v277, %v261
      %vm282 = vcmp.eq.s32.totalorder %v278, 0
      %vm283 = vcmp.eq.s32.totalorder %v279, 0
      %vm284 = vcmp.eq.s32.totalorder %v280, 0
      %vm285 = vcmp.eq.s32.totalorder %v281, 0
      %vm286 = vcmp.eq.s32.totalorder %v278, 31
      %vm287 = vcmp.eq.s32.totalorder %v279, 31
      %vm288 = vcmp.eq.s32.totalorder %v280, 31
      %vm289 = vcmp.eq.s32.totalorder %v281, 31
      %v290 = vrot.slane %v225, 7
      %v291 = vrot.slane %v226, 7
      %v292 = vrot.slane %v227, 7
      %v293 = vrot.slane %v228, 7
      %vm294 = vcmp.lt.s32.totalorder %v230, 1
      %v295 = vsel %vm294, %v292, %v293
      %v296 = vsel %vm294, %v291, %v292
      %v297 = vsel %vm294, %v290, %v291
      %v298 = vsel %vm294, %v293, %v290
      %v299 = vsel %vm282, 1, 0
      %v300 = vsel %vm283, 1, 0
      %v301 = vsel %vm284, 1, 0
      %v302 = vsel %vm285, 1, 0
      %vm303 = vcmp.eq.s32.totalorder %v299, 1
      %vm304 = vcmp.eq.s32.totalorder %v300, 1
      %vm305 = vcmp.eq.s32.totalorder %v301, 1
      %vm306 = vcmp.eq.s32.totalorder %v302, 1
      %v307 = vsel %vm303, 0.0, %v298
      %v308 = vsel %vm304, 0.0, %v297
      %v309 = vsel %vm305, 0.0, %v296
      %v310 = vsel %vm306, 0.0, %v295
      %v311 = vrot.slane %v225, 1
      %v312 = vrot.slane %v226, 1
      %v313 = vrot.slane %v227, 1
      %v314 = vrot.slane %v228, 1
      %vm315 = vcmp.lt.s32.totalorder %v230, 7
      %v316 = vsel %vm315, %v313, %v314
      %v317 = vsel %vm315, %v312, %v313
      %v318 = vsel %vm315, %v311, %v312
      %v319 = vsel %vm315, %v314, %v311
      %v320 = vsel %vm286, 1, 0
      %v321 = vsel %vm287, 1, 0
      %v322 = vsel %vm288, 1, 0
      %v323 = vsel %vm289, 1, 0
      %vm324 = vcmp.eq.s32.totalorder %v320, 1
      %vm325 = vcmp.eq.s32.totalorder %v321, 1
      %vm326 = vcmp.eq.s32.totalorder %v322, 1
      %vm327 = vcmp.eq.s32.totalorder %v323, 1
      %v328 = vsel %vm324, 0.0, %v318
      %v329 = vsel %vm325, 0.0, %v317
      %v330 = vsel %vm326, 0.0, %v316
      %v331 = vsel %vm327, 0.0, %v319
      %s332 = scalar_lea.vmem %s1, 8
      %v333 = vld [vmem:[%s332] sm:$0xff]
      %v334 = vld [vmem:[%s1] sm:$0xff]
      %vm335 = vcmask 64512
      %v337 = vsel %vm335, %v307, 0
      %v340 = vsel %vm335, %v308, 0
      %v343 = vsel %vm335, %v309, 0
      %v346 = vsel %vm335, %v310, 0
      %348 = vmatprep.subr.mxu0 0.0
      %349 = vmatpush1.msra.mxu0 0.0
      %350 = vmatprep.subr.mxu0 0.0
      %351 = vmatpush1.msra.mxu0 0.0
      %352 = vmatprep.subr.mxu0 0.0
      %353 = vmatpush1.msra.mxu0 0.0
      %354 = vmatprep.subr.mxu0 0.0
      %355 = vmatpush1.msra.mxu0 0.0
      %356 = vmatprep.subr.mxu0 0.0
      %357 = vmatpush1.msra.mxu0 0.0
      %358 = vmatprep.subr.mxu0 0.0
      %359 = vmatpush1.msra.mxu0 0.0
      %360 = vmatprep.subr.mxu0 0.0
      %361 = vmatpush1.msra.mxu0 0.0
      %362 = vmatprep.subr.mxu0 0.0
      %363 = vmatpush1.msra.mxu0 0.0
      %364 = vmatprep.subr.mxu0 0.0
      %365 = vmatpush1.msra.mxu0 0.0
      %366 = vmatprep.subr.mxu0 0.0
      %367 = vmatpush1.msra.mxu0 0.0
      %368 = vmatprep.subr.mxu0 0.0
      %369 = vmatpush1.msra.mxu0 0.0
      %370 = vmatprep.subr.mxu0 0.0
      %371 = vmatpush1.msra.mxu0 0.0
      %372 = vmatprep.subr.mxu0 0.0
      %373 = vmatpush1.msra.mxu0 0.0
      %374 = vmatprep.subr.mxu0 0.0
      %375 = vmatpush1.msra.mxu0 0.0
      %376 = vmatprep.subr.mxu0 0.0
      %377 = vmatpush1.msra.mxu0 0.0
      %378 = vmatprep.subr.mxu0 0.0
      %379 = vmatpush1.msra.mxu0 %v334
      %380 = vmatprep.subr.mxu0 0.0
      %381 = vmatpush2.msra.mxu0 0.0
      %382 = vmatprep.subr.mxu0 0.0
      %383 = vmatpush2.msra.mxu0 0.0
      %384 = vmatprep.subr.mxu0 0.0
      %385 = vmatpush2.msra.mxu0 0.0
      %386 = vmatprep.subr.mxu0 0.0
      %387 = vmatpush2.msra.mxu0 0.0
      %388 = vmatprep.subr.mxu0 0.0
      %389 = vmatpush2.msra.mxu0 0.0
      %390 = vmatprep.subr.mxu0 0.0
      %391 = vmatpush2.msra.mxu0 0.0
      %392 = vmatprep.subr.mxu0 0.0
      %393 = vmatpush2.msra.mxu0 0.0
      %394 = vmatprep.subr.mxu0 0.0
      %395 = vmatpush2.msra.mxu0 0.0
      %396 = vmatprep.subr.mxu0 0.0
      %397 = vmatpush2.msra.mxu0 0.0
      %398 = vmatprep.subr.mxu0 0.0
      %399 = vmatpush2.msra.mxu0 0.0
      %400 = vmatprep.subr.mxu0 0.0
      %401 = vmatpush2.msra.mxu0 0.0
      %402 = vmatprep.subr.mxu0 0.0
      %403 = vmatpush2.msra.mxu0 0.0
      %404 = vmatprep.subr.mxu0 0.0
      %405 = vmatpush2.msra.mxu0 0.0
      %406 = vmatprep.subr.mxu0 0.0
      %407 = vmatpush2.msra.mxu0 0.0
      %408 = vmatprep.subr.mxu0 0.0
      %409 = vmatpush2.msra.mxu0 0.0
      %410 = vmatprep.subr.mxu0 0.0
      %411 = vmatpush2.msra.mxu0 0.0
      %412 = vmatprep.mubr.f32.mxu0 0.0
      %413 = vmatmul.mubr.f32.gmra.mxu0 %v337
      %v414 = vpop.f32.mrf.mxu0
      %v415 = vadd.f32 0.0, %v414
      %v416 = vpop.f32.mrf.mxu0
      %417 = vmatprep.mubr.f32.mxu0 0.0
      %418 = vmatmul.mubr.f32.gmra.mxu0 %v340
      %v419 = vpop.f32.mrf.mxu0
      %v420 = vadd.f32 0.0, %v419
      %v421 = vpop.f32.mrf.mxu0
      %422 = vmatprep.mubr.f32.mxu0 0.0
      %423 = vmatmul.mubr.f32.gmra.mxu0 %v343
      %v424 = vpop.f32.mrf.mxu0
      %v425 = vadd.f32 0.0, %v424
      %v426 = vpop.f32.mrf.mxu0
      %427 = vmatprep.mubr.f32.mxu0 0.0
      %428 = vmatmul.mubr.f32.gmra.mxu0 %v346
      %v429 = vpop.f32.mrf.mxu0
      %v430 = vadd.f32 0.0, %v429
      %v431 = vpop.f32.mrf.mxu0
      %432 = vdwg.mxu0
      %v434 = vsel %vm335, %v225, 0
      %v437 = vsel %vm335, %v226, 0
      %v440 = vsel %vm335, %v227, 0
      %v443 = vsel %vm335, %v228, 0
      %445 = vmatprep.subr.mxu0 0.0
      %446 = vmatpush1.msra.mxu0 0.0
      %447 = vmatprep.subr.mxu0 0.0
      %448 = vmatpush1.msra.mxu0 0.0
      %449 = vmatprep.subr.mxu0 0.0
      %450 = vmatpush1.msra.mxu0 0.0
      %451 = vmatprep.subr.mxu0 0.0
      %452 = vmatpush1.msra.mxu0 0.0
      %453 = vmatprep.subr.mxu0 0.0
      %454 = vmatpush1.msra.mxu0 0.0
      %455 = vmatprep.subr.mxu0 0.0
      %456 = vmatpush1.msra.mxu0 0.0
      %457 = vmatprep.subr.mxu0 0.0
      %458 = vmatpush1.msra.mxu0 0.0
      %459 = vmatprep.subr.mxu0 0.0
      %460 = vmatpush1.msra.mxu0 0.0
      %461 = vmatprep.subr.mxu0 0.0
      %462 = vmatpush1.msra.mxu0 0.0
      %463 = vmatprep.subr.mxu0 0.0
      %464 = vmatpush1.msra.mxu0 0.0
      %465 = vmatprep.subr.mxu0 0.0
      %466 = vmatpush1.msra.mxu0 0.0
      %467 = vmatprep.subr.mxu0 0.0
      %468 = vmatpush1.msra.mxu0 0.0
      %469 = vmatprep.subr.mxu0 0.0
      %470 = vmatpush1.msra.mxu0 0.0
      %471 = vmatprep.subr.mxu0 0.0
      %472 = vmatpush1.msra.mxu0 0.0
      %473 = vmatprep.subr.mxu0 0.0
      %474 = vmatpush1.msra.mxu0 0.0
      %475 = vmatprep.subr.mxu0 0.0
      %476 = vmatpush1.msra.mxu0 %v333
      %477 = vmatprep.subr.mxu0 0.0
      %478 = vmatpush2.msra.mxu0 0.0
      %479 = vmatprep.subr.mxu0 0.0
      %480 = vmatpush2.msra.mxu0 0.0
      %481 = vmatprep.subr.mxu0 0.0
      %482 = vmatpush2.msra.mxu0 0.0
      %483 = vmatprep.subr.mxu0 0.0
      %484 = vmatpush2.msra.mxu0 0.0
      %485 = vmatprep.subr.mxu0 0.0
      %486 = vmatpush2.msra.mxu0 0.0
      %487 = vmatprep.subr.mxu0 0.0
      %488 = vmatpush2.msra.mxu0 0.0
      %489 = vmatprep.subr.mxu0 0.0
      %490 = vmatpush2.msra.mxu0 0.0
      %491 = vmatprep.subr.mxu0 0.0
      %492 = vmatpush2.msra.mxu0 0.0
      %493 = vmatprep.subr.mxu0 0.0
      %494 = vmatpush2.msra.mxu0 0.0
      %495 = vmatprep.subr.mxu0 0.0
      %496 = vmatpush2.msra.mxu0 0.0
      %497 = vmatprep.subr.mxu0 0.0
      %498 = vmatpush2.msra.mxu0 0.0
      %499 = vmatprep.subr.mxu0 0.0
      %500 = vmatpush2.msra.mxu0 0.0
      %501 = vmatprep.subr.mxu0 0.0
      %502 = vmatpush2.msra.mxu0 0.0
      %503 = vmatprep.subr.mxu0 0.0
      %504 = vmatpush2.msra.mxu0 0.0
      %505 = vmatprep.subr.mxu0 0.0
      %506 = vmatpush2.msra.mxu0 0.0
      %507 = vmatprep.subr.mxu0 0.0
      %508 = vmatpush2.msra.mxu0 0.0
      %509 = vmatprep.mubr.f32.mxu0 0.0
      %510 = vmatmul.mubr.f32.gmra.mxu0 %v434
      %v511 = vpop.f32.mrf.mxu0
      %v512 = vadd.f32 %v415, %v511
      %v513 = vpop.f32.mrf.mxu0
      %514 = vmatprep.mubr.f32.mxu0 0.0
      %515 = vmatmul.mubr.f32.gmra.mxu0 %v437
      %v516 = vpop.f32.mrf.mxu0
      %v517 = vadd.f32 %v420, %v516
      %v518 = vpop.f32.mrf.mxu0
      %519 = vmatprep.mubr.f32.mxu0 0.0
      %520 = vmatmul.mubr.f32.gmra.mxu0 %v440
      %v521 = vpop.f32.mrf.mxu0
      %v522 = vadd.f32 %v425, %v521
      %v523 = vpop.f32.mrf.mxu0
      %524 = vmatprep.mubr.f32.mxu0 0.0
      %525 = vmatmul.mubr.f32.gmra.mxu0 %v443
      %v526 = vpop.f32.mrf.mxu0
      %v527 = vadd.f32 %v430, %v526
      %v528 = vpop.f32.mrf.mxu0
      %529 = vdwg.mxu0
      %s530 = scalar_lea.vmem %s1, 16
      %v531 = vld [vmem:[%s530] sm:$0xff]
      %v533 = vsel %vm335, %v328, 0
      %v536 = vsel %vm335, %v329, 0
      %v539 = vsel %vm335, %v330, 0
      %v542 = vsel %vm335, %v331, 0
      %544 = vmatprep.subr.mxu0 0.0
      %545 = vmatpush1.msra.mxu0 0.0
      %546 = vmatprep.subr.mxu0 0.0
      %547 = vmatpush1.msra.mxu0 0.0
      %548 = vmatprep.subr.mxu0 0.0
      %549 = vmatpush1.msra.mxu0 0.0
      %550 = vmatprep.subr.mxu0 0.0
      %551 = vmatpush1.msra.mxu0 0.0
      %552 = vmatprep.subr.mxu0 0.0
      %553 = vmatpush1.msra.mxu0 0.0
      %554 = vmatprep.subr.mxu0 0.0
      %555 = vmatpush1.msra.mxu0 0.0
      %556 = vmatprep.subr.mxu0 0.0
      %557 = vmatpush1.msra.mxu0 0.0
      %558 = vmatprep.subr.mxu0 0.0
      %559 = vmatpush1.msra.mxu0 0.0
      %560 = vmatprep.subr.mxu0 0.0
      %561 = vmatpush1.msra.mxu0 0.0
      %562 = vmatprep.subr.mxu0 0.0
      %563 = vmatpush1.msra.mxu0 0.0
      %564 = vmatprep.subr.mxu0 0.0
      %565 = vmatpush1.msra.mxu0 0.0
      %566 = vmatprep.subr.mxu0 0.0
      %567 = vmatpush1.msra.mxu0 0.0
      %568 = vmatprep.subr.mxu0 0.0
      %569 = vmatpush1.msra.mxu0 0.0
      %570 = vmatprep.subr.mxu0 0.0
      %571 = vmatpush1.msra.mxu0 0.0
      %572 = vmatprep.subr.mxu0 0.0
      %573 = vmatpush1.msra.mxu0 0.0
      %574 = vmatprep.subr.mxu0 0.0
      %575 = vmatpush1.msra.mxu0 %v531
      %576 = vmatprep.subr.mxu0 0.0
      %577 = vmatpush2.msra.mxu0 0.0
      %578 = vmatprep.subr.mxu0 0.0
      %579 = vmatpush2.msra.mxu0 0.0
      %580 = vmatprep.subr.mxu0 0.0
      %581 = vmatpush2.msra.mxu0 0.0
      %582 = vmatprep.subr.mxu0 0.0
      %583 = vmatpush2.msra.mxu0 0.0
      %584 = vmatprep.subr.mxu0 0.0
      %585 = vmatpush2.msra.mxu0 0.0
      %586 = vmatprep.subr.mxu0 0.0
      %587 = vmatpush2.msra.mxu0 0.0
      %588 = vmatprep.subr.mxu0 0.0
      %589 = vmatpush2.msra.mxu0 0.0
      %590 = vmatprep.subr.mxu0 0.0
      %591 = vmatpush2.msra.mxu0 0.0
      %592 = vmatprep.subr.mxu0 0.0
      %593 = vmatpush2.msra.mxu0 0.0
      %594 = vmatprep.subr.mxu0 0.0
      %595 = vmatpush2.msra.mxu0 0.0
      %596 = vmatprep.subr.mxu0 0.0
      %597 = vmatpush2.msra.mxu0 0.0
      %598 = vmatprep.subr.mxu0 0.0
      %599 = vmatpush2.msra.mxu0 0.0
      %600 = vmatprep.subr.mxu0 0.0
      %601 = vmatpush2.msra.mxu0 0.0
      %602 = vmatprep.subr.mxu0 0.0
      %603 = vmatpush2.msra.mxu0 0.0
      %604 = vmatprep.subr.mxu0 0.0
      %605 = vmatpush2.msra.mxu0 0.0
      %606 = vmatprep.subr.mxu0 0.0
      %607 = vmatpush2.msra.mxu0 0.0
      %608 = vmatprep.mubr.f32.mxu0 0.0
      %609 = vmatmul.mubr.f32.gmra.mxu0 %v533
      %v610 = vpop.f32.mrf.mxu0
      %v611 = vadd.f32 0.0, %v610
      %v612 = vpop.f32.mrf.mxu0
      %613 = vmatprep.mubr.f32.mxu0 0.0
      %614 = vmatmul.mubr.f32.gmra.mxu0 %v536
      %v615 = vpop.f32.mrf.mxu0
      %v616 = vadd.f32 0.0, %v615
      %v617 = vpop.f32.mrf.mxu0
      %618 = vmatprep.mubr.f32.mxu0 0.0
      %619 = vmatmul.mubr.f32.gmra.mxu0 %v539
      %v620 = vpop.f32.mrf.mxu0
      %v621 = vadd.f32 0.0, %v620
      %v622 = vpop.f32.mrf.mxu0
      %623 = vmatprep.mubr.f32.mxu0 0.0
      %624 = vmatmul.mubr.f32.gmra.mxu0 %v542
      %v625 = vpop.f32.mrf.mxu0
      %v626 = vadd.f32 0.0, %v625
      %v627 = vpop.f32.mrf.mxu0
      %628 = vdwg.mxu0
      %v629 = vadd.f32 %v512, %v611
      %v630 = vadd.f32 %v517, %v616
      %v631 = vadd.f32 %v522, %v621
      %v632 = vadd.f32 %v527, %v626
      %v633 = vld [vmem:[%s2] sm:$0x1]
      %v635 = vlaneseq
      %v636 = vshrl.u32 %v635, 7
      %v637 = vsub.s32 0, %v636
      %v638 = vrot.slane %v633, %v637
      %v640 = vadd.f32 %v629, %v638
      %v641 = vadd.f32 %v630, %v638
      %v642 = vadd.f32 %v631, %v638
      %v643 = vadd.f32 %v632, %v638
      %v644 = vmax.f32 %v640, 0.0
      %v645 = vmax.f32 %v641, 0.0
      %v646 = vmax.f32 %v642, 0.0
      %v647 = vmax.f32 %v643, 0.0
      %v648 = vrot.slane %v644, 7
      %v649 = vrot.slane %v645, 7
      %v650 = vrot.slane %v646, 7
      %v651 = vrot.slane %v647, 7
      %v652 = vsel %vm294, %v650, %v651
      %v653 = vsel %vm294, %v649, %v650
      %v654 = vsel %vm294, %v648, %v649
      %v655 = vsel %vm294, %v651, %v648
      %v656 = vsel %vm303, 0.0, %v655
      %v657 = vsel %vm304, 0.0, %v654
      %v658 = vsel %vm305, 0.0, %v653
      %v659 = vsel %vm306, 0.0, %v652
      %v660 = vrot.slane %v644, 1
      %v661 = vrot.slane %v645, 1
      %v662 = vrot.slane %v646, 1
      %v663 = vrot.slane %v647, 1
      %v664 = vsel %vm315, %v662, %v663
      %v665 = vsel %vm315, %v661, %v662
      %v666 = vsel %vm315, %v660, %v661
      %v667 = vsel %vm315, %v663, %v660
      %v668 = vsel %vm324, 0.0, %v666
      %v669 = vsel %vm325, 0.0, %v665
      %v670 = vsel %vm326, 0.0, %v664
      %v671 = vsel %vm327, 0.0, %v667
      %s672 = scalar_lea.vmem %s3, 32
      %v673 = vld [vmem:[%s672] sm:$0xff]
      %v674 = vld [vmem:[%s672 + $0x8] sm:$0xff]
      %v675 = vld [vmem:[%s672 + $0x10] sm:$0xff]
      %v676 = vld [vmem:[%s672 + $0x18] sm:$0xff]
      %v677 = vld [vmem:[%s3] sm:$0xff]
      %v678 = vld [vmem:[%s3 + $0x8] sm:$0xff]
      %v679 = vld [vmem:[%s3 + $0x10] sm:$0xff]
      %v680 = vld [vmem:[%s3 + $0x18] sm:$0xff]
      %vm681 = vcmask 261120
      %v683 = vsel %vm681, %v656, 0
      %v686 = vsel %vm681, %v657, 0
      %v689 = vsel %vm681, %v658, 0
      %v692 = vsel %vm681, %v659, 0
      %694 = vmatprep.subr.mxu0 0.0
      %695 = vmatpush1.msra.mxu0 0.0
      %696 = vmatprep.subr.mxu0 0.0
      %697 = vmatpush1.msra.mxu0 0.0
      %698 = vmatprep.subr.mxu0 0.0
      %699 = vmatpush1.msra.mxu0 0.0
      %700 = vmatprep.subr.mxu0 0.0
      %701 = vmatpush1.msra.mxu0 0.0
      %702 = vmatprep.subr.mxu0 0.0
      %703 = vmatpush1.msra.mxu0 0.0
      %704 = vmatprep.subr.mxu0 0.0
      %705 = vmatpush1.msra.mxu0 0.0
      %706 = vmatprep.subr.mxu0 0.0
      %707 = vmatpush1.msra.mxu0 0.0
      %708 = vmatprep.subr.mxu0 0.0
      %709 = vmatpush1.msra.mxu0 0.0
      %710 = vmatprep.subr.mxu0 0.0
      %711 = vmatpush1.msra.mxu0 0.0
      %712 = vmatprep.subr.mxu0 0.0
      %713 = vmatpush1.msra.mxu0 0.0
      %714 = vmatprep.subr.mxu0 0.0
      %715 = vmatpush1.msra.mxu0 0.0
      %716 = vmatprep.subr.mxu0 0.0
      %717 = vmatpush1.msra.mxu0 0.0
      %718 = vmatprep.subr.mxu0 0.0
      %719 = vmatpush1.msra.mxu0 %v680
      %720 = vmatprep.subr.mxu0 0.0
      %721 = vmatpush1.msra.mxu0 %v679
      %722 = vmatprep.subr.mxu0 0.0
      %723 = vmatpush1.msra.mxu0 %v678
      %724 = vmatprep.subr.mxu0 0.0
      %725 = vmatpush1.msra.mxu0 %v677
      %726 = vmatprep.subr.mxu0 0.0
      %727 = vmatpush2.msra.mxu0 0.0
      %728 = vmatprep.subr.mxu0 0.0
      %729 = vmatpush2.msra.mxu0 0.0
      %730 = vmatprep.subr.mxu0 0.0
      %731 = vmatpush2.msra.mxu0 0.0
      %732 = vmatprep.subr.mxu0 0.0
      %733 = vmatpush2.msra.mxu0 0.0
      %734 = vmatprep.subr.mxu0 0.0
      %735 = vmatpush2.msra.mxu0 0.0
      %736 = vmatprep.subr.mxu0 0.0
      %737 = vmatpush2.msra.mxu0 0.0
      %738 = vmatprep.subr.mxu0 0.0
      %739 = vmatpush2.msra.mxu0 0.0
      %740 = vmatprep.subr.mxu0 0.0
      %741 = vmatpush2.msra.mxu0 0.0
      %742 = vmatprep.subr.mxu0 0.0
      %743 = vmatpush2.msra.mxu0 0.0
      %744 = vmatprep.subr.mxu0 0.0
      %745 = vmatpush2.msra.mxu0 0.0
      %746 = vmatprep.subr.mxu0 0.0
      %747 = vmatpush2.msra.mxu0 0.0
      %748 = vmatprep.subr.mxu0 0.0
      %749 = vmatpush2.msra.mxu0 0.0
      %750 = vmatprep.subr.mxu0 0.0
      %751 = vmatpush2.msra.mxu0 0.0
      %752 = vmatprep.subr.mxu0 0.0
      %753 = vmatpush2.msra.mxu0 0.0
      %754 = vmatprep.subr.mxu0 0.0
      %755 = vmatpush2.msra.mxu0 0.0
      %756 = vmatprep.subr.mxu0 0.0
      %757 = vmatpush2.msra.mxu0 0.0
      %758 = vmatprep.mubr.f32.mxu0 0.0
      %759 = vmatmul.mubr.f32.gmra.mxu0 %v683
      %v760 = vpop.f32.mrf.mxu0
      %v761 = vadd.f32 0.0, %v760
      %v762 = vpop.f32.mrf.mxu0
      %763 = vmatprep.mubr.f32.mxu0 0.0
      %764 = vmatmul.mubr.f32.gmra.mxu0 %v686
      %v765 = vpop.f32.mrf.mxu0
      %v766 = vadd.f32 0.0, %v765
      %v767 = vpop.f32.mrf.mxu0
      %768 = vmatprep.mubr.f32.mxu0 0.0
      %769 = vmatmul.mubr.f32.gmra.mxu0 %v689
      %v770 = vpop.f32.mrf.mxu0
      %v771 = vadd.f32 0.0, %v770
      %v772 = vpop.f32.mrf.mxu0
      %773 = vmatprep.mubr.f32.mxu0 0.0
      %774 = vmatmul.mubr.f32.gmra.mxu0 %v692
      %v775 = vpop.f32.mrf.mxu0
      %v776 = vadd.f32 0.0, %v775
      %v777 = vpop.f32.mrf.mxu0
      %778 = vdwg.mxu0
      %v780 = vsel %vm681, %v644, 0
      %v783 = vsel %vm681, %v645, 0
      %v786 = vsel %vm681, %v646, 0
      %v789 = vsel %vm681, %v647, 0
      %791 = vmatprep.subr.mxu0 0.0
      %792 = vmatpush1.msra.mxu0 0.0
      %793 = vmatprep.subr.mxu0 0.0
      %794 = vmatpush1.msra.mxu0 0.0
      %795 = vmatprep.subr.mxu0 0.0
      %796 = vmatpush1.msra.mxu0 0.0
      %797 = vmatprep.subr.mxu0 0.0
      %798 = vmatpush1.msra.mxu0 0.0
      %799 = vmatprep.subr.mxu0 0.0
      %800 = vmatpush1.msra.mxu0 0.0
      %801 = vmatprep.subr.mxu0 0.0
      %802 = vmatpush1.msra.mxu0 0.0
      %803 = vmatprep.subr.mxu0 0.0
      %804 = vmatpush1.msra.mxu0 0.0
      %805 = vmatprep.subr.mxu0 0.0
      %806 = vmatpush1.msra.mxu0 0.0
      %807 = vmatprep.subr.mxu0 0.0
      %808 = vmatpush1.msra.mxu0 0.0
      %809 = vmatprep.subr.mxu0 0.0
      %810 = vmatpush1.msra.mxu0 0.0
      %811 = vmatprep.subr.mxu0 0.0
      %812 = vmatpush1.msra.mxu0 0.0
      %813 = vmatprep.subr.mxu0 0.0
      %814 = vmatpush1.msra.mxu0 0.0
      %815 = vmatprep.subr.mxu0 0.0
      %816 = vmatpush1.msra.mxu0 %v676
      %817 = vmatprep.subr.mxu0 0.0
      %818 = vmatpush1.msra.mxu0 %v675
      %819 = vmatprep.subr.mxu0 0.0
      %820 = vmatpush1.msra.mxu0 %v674
      %821 = vmatprep.subr.mxu0 0.0
      %822 = vmatpush1.msra.mxu0 %v673
      %823 = vmatprep.subr.mxu0 0.0
      %824 = vmatpush2.msra.mxu0 0.0
      %825 = vmatprep.subr.mxu0 0.0
      %826 = vmatpush2.msra.mxu0 0.0
      %827 = vmatprep.subr.mxu0 0.0
      %828 = vmatpush2.msra.mxu0 0.0
      %829 = vmatprep.subr.mxu0 0.0
      %830 = vmatpush2.msra.mxu0 0.0
      %831 = vmatprep.subr.mxu0 0.0
      %832 = vmatpush2.msra.mxu0 0.0
      %833 = vmatprep.subr.mxu0 0.0
      %834 = vmatpush2.msra.mxu0 0.0
      %835 = vmatprep.subr.mxu0 0.0
      %836 = vmatpush2.msra.mxu0 0.0
      %837 = vmatprep.subr.mxu0 0.0
      %838 = vmatpush2.msra.mxu0 0.0
      %839 = vmatprep.subr.mxu0 0.0
      %840 = vmatpush2.msra.mxu0 0.0
      %841 = vmatprep.subr.mxu0 0.0
      %842 = vmatpush2.msra.mxu0 0.0
      %843 = vmatprep.subr.mxu0 0.0
      %844 = vmatpush2.msra.mxu0 0.0
      %845 = vmatprep.subr.mxu0 0.0
      %846 = vmatpush2.msra.mxu0 0.0
      %847 = vmatprep.subr.mxu0 0.0
      %848 = vmatpush2.msra.mxu0 0.0
      %849 = vmatprep.subr.mxu0 0.0
      %850 = vmatpush2.msra.mxu0 0.0
      %851 = vmatprep.subr.mxu0 0.0
      %852 = vmatpush2.msra.mxu0 0.0
      %853 = vmatprep.subr.mxu0 0.0
      %854 = vmatpush2.msra.mxu0 0.0
      %855 = vmatprep.mubr.f32.mxu0 0.0
      %856 = vmatmul.mubr.f32.gmra.mxu0 %v780
      %v857 = vpop.f32.mrf.mxu0
      %v858 = vadd.f32 %v761, %v857
      %v859 = vpop.f32.mrf.mxu0
      %860 = vmatprep.mubr.f32.mxu0 0.0
      %861 = vmatmul.mubr.f32.gmra.mxu0 %v783
      %v862 = vpop.f32.mrf.mxu0
      %v863 = vadd.f32 %v766, %v862
      %v864 = vpop.f32.mrf.mxu0
      %865 = vmatprep.mubr.f32.mxu0 0.0
      %866 = vmatmul.mubr.f32.gmra.mxu0 %v786
      %v867 = vpop.f32.mrf.mxu0
      %v868 = vadd.f32 %v771, %v867
      %v869 = vpop.f32.mrf.mxu0
      %870 = vmatprep.mubr.f32.mxu0 0.0
      %871 = vmatmul.mubr.f32.gmra.mxu0 %v789
      %v872 = vpop.f32.mrf.mxu0
      %v873 = vadd.f32 %v776, %v872
      %v874 = vpop.f32.mrf.mxu0
      %875 = vdwg.mxu0
      %s876 = scalar_lea.vmem %s3, 64
      %v877 = vld [vmem:[%s876] sm:$0xff]
      %v878 = vld [vmem:[%s876 + $0x8] sm:$0xff]
      %v879 = vld [vmem:[%s876 + $0x10] sm:$0xff]
      %v880 = vld [vmem:[%s876 + $0x18] sm:$0xff]
      %v882 = vsel %vm681, %v668, 0
      %v885 = vsel %vm681, %v669, 0
      %v888 = vsel %vm681, %v670, 0
      %v891 = vsel %vm681, %v671, 0
      %893 = vmatprep.subr.mxu0 0.0
      %894 = vmatpush1.msra.mxu0 0.0
      %895 = vmatprep.subr.mxu0 0.0
      %896 = vmatpush1.msra.mxu0 0.0
      %897 = vmatprep.subr.mxu0 0.0
      %898 = vmatpush1.msra.mxu0 0.0
      %899 = vmatprep.subr.mxu0 0.0
      %900 = vmatpush1.msra.mxu0 0.0
      %901 = vmatprep.subr.mxu0 0.0
      %902 = vmatpush1.msra.mxu0 0.0
      %903 = vmatprep.subr.mxu0 0.0
      %904 = vmatpush1.msra.mxu0 0.0
      %905 = vmatprep.subr.mxu0 0.0
      %906 = vmatpush1.msra.mxu0 0.0
      %907 = vmatprep.subr.mxu0 0.0
      %908 = vmatpush1.msra.mxu0 0.0
      %909 = vmatprep.subr.mxu0 0.0
      %910 = vmatpush1.msra.mxu0 0.0
      %911 = vmatprep.subr.mxu0 0.0
      %912 = vmatpush1.msra.mxu0 0.0
      %913 = vmatprep.subr.mxu0 0.0
      %914 = vmatpush1.msra.mxu0 0.0
      %915 = vmatprep.subr.mxu0 0.0
      %916 = vmatpush1.msra.mxu0 0.0
      %917 = vmatprep.subr.mxu0 0.0
      %918 = vmatpush1.msra.mxu0 %v880
      %919 = vmatprep.subr.mxu0 0.0
      %920 = vmatpush1.msra.mxu0 %v879
      %921 = vmatprep.subr.mxu0 0.0
      %922 = vmatpush1.msra.mxu0 %v878
      %923 = vmatprep.subr.mxu0 0.0
      %924 = vmatpush1.msra.mxu0 %v877
      %925 = vmatprep.subr.mxu0 0.0
      %926 = vmatpush2.msra.mxu0 0.0
      %927 = vmatprep.subr.mxu0 0.0
      %928 = vmatpush2.msra.mxu0 0.0
      %929 = vmatprep.subr.mxu0 0.0
      %930 = vmatpush2.msra.mxu0 0.0
      %931 = vmatprep.subr.mxu0 0.0
      %932 = vmatpush2.msra.mxu0 0.0
      %933 = vmatprep.subr.mxu0 0.0
      %934 = vmatpush2.msra.mxu0 0.0
      %935 = vmatprep.subr.mxu0 0.0
      %936 = vmatpush2.msra.mxu0 0.0
      %937 = vmatprep.subr.mxu0 0.0
      %938 = vmatpush2.msra.mxu0 0.0
      %939 = vmatprep.subr.mxu0 0.0
      %940 = vmatpush2.msra.mxu0 0.0
      %941 = vmatprep.subr.mxu0 0.0
      %942 = vmatpush2.msra.mxu0 0.0
      %943 = vmatprep.subr.mxu0 0.0
      %944 = vmatpush2.msra.mxu0 0.0
      %945 = vmatprep.subr.mxu0 0.0
      %946 = vmatpush2.msra.mxu0 0.0
      %947 = vmatprep.subr.mxu0 0.0
      %948 = vmatpush2.msra.mxu0 0.0
      %949 = vmatprep.subr.mxu0 0.0
      %950 = vmatpush2.msra.mxu0 0.0
      %951 = vmatprep.subr.mxu0 0.0
      %952 = vmatpush2.msra.mxu0 0.0
      %953 = vmatprep.subr.mxu0 0.0
      %954 = vmatpush2.msra.mxu0 0.0
      %955 = vmatprep.subr.mxu0 0.0
      %956 = vmatpush2.msra.mxu0 0.0
      %957 = vmatprep.mubr.f32.mxu0 0.0
      %958 = vmatmul.mubr.f32.gmra.mxu0 %v882
      %v959 = vpop.f32.mrf.mxu0
      %v960 = vadd.f32 0.0, %v959
      %v961 = vpop.f32.mrf.mxu0
      %962 = vmatprep.mubr.f32.mxu0 0.0
      %963 = vmatmul.mubr.f32.gmra.mxu0 %v885
      %v964 = vpop.f32.mrf.mxu0
      %v965 = vadd.f32 0.0, %v964
      %v966 = vpop.f32.mrf.mxu0
      %967 = vmatprep.mubr.f32.mxu0 0.0
      %968 = vmatmul.mubr.f32.gmra.mxu0 %v888
      %v969 = vpop.f32.mrf.mxu0
      %v970 = vadd.f32 0.0, %v969
      %v971 = vpop.f32.mrf.mxu0
      %972 = vmatprep.mubr.f32.mxu0 0.0
      %973 = vmatmul.mubr.f32.gmra.mxu0 %v891
      %v974 = vpop.f32.mrf.mxu0
      %v975 = vadd.f32 0.0, %v974
      %v976 = vpop.f32.mrf.mxu0
      %977 = vdwg.mxu0
      %v978 = vadd.f32 %v858, %v960
      %v979 = vadd.f32 %v863, %v965
      %v980 = vadd.f32 %v868, %v970
      %v981 = vadd.f32 %v873, %v975
      %v982 = vld [vmem:[%s4] sm:$0x1]
      %v984 = vlaneseq
      %v985 = vshrl.u32 %v984, 7
      %v986 = vsub.s32 0, %v985
      %v987 = vrot.slane %v982, %v986
      %v989 = vadd.f32 %v978, %v987
      %v990 = vadd.f32 %v979, %v987
      %v991 = vadd.f32 %v980, %v987
      %v992 = vadd.f32 %v981, %v987
      %v993 = vmax.f32 %v989, 0.0
      %v994 = vmax.f32 %v990, 0.0
      %v995 = vmax.f32 %v991, 0.0
      %v996 = vmax.f32 %v992, 0.0
      %v1001 = vcombine.high %v993, %v993
      %v1003 = vunpack.c.l.s4 1983009808
      %v1004 = vunpack.c.0.s8 %v1003
      %v1005 = vlaneseq
      %v1006 = vshrl.u32 %v1005, 7
      %v1007 = vsub.s32 %v1004, %v1006
      %v1008 = vrot.slane %v993, %v1007
      %v1010 = vunpack.c.l.s4 1983009808
      %v1011 = vunpack.c.0.s8 %v1010
      %v1012 = vlaneseq
      %v1013 = vshrl.u32 %v1012, 7
      %v1014 = vsub.s32 %v1011, %v1013
      %v1015 = vrot.slane %v1001, %v1014
      %v1016 = vcombine.high %v1008, %v1008
      %v1017 = vcombine.high %v1015, %v1015
      %v1018 = vcombine.high %v994, %v994
      %v1020 = vunpack.c.l.s4 1983009808
      %v1021 = vunpack.c.0.s8 %v1020
      %v1022 = vlaneseq
      %v1023 = vshrl.u32 %v1022, 7
      %v1024 = vsub.s32 %v1021, %v1023
      %v1025 = vrot.slane %v994, %v1024
      %v1027 = vunpack.c.l.s4 1983009808
      %v1028 = vunpack.c.0.s8 %v1027
      %v1029 = vlaneseq
      %v1030 = vshrl.u32 %v1029, 7
      %v1031 = vsub.s32 %v1028, %v1030
      %v1032 = vrot.slane %v1018, %v1031
      %v1033 = vcombine.high %v1025, %v1025
      %v1034 = vcombine.high %v1032, %v1032
      %v1035 = vcombine.high %v995, %v995
      %v1037 = vunpack.c.l.s4 1983009808
      %v1038 = vunpack.c.0.s8 %v1037
      %v1039 = vlaneseq
      %v1040 = vshrl.u32 %v1039, 7
      %v1041 = vsub.s32 %v1038, %v1040
      %v1042 = vrot.slane %v995, %v1041
      %v1044 = vunpack.c.l.s4 1983009808
      %v1045 = vunpack.c.0.s8 %v1044
      %v1046 = vlaneseq
      %v1047 = vshrl.u32 %v1046, 7
      %v1048 = vsub.s32 %v1045, %v1047
      %v1049 = vrot.slane %v1035, %v1048
      %v1050 = vcombine.high %v1042, %v1042
      %v1051 = vcombine.high %v1049, %v1049
      %v1052 = vcombine.high %v996, %v996
      %v1054 = vunpack.c.l.s4 1983009808
      %v1055 = vunpack.c.0.s8 %v1054
      %v1056 = vlaneseq
      %v1057 = vshrl.u32 %v1056, 7
      %v1058 = vsub.s32 %v1055, %v1057
      %v1059 = vrot.slane %v996, %v1058
      %v1061 = vunpack.c.l.s4 1983009808
      %v1062 = vunpack.c.0.s8 %v1061
      %v1063 = vlaneseq
      %v1064 = vshrl.u32 %v1063, 7
      %v1065 = vsub.s32 %v1062, %v1064
      %v1066 = vrot.slane %v1052, %v1065
      %v1067 = vcombine.high %v1059, %v1059
      %v1068 = vcombine.high %v1066, %v1066
      %vm1085 = vcmask 254976
      %v1086 = vsel %vm1085, %v1008, 0.0
      %v1087 = vrot.slane %v1086, 4
      %v1088 = vadd.f32 %v1086, %v1087
      %v1089 = vrot.slane %v1088, 2
      %v1090 = vadd.f32 %v1088, %v1089
      %v1091 = vrot.slane %v1090, 1
      %v1092 = vadd.f32 %v1090, %v1091
      %v1093 = vsel %vm1085, %v1016, 0.0
      %v1094 = vrot.slane %v1093, 4
      %v1095 = vadd.f32 %v1093, %v1094
      %v1096 = vrot.slane %v1095, 2
      %v1097 = vadd.f32 %v1095, %v1096
      %v1098 = vrot.slane %v1097, 1
      %v1099 = vadd.f32 %v1097, %v1098
      %v1100 = vsel %vm1085, %v1015, 0.0
      %v1101 = vrot.slane %v1100, 4
      %v1102 = vadd.f32 %v1100, %v1101
      %v1103 = vrot.slane %v1102, 2
      %v1104 = vadd.f32 %v1102, %v1103
      %v1105 = vrot.slane %v1104, 1
      %v1106 = vadd.f32 %v1104, %v1105
      %v1107 = vsel %vm1085, %v1017, 0.0
      %v1108 = vrot.slane %v1107, 4
      %v1109 = vadd.f32 %v1107, %v1108
      %v1110 = vrot.slane %v1109, 2
      %v1111 = vadd.f32 %v1109, %v1110
      %v1112 = vrot.slane %v1111, 1
      %v1113 = vadd.f32 %v1111, %v1112
      %v1114 = vsel %vm1085, %v1025, 0.0
      %v1115 = vrot.slane %v1114, 4
      %v1116 = vadd.f32 %v1114, %v1115
      %v1117 = vrot.slane %v1116, 2
      %v1118 = vadd.f32 %v1116, %v1117
      %v1119 = vrot.slane %v1118, 1
      %v1120 = vadd.f32 %v1118, %v1119
      %v1121 = vsel %vm1085, %v1033, 0.0
      %v1122 = vrot.slane %v1121, 4
      %v1123 = vadd.f32 %v1121, %v1122
      %v1124 = vrot.slane %v1123, 2
      %v1125 = vadd.f32 %v1123, %v1124
      %v1126 = vrot.slane %v1125, 1
      %v1127 = vadd.f32 %v1125, %v1126
      %v1128 = vsel %vm1085, %v1032, 0.0
      %v1129 = vrot.slane %v1128, 4
      %v1130 = vadd.f32 %v1128, %v1129
      %v1131 = vrot.slane %v1130, 2
      %v1132 = vadd.f32 %v1130, %v1131
      %v1133 = vrot.slane %v1132, 1
      %v1134 = vadd.f32 %v1132, %v1133
      %v1135 = vsel %vm1085, %v1034, 0.0
      %v1136 = vrot.slane %v1135, 4
      %v1137 = vadd.f32 %v1135, %v1136
      %v1138 = vrot.slane %v1137, 2
      %v1139 = vadd.f32 %v1137, %v1138
      %v1140 = vrot.slane %v1139, 1
      %v1141 = vadd.f32 %v1139, %v1140
      %v1142 = vsel %vm1085, %v1042, 0.0
      %v1143 = vrot.slane %v1142, 4
      %v1144 = vadd.f32 %v1142, %v1143
      %v1145 = vrot.slane %v1144, 2
      %v1146 = vadd.f32 %v1144, %v1145
      %v1147 = vrot.slane %v1146, 1
      %v1148 = vadd.f32 %v1146, %v1147
      %v1149 = vsel %vm1085, %v1050, 0.0
      %v1150 = vrot.slane %v1149, 4
      %v1151 = vadd.f32 %v1149, %v1150
      %v1152 = vrot.slane %v1151, 2
      %v1153 = vadd.f32 %v1151, %v1152
      %v1154 = vrot.slane %v1153, 1
      %v1155 = vadd.f32 %v1153, %v1154
      %v1156 = vsel %vm1085, %v1049, 0.0
      %v1157 = vrot.slane %v1156, 4
      %v1158 = vadd.f32 %v1156, %v1157
      %v1159 = vrot.slane %v1158, 2
      %v1160 = vadd.f32 %v1158, %v1159
      %v1161 = vrot.slane %v1160, 1
      %v1162 = vadd.f32 %v1160, %v1161
      %v1163 = vsel %vm1085, %v1051, 0.0
      %v1164 = vrot.slane %v1163, 4
      %v1165 = vadd.f32 %v1163, %v1164
      %v1166 = vrot.slane %v1165, 2
      %v1167 = vadd.f32 %v1165, %v1166
      %v1168 = vrot.slane %v1167, 1
      %v1169 = vadd.f32 %v1167, %v1168
      %v1170 = vsel %vm1085, %v1059, 0.0
      %v1171 = vrot.slane %v1170, 4
      %v1172 = vadd.f32 %v1170, %v1171
      %v1173 = vrot.slane %v1172, 2
      %v1174 = vadd.f32 %v1172, %v1173
      %v1175 = vrot.slane %v1174, 1
      %v1176 = vadd.f32 %v1174, %v1175
      %v1177 = vsel %vm1085, %v1067, 0.0
      %v1178 = vrot.slane %v1177, 4
      %v1179 = vadd.f32 %v1177, %v1178
      %v1180 = vrot.slane %v1179, 2
      %v1181 = vadd.f32 %v1179, %v1180
      %v1182 = vrot.slane %v1181, 1
      %v1183 = vadd.f32 %v1181, %v1182
      %v1184 = vsel %vm1085, %v1066, 0.0
      %v1185 = vrot.slane %v1184, 4
      %v1186 = vadd.f32 %v1184, %v1185
      %v1187 = vrot.slane %v1186, 2
      %v1188 = vadd.f32 %v1186, %v1187
      %v1189 = vrot.slane %v1188, 1
      %v1190 = vadd.f32 %v1188, %v1189
      %v1191 = vsel %vm1085, %v1068, 0.0
      %v1192 = vrot.slane %v1191, 4
      %v1193 = vadd.f32 %v1191, %v1192
      %v1194 = vrot.slane %v1193, 2
      %v1195 = vadd.f32 %v1193, %v1194
      %v1196 = vrot.slane %v1195, 1
      %v1197 = vadd.f32 %v1195, %v1196
      %v1198 = vrcp.pop 2.0
      %v1199 = vmul.f32 %v1092, %v1198
      %v1200 = vmul.f32 %v1099, %v1198
      %v1201 = vmul.f32 %v1106, %v1198
      %v1202 = vmul.f32 %v1113, %v1198
      %v1203 = vmul.f32 %v1120, %v1198
      %v1204 = vmul.f32 %v1127, %v1198
      %v1205 = vmul.f32 %v1134, %v1198
      %v1206 = vmul.f32 %v1141, %v1198
      %v1207 = vmul.f32 %v1148, %v1198
      %v1208 = vmul.f32 %v1155, %v1198
      %v1209 = vmul.f32 %v1162, %v1198
      %v1210 = vmul.f32 %v1169, %v1198
      %v1211 = vmul.f32 %v1176, %v1198
      %v1212 = vmul.f32 %v1183, %v1198
      %v1213 = vmul.f32 %v1190, %v1198
      %v1214 = vmul.f32 %v1197, %v1198
      %vm1231 = vcmask 1041409
      %v1232 = vsel %vm1231, %v1200, %v1199
      %vm1233 = vcmask 1042434
      %v1234 = vsel %vm1233, %v1201, %v1232
      %vm1235 = vcmask 1043459
      %v1236 = vsel %vm1235, %v1202, %v1234
      %vm1237 = vcmask 1044484
      %v1238 = vsel %vm1237, %v1203, %v1236
      %vm1239 = vcmask 1045509
      %v1240 = vsel %vm1239, %v1204, %v1238
      %vm1241 = vcmask 1046534
      %v1242 = vsel %vm1241, %v1205, %v1240
      %vm1243 = vcmask 1047559
      %v1244 = vsel %vm1243, %v1206, %v1242
      %v1245 = vsel %vm1231, %v1208, %v1207
      %v1246 = vsel %vm1233, %v1209, %v1245
      %v1247 = vsel %vm1235, %v1210, %v1246
      %v1248 = vsel %vm1237, %v1211, %v1247
      %v1249 = vsel %vm1239, %v1212, %v1248
      %v1250 = vsel %vm1241, %v1213, %v1249
      %v1251 = vsel %vm1243, %v1214, %v1250
      %1254 = vst.msk [vmem:[%s224] sm:$0xff] %vm681, %v1244
      %1255 = vst.msk [vmem:[%s224 + $0x8] sm:$0xff] %vm681, %v1251
      %p1256 = scmp.lt.s32.totalorder %s16, 3
      %s1257 = scalar_select %p1256, %s16, 3
      %s1258 = smul.addr %s1257, 2
      %s1259 = smul.addr %s1258, 8
      %s1260 = scalar_lea.vmem %s5, %s1259
      // Predicated region
      $region41: #{multiscale_encoder.2} parent=39 // pred_check
        %p1261 = pneg %p144
      $region42: #{multiscale_encoder.2} parent=39 // pred_check_branch
        %1263 = sbr.rel (%p1261) target = $region44
      $region43: #{multiscale_encoder.2} parent=39 // pred_region
        _
      $region44: #{multiscale_encoder.2} parent=39 // pred_fallthru
        _
    $region40: #{multiscale_encoder.2} parent=5 // pred_fallthru
      _
    %p1264 = scmp.le.s32.totalorder 2, %s11
    // Predicated region
    $region45: #{multiscale_encoder.2} parent=5 // pred_check
      %p1265 = pneg %p1264
    $region46: #{multiscale_encoder.2} parent=5 // pred_check_branch
      %1267 = sbr.rel (%p1265) target = $region48
    $region47: #{multiscale_encoder.2} parent=5 // pred_region
      %s1268 = ssub.s32 %s11, 2
      // Predicated region
      $region49: #{multiscale_encoder.2} parent=47 // pred_check
        %p1269 = pneg %p150
      $region50: #{multiscale_encoder.2} parent=47 // pred_check_branch
        %1271 = sbr.rel (%p1269) target = $region52
      $region51: #{multiscale_encoder.2} parent=47 // pred_region
        %p1272 = scmp.lt.s32.totalorder %s17, 3
        %s1273 = scalar_select %p1272, %s17, 3
        %s1274 = smul.addr %s1273, 2
        %s1275 = smul.addr %s1274, 8
        %s1276 = scalar_lea.vmem %s5, %s1275
      $region52: #{multiscale_encoder.2} parent=47 // pred_fallthru
        _
    $region48: #{multiscale_encoder.2} parent=5 // pred_fallthru
      _
  $region6: #{multiscale_encoder.2} parent=0 // loop_footer
    %s15 = sadd.s32 1, %s11
  $region7: #{multiscale_encoder.2} parent=0 // loop_footer_branch
    %10 = sbr.rel target = $region3
  $region8: #{multiscale_encoder.2} parent=0 // loop_exit
    _

// kernel: multiscale_encoder.3
$region0: #{multiscale_encoder.3}
  #allocation0 [shape = 'u32[]', space=smem, size = 0x4, offset = 0x4, fixed_abs, tag = 'smem constant byte address 0x4 - core index']
  #allocation1 [shape = 'u32[144,128]{1,0:T(1,128)}', space=vmem, size = 0x12000, scoped, tag = 'internal scratch']
  %s0 = inlined_call_operand.vmem [shape: f32[16,4,32], index: 0, kind: input, shape index: {}]
  %s1 = inlined_call_operand.vmem [shape: f32[32,32], index: 1, kind: input, shape index: {}]
  %s2 = inlined_call_operand.vmem [shape: f32[32,32], index: 2, kind: input, shape index: {}]
  %s3 = inlined_call_operand.vmem [shape: f32[32,32], index: 3, kind: input, shape index: {}]
  %s4 = inlined_call_operand.vmem [shape: f32[3,32], index: 4, kind: input, shape index: {}]
  %s5 = inlined_call_operand.vmem [shape: f32[32,32], index: 5, kind: input, shape index: {}]
  %s6 = inlined_call_operand.vmem [shape: f32[1,32], index: 6, kind: input, shape index: {}]
  %s7 = inlined_call_operand.vmem [shape: f32[32,16], index: 7, kind: input, shape index: {}]
  %s8 = inlined_call_operand.vmem [shape: f32[1,16], index: 8, kind: input, shape index: {}]
  %s9 = inlined_call_operand.vmem [shape: f32[64,16], index: 9, kind: output, shape index: {0}]
  %s10 = inlined_call_operand.vmem [shape: f32[64,4], index: 10, kind: output, shape index: {1}]
  %11 = xla_tuple %s9, %s10
  %s12 = sld [smem:[#allocation0]]
  $region77: #{multiscale_encoder.3} parent=0
    _
  %s14 = ssub.s32 1, %s12
  %s15 = scalar_select 0, %s14, %s12
  loop: start=0, step=1, limit=6
  $region2: #{multiscale_encoder.3} parent=0 // loop_pre_header
    _
  $region3: #{multiscale_encoder.3} parent=0 // loop_header
    %s17 = sphi 0, %s21
    %p18 = scmp.ge.s32.totalorder %s17, 6
    %s27 = sphi 0, %s29
    %s30 = sphi 0, %s27
    %s31 = sphi 0, %s30
    %s47 = sphi 0, %s31
    %s51 = sphi 0, %s51
    %s53 = sphi 0, %s51
    %s54 = sphi 0, %s53
    %s68 = sphi 0, %s54
    %s72 = sphi 0, %s72
    %s74 = sphi 0, %s72
    %s75 = sphi 0, %s74
    %s89 = sphi 0, %s75
    %s93 = sphi 0, %s93
    %s95 = sphi 0, %s93
    %s96 = sphi 0, %s95
    %s110 = sphi 0, %s96
    %s114 = sphi 0, %s114
    %s116 = sphi 0, %s114
    %s117 = sphi 0, %s116
    %s131 = sphi 0, %s117
    %s135 = sphi 0, %s135
    %s137 = sphi 0, %s135
    %s138 = sphi 0, %s137
    %s152 = sphi 0, %s138
    %s156 = sphi 0, %s156
    %s158 = sphi 0, %s156
    %s159 = sphi 0, %s158
    %s173 = sphi 0, %s159
    %s177 = sphi 0, %s177
    %s179 = sphi 0, %s177
    %s180 = sphi 0, %s179
    %s194 = sphi 0, %s180
    %s198 = sphi 0, %s198
    %s200 = sphi 0, %s198
    %s201 = sphi 0, %s200
    %s215 = sphi 0, %s201
    %s221 = sphi 0, %s223
    %s224 = sphi 0, %s221
    %s225 = sphi 0, %s224
    %s241 = sphi 0, %s225
    %s247 = sphi 0, %s249
    %s250 = sphi 0, %s247
    %s251 = sphi 0, %s250
    %s267 = sphi 0, %s251
  $region4: #{multiscale_encoder.3} parent=0 // loop_header_branch
    %20 = sbr.rel (%p18) target = $region8
  $region5: #{multiscale_encoder.3} parent=0 // loop_body
    %s22 = ssub.s32 %s17, 1
    %s23 = ssub.s32 %s17, 2
    %s24 = sadd.s32 %s17, 1
    %s25 = ssub.s32 %s17, %s24
    %p26 = scmp.eq.s32.totalorder %s25, 0
    %s28 = sadd.s32 %s27, 1
    %s29 = scalar_select %p26, %s27, %s28
    %p32 = pneg %p26
    %p33 = scmp.eq.s32.totalorder %s17, 3
    %p34 = por %p32, %p33
    %p35 = scmp.ne.s32.totalorder %s27, %s30
    %p36 = scmp.eq.s32.totalorder %s17, 0
    %p37 = por %p35, %p36
    %p38 = scmp.ne.s32.totalorder %s27, %s30
    %p39 = scmp.eq.s32.totalorder %s22, 3
    %p40 = por %p38, %p39
    %p41 = scmp.ne.s32.totalorder %s30, %s31
    %p42 = scmp.eq.s32.totalorder %s22, 0
    %p43 = por %p41, %p42
    %p44 = scmp.ne.s32.totalorder %s30, %s31
    %p45 = scmp.eq.s32.totalorder %s23, 3
    %p46 = por %p44, %p45
    %p48 = scmp.ne.s32.totalorder %s31, %s47
    %p49 = scmp.eq.s32.totalorder %s23, 0
    %p50 = por %p48, %p49
    %s52 = sadd.s32 %s51, 1
    %p55 = scmp.eq.s32.totalorder %s17, 3
    %p56 = scmp.ne.s32.totalorder %s51, %s53
    %p57 = scmp.eq.s32.totalorder %s17, 0
    %p58 = por %p56, %p57
    %p59 = scmp.ne.s32.totalorder %s51, %s53
    %p60 = scmp.eq.s32.totalorder %s22, 3
    %p61 = por %p59, %p60
    %p62 = scmp.ne.s32.totalorder %s53, %s54
    %p63 = scmp.eq.s32.totalorder %s22, 0
    %p64 = por %p62, %p63
    %p65 = scmp.ne.s32.totalorder %s53, %s54
    %p66 = scmp.eq.s32.totalorder %s23, 3
    %p67 = por %p65, %p66
    %p69 = scmp.ne.s32.totalorder %s54, %s68
    %p70 = scmp.eq.s32.totalorder %s23, 0
    %p71 = por %p69, %p70
    %s73 = sadd.s32 %s72, 1
    %p76 = scmp.eq.s32.totalorder %s17, 3
    %p77 = scmp.ne.s32.totalorder %s72, %s74
    %p78 = scmp.eq.s32.totalorder %s17, 0
    %p79 = por %p77, %p78
    %p80 = scmp.ne.s32.totalorder %s72, %s74
    %p81 = scmp.eq.s32.totalorder %s22, 3
    %p82 = por %p80, %p81
    %p83 = scmp.ne.s32.totalorder %s74, %s75
    %p84 = scmp.eq.s32.totalorder %s22, 0
    %p85 = por %p83, %p84
    %p86 = scmp.ne.s32.totalorder %s74, %s75
    %p87 = scmp.eq.s32.totalorder %s23, 3
    %p88 = por %p86, %p87
    %p90 = scmp.ne.s32.totalorder %s75, %s89
    %p91 = scmp.eq.s32.totalorder %s23, 0
    %p92 = por %p90, %p91
    %s94 = sadd.s32 %s93, 1
    %p97 = scmp.eq.s32.totalorder %s17, 3
    %p98 = scmp.ne.s32.totalorder %s93, %s95
    %p99 = scmp.eq.s32.totalorder %s17, 0
    %p100 = por %p98, %p99
    %p101 = scmp.ne.s32.totalorder %s93, %s95
    %p102 = scmp.eq.s32.totalorder %s22, 3
    %p103 = por %p101, %p102
    %p104 = scmp.ne.s32.totalorder %s95, %s96
    %p105 = scmp.eq.s32.totalorder %s22, 0
    %p106 = por %p104, %p105
    %p107 = scmp.ne.s32.totalorder %s95, %s96
    %p108 = scmp.eq.s32.totalorder %s23, 3
    %p109 = por %p107, %p108
    %p111 = scmp.ne.s32.totalorder %s96, %s110
    %p112 = scmp.eq.s32.totalorder %s23, 0
    %p113 = por %p111, %p112
    %s115 = sadd.s32 %s114, 1
    %p118 = scmp.eq.s32.totalorder %s17, 3
    %p119 = scmp.ne.s32.totalorder %s114, %s116
    %p120 = scmp.eq.s32.totalorder %s17, 0
    %p121 = por %p119, %p120
    %p122 = scmp.ne.s32.totalorder %s114, %s116
    %p123 = scmp.eq.s32.totalorder %s22, 3
    %p124 = por %p122, %p123
    %p125 = scmp.ne.s32.totalorder %s116, %s117
    %p126 = scmp.eq.s32.totalorder %s22, 0
    %p127 = por %p125, %p126
    %p128 = scmp.ne.s32.totalorder %s116, %s117
    %p129 = scmp.eq.s32.totalorder %s23, 3
    %p130 = por %p128, %p129
    %p132 = scmp.ne.s32.totalorder %s117, %s131
    %p133 = scmp.eq.s32.totalorder %s23, 0
    %p134 = por %p132, %p133
    %s136 = sadd.s32 %s135, 1
    %p139 = scmp.eq.s32.totalorder %s17, 3
    %p140 = scmp.ne.s32.totalorder %s135, %s137
    %p141 = scmp.eq.s32.totalorder %s17, 0
    %p142 = por %p140, %p141
    %p143 = scmp.ne.s32.totalorder %s135, %s137
    %p144 = scmp.eq.s32.totalorder %s22, 3
    %p145 = por %p143, %p144
    %p146 = scmp.ne.s32.totalorder %s137, %s138
    %p147 = scmp.eq.s32.totalorder %s22, 0
    %p148 = por %p146, %p147
    %p149 = scmp.ne.s32.totalorder %s137, %s138
    %p150 = scmp.eq.s32.totalorder %s23, 3
    %p151 = por %p149, %p150
    %p153 = scmp.ne.s32.totalorder %s138, %s152
    %p154 = scmp.eq.s32.totalorder %s23, 0
    %p155 = por %p153, %p154
    %s157 = sadd.s32 %s156, 1
    %p160 = scmp.eq.s32.totalorder %s17, 3
    %p161 = scmp.ne.s32.totalorder %s156, %s158
    %p162 = scmp.eq.s32.totalorder %s17, 0
    %p163 = por %p161, %p162
    %p164 = scmp.ne.s32.totalorder %s156, %s158
    %p165 = scmp.eq.s32.totalorder %s22, 3
    %p166 = por %p164, %p165
    %p167 = scmp.ne.s32.totalorder %s158, %s159
    %p168 = scmp.eq.s32.totalorder %s22, 0
    %p169 = por %p167, %p168
    %p170 = scmp.ne.s32.totalorder %s158, %s159
    %p171 = scmp.eq.s32.totalorder %s23, 3
    %p172 = por %p170, %p171
    %p174 = scmp.ne.s32.totalorder %s159, %s173
    %p175 = scmp.eq.s32.totalorder %s23, 0
    %p176 = por %p174, %p175
    %s178 = sadd.s32 %s177, 1
    %p181 = scmp.eq.s32.totalorder %s17, 3
    %p182 = scmp.ne.s32.totalorder %s177, %s179
    %p183 = scmp.eq.s32.totalorder %s17, 0
    %p184 = por %p182, %p183
    %p185 = scmp.ne.s32.totalorder %s177, %s179
    %p186 = scmp.eq.s32.totalorder %s22, 3
    %p187 = por %p185, %p186
    %p188 = scmp.ne.s32.totalorder %s179, %s180
    %p189 = scmp.eq.s32.totalorder %s22, 0
    %p190 = por %p188, %p189
    %p191 = scmp.ne.s32.totalorder %s179, %s180
    %p192 = scmp.eq.s32.totalorder %s23, 3
    %p193 = por %p191, %p192
    %p195 = scmp.ne.s32.totalorder %s180, %s194
    %p196 = scmp.eq.s32.totalorder %s23, 0
    %p197 = por %p195, %p196
    %s199 = sadd.s32 %s198, 1
    %p202 = scmp.eq.s32.totalorder %s17, 3
    %p203 = scmp.ne.s32.totalorder %s198, %s200
    %p204 = scmp.eq.s32.totalorder %s17, 0
    %p205 = por %p203, %p204
    %p206 = scmp.ne.s32.totalorder %s198, %s200
    %p207 = scmp.eq.s32.totalorder %s22, 3
    %p208 = por %p206, %p207
    %p209 = scmp.ne.s32.totalorder %s200, %s201
    %p210 = scmp.eq.s32.totalorder %s22, 0
    %p211 = por %p209, %p210
    %p212 = scmp.ne.s32.totalorder %s200, %s201
    %p213 = scmp.eq.s32.totalorder %s23, 3
    %p214 = por %p212, %p213
    %p216 = scmp.ne.s32.totalorder %s201, %s215
    %p217 = scmp.eq.s32.totalorder %s23, 0
    %p218 = por %p216, %p217
    %s219 = ssub.s32 %s17, %s24
    %p220 = scmp.eq.s32.totalorder %s219, 0
    %s222 = sadd.s32 %s221, 1
    %s223 = scalar_select %p220, %s221, %s222
    %p226 = pneg %p220
    %p227 = scmp.eq.s32.totalorder %s17, 3
    %p228 = por %p226, %p227
    %p229 = scmp.ne.s32.totalorder %s221, %s224
    %p230 = scmp.eq.s32.totalorder %s17, 0
    %p231 = por %p229, %p230
    %p232 = scmp.ne.s32.totalorder %s221, %s224
    %p233 = scmp.eq.s32.totalorder %s22, 3
    %p234 = por %p232, %p233
    %p235 = scmp.ne.s32.totalorder %s224, %s225
    %p236 = scmp.eq.s32.totalorder %s22, 0
    %p237 = por %p235, %p236
    %p238 = scmp.ne.s32.totalorder %s224, %s225
    %p239 = scmp.eq.s32.totalorder %s23, 3
    %p240 = por %p238, %p239
    %p242 = scmp.ne.s32.totalorder %s225, %s241
    %p243 = scmp.eq.s32.totalorder %s23, 0
    %p244 = por %p242, %p243
    %s245 = ssub.s32 %s17, %s24
    %p246 = scmp.eq.s32.totalorder %s245, 0
    %s248 = sadd.s32 %s247, 1
    %s249 = scalar_select %p246, %s247, %s248
    %p252 = pneg %p246
    %p253 = scmp.eq.s32.totalorder %s17, 3
    %p254 = por %p252, %p253
    %p255 = scmp.ne.s32.totalorder %s247, %s250
    %p256 = scmp.eq.s32.totalorder %s17, 0
    %p257 = por %p255, %p256
    %p258 = scmp.ne.s32.totalorder %s247, %s250
    %p259 = scmp.eq.s32.totalorder %s22, 3
    %p260 = por %p258, %p259
    %p261 = scmp.ne.s32.totalorder %s250, %s251
    %p262 = scmp.eq.s32.totalorder %s22, 0
    %p263 = por %p261, %p262
    %p264 = scmp.ne.s32.totalorder %s250, %s251
    %p265 = scmp.eq.s32.totalorder %s23, 3
    %p266 = por %p264, %p265
    %p268 = scmp.ne.s32.totalorder %s251, %s267
    %p269 = scmp.eq.s32.totalorder %s23, 0
    %p270 = por %p268, %p269
    %p271 = scmp.le.s32.totalorder 1, %s17
    %p272 = scmp.lt.s32.totalorder %s17, 5
    %p273 = pnand %p271, %p272
    %p274 = pneg %p273
    // Predicated region
    $region9: #{multiscale_encoder.3} parent=5 // pred_check
      _
    $region10: #{multiscale_encoder.3} parent=5 // pred_check_branch
      %276 = sbr.rel (%p273) target = $region12
    $region11: #{multiscale_encoder.3} parent=5 // pred_region
      %s277 = ssub.s32 %s17, 1
      // Predicated region
      $region13: #{multiscale_encoder.3} parent=11 // pred_check
        %p278 = pneg %p64
      $region14: #{multiscale_encoder.3} parent=11 // pred_check_branch
        %280 = sbr.rel (%p278) target = $region16
      $region15: #{multiscale_encoder.3} parent=11 // pred_region
        _
      $region16: #{multiscale_encoder.3} parent=11 // pred_fallthru
        _
      // Predicated region
      $region17: #{multiscale_encoder.3} parent=11 // pred_check
        %p281 = pneg %p85
      $region18: #{multiscale_encoder.3} parent=11 // pred_check_branch
        %283 = sbr.rel (%p281) target = $region20
      $region19: #{multiscale_encoder.3} parent=11 // pred_region
        _
      $region20: #{multiscale_encoder.3} parent=11 // pred_fallthru
        _
      // Predicated region
      $region21: #{multiscale_encoder.3} parent=11 // pred_check
        %p284 = pneg %p106
      $region22: #{multiscale_encoder.3} parent=11 // pred_check_branch
        %286 = sbr.rel (%p284) target = $region24
      $region23: #{multiscale_encoder.3} parent=11 // pred_region
        _
      $region24: #{multiscale_encoder.3} parent=11 // pred_fallthru
        _
      // Predicated region
      $region25: #{multiscale_encoder.3} parent=11 // pred_check
        %p287 = pneg %p127
      $region26: #{multiscale_encoder.3} parent=11 // pred_check_branch
        %289 = sbr.rel (%p287) target = $region28
      $region27: #{multiscale_encoder.3} parent=11 // pred_region
        _
      $region28: #{multiscale_encoder.3} parent=11 // pred_fallthru
        _
      // Predicated region
      $region29: #{multiscale_encoder.3} parent=11 // pred_check
        %p290 = pneg %p148
      $region30: #{multiscale_encoder.3} parent=11 // pred_check_branch
        %292 = sbr.rel (%p290) target = $region32
      $region31: #{multiscale_encoder.3} parent=11 // pred_region
        _
      $region32: #{multiscale_encoder.3} parent=11 // pred_fallthru
        _
      // Predicated region
      $region33: #{multiscale_encoder.3} parent=11 // pred_check
        %p293 = pneg %p169
      $region34: #{multiscale_encoder.3} parent=11 // pred_check_branch
        %295 = sbr.rel (%p293) target = $region36
      $region35: #{multiscale_encoder.3} parent=11 // pred_region
        _
      $region36: #{multiscale_encoder.3} parent=11 // pred_fallthru
        _
      // Predicated region
      $region37: #{multiscale_encoder.3} parent=11 // pred_check
        %p296 = pneg %p190
      $region38: #{multiscale_encoder.3} parent=11 // pred_check_branch
        %298 = sbr.rel (%p296) target = $region40
      $region39: #{multiscale_encoder.3} parent=11 // pred_region
        _
      $region40: #{multiscale_encoder.3} parent=11 // pred_fallthru
        _
      // Predicated region
      $region41: #{multiscale_encoder.3} parent=11 // pred_check
        %p299 = pneg %p211
      $region42: #{multiscale_encoder.3} parent=11 // pred_check_branch
        %301 = sbr.rel (%p299) target = $region44
      $region43: #{multiscale_encoder.3} parent=11 // pred_region
        _
      $region44: #{multiscale_encoder.3} parent=11 // pred_fallthru
        _
    $region12: #{multiscale_encoder.3} parent=5 // pred_fallthru
      _
    %p302 = scmp.lt.s32.totalorder %s17, 4
    // Predicated region
    $region45: #{multiscale_encoder.3} parent=5 // pred_check
      %p303 = pneg %p302
    $region46: #{multiscale_encoder.3} parent=5 // pred_check_branch
      %305 = sbr.rel (%p303) target = $region48
    $region47: #{multiscale_encoder.3} parent=5 // pred_region
      // Predicated region
      $region49: #{multiscale_encoder.3} parent=47 // pred_check
        %p306 = pneg %p37
      $region50: #{multiscale_encoder.3} parent=47 // pred_check_branch
        %308 = sbr.rel (%p306) target = $region52
      $region51: #{multiscale_encoder.3} parent=47 // pred_region
        %s309 = smul.u32 4, %s17
        %p310 = scmp.lt.s32.totalorder %s309, 15
        %s311 = scalar_select %p310, %s309, 15
        %s312 = smul.addr %s311, 4
        %s313 = scalar_lea.vmem %s0, %s312
        %s314 = smul.u32 4, %s17
      $region52: #{multiscale_encoder.3} parent=47 // pred_fallthru
        _
    $region48: #{multiscale_encoder.3} parent=5 // pred_fallthru
      _
    %p315 = scmp.le.s32.totalorder 1, %s17
    %p316 = scmp.lt.s32.totalorder %s17, 5
    %p317 = pnand %p315, %p316
    %p318 = pneg %p317
    // Predicated region
    $region53: #{multiscale_encoder.3} parent=5 // pred_check
      _
    $region54: #{multiscale_encoder.3} parent=5 // pred_check_branch
      %320 = sbr.rel (%p317) target = $region56
    $region55: #{multiscale_encoder.3} parent=5 // pred_region
      %s321 = ssub.s32 %s17, 1
      %s322 = smul.u32 4, %s22
      %p323 = scmp.lt.s32.totalorder %s322, 15
      %s324 = scalar_select %p323, %s322, 15
      %s325 = smul.addr %s324, 4
      %s326 = scalar_lea.vmem %s0, %s325
      %p327 = pneg %p43
      %p328 = pneg %p40
      %p329 = pneg %p64
      %p330 = pneg %p61
      %p331 = pneg %p85
      %p332 = pneg %p82
      %p333 = pneg %p106
      %p334 = pneg %p103
      %p335 = pneg %p127
      %p336 = pneg %p124
      %p337 = pneg %p148
      %p338 = pneg %p145
      %p339 = pneg %p169
      %p340 = pneg %p166
      %p341 = pneg %p190
      %p342 = pneg %p187
      %p343 = pneg %p211
      %p344 = pneg %p208
      %p345 = pneg %p237
      %p346 = pneg %p234
      %s347 = smul.u32 2, %s22
      %p348 = scmp.lt.s32.totalorder %s347, 7
      %s349 = scalar_select %p348, %s347, 7
      %s350 = smul.addr %s349, 8
      %s351 = scalar_lea.vmem %s9, %s350
      %p352 = pneg %p263
      %p353 = pneg %p260
      %s354 = smul.u32 2, %s22
      %p355 = scmp.lt.s32.totalorder %s354, 7
      %s356 = scalar_select %p355, %s354, 7
      %s357 = smul.addr %s356, 8
      %s358 = scalar_lea.vmem %s10, %s357
      %s359 = smul.u32 4, %s22
      %p360 = scmp.lt.s32.totalorder %s359, 15
      %s361 = scalar_select %p360, %s359, 15
      %s362 = smul.addr %s361, 4
      %s363 = scalar_lea.vmem %s0, %s362
      %s364 = smul.u32 4, %s22
      %s365 = smul.u32 2, %s22
      %p366 = scmp.lt.s32.totalorder %s365, 7
      %s367 = scalar_select %p366, %s365, 7
      %s368 = smul.addr %s367, 8
      %s369 = scalar_lea.vmem %s9, %s368
      %s370 = smul.u32 2, %s22
      %s371 = smul.u32 2, %s22
      %p372 = scmp.lt.s32.totalorder %s371, 7
      %s373 = scalar_select %p372, %s371, 7
      %s374 = smul.addr %s373, 8
      %s375 = scalar_lea.vmem %s10, %s374
      %s376 = smul.u32 2, %s22
      %v377 = vld [vmem:[%s363] sm:$0xf]
      %v378 = vld [vmem:[%s363 + $0x4] sm:$0xf]
      %v379 = vld [vmem:[%s363 + $0x8] sm:$0xf]
      %v380 = vld [vmem:[%s363 + $0xc] sm:$0xf]
      %v381 = vld [vmem:[%s1] sm:$0xff]
      %v382 = vld [vmem:[%s1 + $0x8] sm:$0xff]
      %v383 = vld [vmem:[%s1 + $0x10] sm:$0xff]
      %v384 = vld [vmem:[%s1 + $0x18] sm:$0xff]
      %v385 = vld [vmem:[%s4] sm:$0x1]
      %v386 = vlaneseq
      %v387 = vshrl.u32 %v386, 7
      %v388 = vsub.s32 0, %v387
      %v389 = vrot.slane %v385, %v388
      %v394 = vcombine.low %v377, %v378
      %v395 = vcombine.low %v379, %v380
      %vm396 = vcmask 261120
      %v397 = vsel %vm396, %v394, 0
      %v399 = vsel %vm396, %v395, 0
      %401 = vmatprep.subr.mxu0 0.0
      %402 = vmatpush1.msra.mxu0 0.0
      %403 = vmatprep.subr.mxu0 0.0
      %404 = vmatpush1.msra.mxu0 0.0
      %405 = vmatprep.subr.mxu0 0.0
      %406 = vmatpush1.msra.mxu0 0.0
      %407 = vmatprep.subr.mxu0 0.0
      %408 = vmatpush1.msra.mxu0 0.0
      %409 = vmatprep.subr.mxu0 0.0
      %410 = vmatpush1.msra.mxu0 0.0
      %411 = vmatprep.subr.mxu0 0.0
      %412 = vmatpush1.msra.mxu0 0.0
      %413 = vmatprep.subr.mxu0 0.0
      %414 = vmatpush1.msra.mxu0 0.0
      %415 = vmatprep.subr.mxu0 0.0
      %416 = vmatpush1.msra.mxu0 0.0
      %417 = vmatprep.subr.mxu0 0.0
      %418 = vmatpush1.msra.mxu0 0.0
      %419 = vmatprep.subr.mxu0 0.0
      %420 = vmatpush1.msra.mxu0 0.0
      %421 = vmatprep.subr.mxu0 0.0
      %422 = vmatpush1.msra.mxu0 0.0
      %423 = vmatprep.subr.mxu0 0.0
      %424 = vmatpush1.msra.mxu0 0.0
      %425 = vmatprep.subr.mxu0 0.0
      %426 = vmatpush1.msra.mxu0 %v384
      %427 = vmatprep.subr.mxu0 0.0
      %428 = vmatpush1.msra.mxu0 %v383
      %429 = vmatprep.subr.mxu0 0.0
      %430 = vmatpush1.msra.mxu0 %v382
      %431 = vmatprep.subr.mxu0 0.0
      %432 = vmatpush1.msra.mxu0 %v381
      %433 = vmatprep.subr.mxu0 0.0
      %434 = vmatpush2.msra.mxu0 0.0
      %435 = vmatprep.subr.mxu0 0.0
      %436 = vmatpush2.msra.mxu0 0.0
      %437 = vmatprep.subr.mxu0 0.0
      %438 = vmatpush2.msra.mxu0 0.0
      %439 = vmatprep.subr.mxu0 0.0
      %440 = vmatpush2.msra.mxu0 0.0
      %441 = vmatprep.subr.mxu0 0.0
      %442 = vmatpush2.msra.mxu0 0.0
      %443 = vmatprep.subr.mxu0 0.0
      %444 = vmatpush2.msra.mxu0 0.0
      %445 = vmatprep.subr.mxu0 0.0
      %446 = vmatpush2.msra.mxu0 0.0
      %447 = vmatprep.subr.mxu0 0.0
      %448 = vmatpush2.msra.mxu0 0.0
      %449 = vmatprep.subr.mxu0 0.0
      %450 = vmatpush2.msra.mxu0 0.0
      %451 = vmatprep.subr.mxu0 0.0
      %452 = vmatpush2.msra.mxu0 0.0
      %453 = vmatprep.subr.mxu0 0.0
      %454 = vmatpush2.msra.mxu0 0.0
      %455 = vmatprep.subr.mxu0 0.0
      %456 = vmatpush2.msra.mxu0 0.0
      %457 = vmatprep.subr.mxu0 0.0
      %458 = vmatpush2.msra.mxu0 0.0
      %459 = vmatprep.subr.mxu0 0.0
      %460 = vmatpush2.msra.mxu0 0.0
      %461 = vmatprep.subr.mxu0 0.0
      %462 = vmatpush2.msra.mxu0 0.0
      %463 = vmatprep.subr.mxu0 0.0
      %464 = vmatpush2.msra.mxu0 0.0
      %465 = vmatprep.mubr.f32.mxu0 0.0
      %466 = vmatmul.mubr.f32.gmra.mxu0 %v397
      %v467 = vpop.f32.mrf.mxu0
      %v468 = vadd.f32 %v389, %v467
      %v469 = vpop.f32.mrf.mxu0
      %470 = vmatprep.mubr.f32.mxu0 0.0
      %471 = vmatmul.mubr.f32.gmra.mxu0 %v399
      %v472 = vpop.f32.mrf.mxu0
      %v473 = vadd.f32 %v389, %v472
      %v474 = vpop.f32.mrf.mxu0
      %475 = vdwg.mxu0
      %v476 = vld [vmem:[%s2] sm:$0xff]
      %v477 = vld [vmem:[%s2 + $0x8] sm:$0xff]
      %v478 = vld [vmem:[%s2 + $0x10] sm:$0xff]
      %v479 = vld [vmem:[%s2 + $0x18] sm:$0xff]
      %v480 = vld [vmem:[%s4 + $0x1] sm:$0x1]
      %v481 = vlaneseq
      %v482 = vshrl.u32 %v481, 7
      %v483 = vsub.s32 0, %v482
      %v484 = vrot.slane %v480, %v483
      %485 = vmatprep.subr.mxu0 0.0
      %486 = vmatpush1.msra.mxu0 0.0
      %487 = vmatprep.subr.mxu0 0.0
      %488 = vmatpush1.msra.mxu0 0.0
      %489 = vmatprep.subr.mxu0 0.0
      %490 = vmatpush1.msra.mxu0 0.0
      %491 = vmatprep.subr.mxu0 0.0
      %492 = vmatpush1.msra.mxu0 0.0
      %493 = vmatprep.subr.mxu0 0.0
      %494 = vmatpush1.msra.mxu0 0.0
      %495 = vmatprep.subr.mxu0 0.0
      %496 = vmatpush1.msra.mxu0 0.0
      %497 = vmatprep.subr.mxu0 0.0
      %498 = vmatpush1.msra.mxu0 0.0
      %499 = vmatprep.subr.mxu0 0.0
      %500 = vmatpush1.msra.mxu0 0.0
      %501 = vmatprep.subr.mxu0 0.0
      %502 = vmatpush1.msra.mxu0 0.0
      %503 = vmatprep.subr.mxu0 0.0
      %504 = vmatpush1.msra.mxu0 0.0
      %505 = vmatprep.subr.mxu0 0.0
      %506 = vmatpush1.msra.mxu0 0.0
      %507 = vmatprep.subr.mxu0 0.0
      %508 = vmatpush1.msra.mxu0 0.0
      %509 = vmatprep.subr.mxu0 0.0
      %510 = vmatpush1.msra.mxu0 %v479
      %511 = vmatprep.subr.mxu0 0.0
      %512 = vmatpush1.msra.mxu0 %v478
      %513 = vmatprep.subr.mxu0 0.0
      %514 = vmatpush1.msra.mxu0 %v477
      %515 = vmatprep.subr.mxu0 0.0
      %516 = vmatpush1.msra.mxu0 %v476
      %517 = vmatprep.subr.mxu0 0.0
      %518 = vmatpush2.msra.mxu0 0.0
      %519 = vmatprep.subr.mxu0 0.0
      %520 = vmatpush2.msra.mxu0 0.0
      %521 = vmatprep.subr.mxu0 0.0
      %522 = vmatpush2.msra.mxu0 0.0
      %523 = vmatprep.subr.mxu0 0.0
      %524 = vmatpush2.msra.mxu0 0.0
      %525 = vmatprep.subr.mxu0 0.0
      %526 = vmatpush2.msra.mxu0 0.0
      %527 = vmatprep.subr.mxu0 0.0
      %528 = vmatpush2.msra.mxu0 0.0
      %529 = vmatprep.subr.mxu0 0.0
      %530 = vmatpush2.msra.mxu0 0.0
      %531 = vmatprep.subr.mxu0 0.0
      %532 = vmatpush2.msra.mxu0 0.0
      %533 = vmatprep.subr.mxu0 0.0
      %534 = vmatpush2.msra.mxu0 0.0
      %535 = vmatprep.subr.mxu0 0.0
      %536 = vmatpush2.msra.mxu0 0.0
      %537 = vmatprep.subr.mxu0 0.0
      %538 = vmatpush2.msra.mxu0 0.0
      %539 = vmatprep.subr.mxu0 0.0
      %540 = vmatpush2.msra.mxu0 0.0
      %541 = vmatprep.subr.mxu0 0.0
      %542 = vmatpush2.msra.mxu0 0.0
      %543 = vmatprep.subr.mxu0 0.0
      %544 = vmatpush2.msra.mxu0 0.0
      %545 = vmatprep.subr.mxu0 0.0
      %546 = vmatpush2.msra.mxu0 0.0
      %547 = vmatprep.subr.mxu0 0.0
      %548 = vmatpush2.msra.mxu0 0.0
      %549 = vmatprep.mubr.f32.mxu0 0.0
      %550 = vmatmul.mubr.f32.gmra.mxu0 %v397
      %v551 = vpop.f32.mrf.mxu0
      %v552 = vadd.f32 %v484, %v551
      %v553 = vpop.f32.mrf.mxu0
      %554 = vmatprep.mubr.f32.mxu0 0.0
      %555 = vmatmul.mubr.f32.gmra.mxu0 %v399
      %v556 = vpop.f32.mrf.mxu0
      %v557 = vadd.f32 %v484, %v556
      %v558 = vpop.f32.mrf.mxu0
      %559 = vdwg.mxu0
      %v560 = vld [vmem:[%s3] sm:$0xff]
      %v561 = vld [vmem:[%s3 + $0x8] sm:$0xff]
      %v562 = vld [vmem:[%s3 + $0x10] sm:$0xff]
      %v563 = vld [vmem:[%s3 + $0x18] sm:$0xff]
      %v564 = vld [vmem:[%s4 + $0x2] sm:$0x1]
      %v565 = vlaneseq
      %v566 = vshrl.u32 %v565, 7
      %v567 = vsub.s32 0, %v566
      %v568 = vrot.slane %v564, %v567
      %569 = vmatprep.subr.mxu0 0.0
      %570 = vmatpush1.msra.mxu0 0.0
      %571 = vmatprep.subr.mxu0 0.0
      %572 = vmatpush1.msra.mxu0 0.0
      %573 = vmatprep.subr.mxu0 0.0
      %574 = vmatpush1.msra.mxu0 0.0
      %575 = vmatprep.subr.mxu0 0.0
      %576 = vmatpush1.msra.mxu0 0.0
      %577 = vmatprep.subr.mxu0 0.0
      %578 = vmatpush1.msra.mxu0 0.0
      %579 = vmatprep.subr.mxu0 0.0
      %580 = vmatpush1.msra.mxu0 0.0
      %581 = vmatprep.subr.mxu0 0.0
      %582 = vmatpush1.msra.mxu0 0.0
      %583 = vmatprep.subr.mxu0 0.0
      %584 = vmatpush1.msra.mxu0 0.0
      %585 = vmatprep.subr.mxu0 0.0
      %586 = vmatpush1.msra.mxu0 0.0
      %587 = vmatprep.subr.mxu0 0.0
      %588 = vmatpush1.msra.mxu0 0.0
      %589 = vmatprep.subr.mxu0 0.0
      %590 = vmatpush1.msra.mxu0 0.0
      %591 = vmatprep.subr.mxu0 0.0
      %592 = vmatpush1.msra.mxu0 0.0
      %593 = vmatprep.subr.mxu0 0.0
      %594 = vmatpush1.msra.mxu0 %v563
      %595 = vmatprep.subr.mxu0 0.0
      %596 = vmatpush1.msra.mxu0 %v562
      %597 = vmatprep.subr.mxu0 0.0
      %598 = vmatpush1.msra.mxu0 %v561
      %599 = vmatprep.subr.mxu0 0.0
      %600 = vmatpush1.msra.mxu0 %v560
      %601 = vmatprep.subr.mxu0 0.0
      %602 = vmatpush2.msra.mxu0 0.0
      %603 = vmatprep.subr.mxu0 0.0
      %604 = vmatpush2.msra.mxu0 0.0
      %605 = vmatprep.subr.mxu0 0.0
      %606 = vmatpush2.msra.mxu0 0.0
      %607 = vmatprep.subr.mxu0 0.0
      %608 = vmatpush2.msra.mxu0 0.0
      %609 = vmatprep.subr.mxu0 0.0
      %610 = vmatpush2.msra.mxu0 0.0
      %611 = vmatprep.subr.mxu0 0.0
      %612 = vmatpush2.msra.mxu0 0.0
      %613 = vmatprep.subr.mxu0 0.0
      %614 = vmatpush2.msra.mxu0 0.0
      %615 = vmatprep.subr.mxu0 0.0
      %616 = vmatpush2.msra.mxu0 0.0
      %617 = vmatprep.subr.mxu0 0.0
      %618 = vmatpush2.msra.mxu0 0.0
      %619 = vmatprep.subr.mxu0 0.0
      %620 = vmatpush2.msra.mxu0 0.0
      %621 = vmatprep.subr.mxu0 0.0
      %622 = vmatpush2.msra.mxu0 0.0
      %623 = vmatprep.subr.mxu0 0.0
      %624 = vmatpush2.msra.mxu0 0.0
      %625 = vmatprep.subr.mxu0 0.0
      %626 = vmatpush2.msra.mxu0 0.0
      %627 = vmatprep.subr.mxu0 0.0
      %628 = vmatpush2.msra.mxu0 0.0
      %629 = vmatprep.subr.mxu0 0.0
      %630 = vmatpush2.msra.mxu0 0.0
      %631 = vmatprep.subr.mxu0 0.0
      %632 = vmatpush2.msra.mxu0 0.0
      %633 = vmatprep.mubr.f32.mxu0 0.0
      %634 = vmatmul.mubr.f32.gmra.mxu0 %v397
      %v635 = vpop.f32.mrf.mxu0
      %v636 = vadd.f32 %v568, %v635
      %v637 = vpop.f32.mrf.mxu0
      %638 = vmatprep.mubr.f32.mxu0 0.0
      %639 = vmatmul.mubr.f32.gmra.mxu0 %v399
      %v640 = vpop.f32.mrf.mxu0
      %v641 = vadd.f32 %v568, %v640
      %v642 = vpop.f32.mrf.mxu0
      %643 = vdwg.mxu0
      %v644 = vmul.f32 %v468, 0.35355338
      %v645 = vmul.f32 %v473, 0.35355338
      %v648 = vcombine.high %v644, %v644
      %v649 = vcombine.high %v645, %v645
      %v652 = vcombine.high %v552, %v552
      %v653 = vcombine.high %v557, %v557
      %v656 = vcombine.high %v636, %v636
      %v657 = vcombine.high %v641, %v641
      %vm658 = vcmask 64512
      %v659 = vsel %vm658, %v644, 0
      %v661 = vsel %vm658, %v552, 0
      %663 = vmatprep.subr.mxu0 0.0
      %664 = vmatpush1.xpose.msra.mxu0 0.0
      %665 = vmatprep.subr.mxu0 0.0
      %666 = vmatpush1.xpose.msra.mxu0 0.0
      %667 = vmatprep.subr.mxu0 0.0
      %668 = vmatpush1.xpose.msra.mxu0 0.0
      %669 = vmatprep.subr.mxu0 0.0
      %670 = vmatpush1.xpose.msra.mxu0 0.0
      %671 = vmatprep.subr.mxu0 0.0
      %672 = vmatpush1.xpose.msra.mxu0 0.0
      %673 = vmatprep.subr.mxu0 0.0
      %674 = vmatpush1.xpose.msra.mxu0 0.0
      %675 = vmatprep.subr.mxu0 0.0
      %676 = vmatpush1.xpose.msra.mxu0 0.0
      %677 = vmatprep.subr.mxu0 0.0
      %678 = vmatpush1.xpose.msra.mxu0 0.0
      %679 = vmatprep.subr.mxu0 0.0
      %680 = vmatpush1.xpose.msra.mxu0 0.0
      %681 = vmatprep.subr.mxu0 0.0
      %682 = vmatpush1.xpose.msra.mxu0 0.0
      %683 = vmatprep.subr.mxu0 0.0
      %684 = vmatpush1.xpose.msra.mxu0 0.0
      %685 = vmatprep.subr.mxu0 0.0
      %686 = vmatpush1.xpose.msra.mxu0 0.0
      %687 = vmatprep.subr.mxu0 0.0
      %688 = vmatpush1.xpose.msra.mxu0 0.0
      %689 = vmatprep.subr.mxu0 0.0
      %690 = vmatpush1.xpose.msra.mxu0 0.0
      %691 = vmatprep.subr.mxu0 0.0
      %692 = vmatpush1.xpose.msra.mxu0 0.0
      %693 = vmatprep.subr.mxu0 0.0
      %694 = vmatpush1.xpose.msra.mxu0 %v661
      %695 = vmatprep.subr.mxu0 0.0
      %696 = vmatpush2.xpose.msra.mxu0 0.0
      %697 = vmatprep.subr.mxu0 0.0
      %698 = vmatpush2.xpose.msra.mxu0 0.0
      %699 = vmatprep.subr.mxu0 0.0
      %700 = vmatpush2.xpose.msra.mxu0 0.0
      %701 = vmatprep.subr.mxu0 0.0
      %702 = vmatpush2.xpose.msra.mxu0 0.0
      %703 = vmatprep.subr.mxu0 0.0
      %704 = vmatpush2.xpose.msra.mxu0 0.0
      %705 = vmatprep.subr.mxu0 0.0
      %706 = vmatpush2.xpose.msra.mxu0 0.0
      %707 = vmatprep.subr.mxu0 0.0
      %708 = vmatpush2.xpose.msra.mxu0 0.0
      %709 = vmatprep.subr.mxu0 0.0
      %710 = vmatpush2.xpose.msra.mxu0 0.0
      %711 = vmatprep.subr.mxu0 0.0
      %712 = vmatpush2.xpose.msra.mxu0 0.0
      %713 = vmatprep.subr.mxu0 0.0
      %714 = vmatpush2.xpose.msra.mxu0 0.0
      %715 = vmatprep.subr.mxu0 0.0
      %716 = vmatpush2.xpose.msra.mxu0 0.0
      %717 = vmatprep.subr.mxu0 0.0
      %718 = vmatpush2.xpose.msra.mxu0 0.0
      %719 = vmatprep.subr.mxu0 0.0
      %720 = vmatpush2.xpose.msra.mxu0 0.0
      %721 = vmatprep.subr.mxu0 0.0
      %722 = vmatpush2.xpose.msra.mxu0 0.0
      %723 = vmatprep.subr.mxu0 0.0
      %724 = vmatpush2.xpose.msra.mxu0 0.0
      %725 = vmatprep.subr.mxu0 0.0
      %726 = vmatpush2.xpose.msra.mxu0 0.0
      %727 = vmatprep.mubr.f32.mxu0 0.0
      %728 = vmatmul.mubr.f32.gmra.mxu0 %v659
      %v729 = vpop.f32.mrf.mxu0
      %v730 = vadd.f32 0.0, %v729
      %v731 = vpop.f32.mrf.mxu0
      %732 = vdwg.mxu0
      %v733 = vsel %vm658, %v648, 0
      %v735 = vsel %vm658, %v652, 0
      %737 = vmatprep.subr.mxu0 0.0
      %738 = vmatpush1.xpose.msra.mxu0 0.0
      %739 = vmatprep.subr.mxu0 0.0
      %740 = vmatpush1.xpose.msra.mxu0 0.0
      %741 = vmatprep.subr.mxu0 0.0
      %742 = vmatpush1.xpose.msra.mxu0 0.0
      %743 = vmatprep.subr.mxu0 0.0
      %744 = vmatpush1.xpose.msra.mxu0 0.0
      %745 = vmatprep.subr.mxu0 0.0
      %746 = vmatpush1.xpose.msra.mxu0 0.0
      %747 = vmatprep.subr.mxu0 0.0
      %748 = vmatpush1.xpose.msra.mxu0 0.0
      %749 = vmatprep.subr.mxu0 0.0
      %750 = vmatpush1.xpose.msra.mxu0 0.0
      %751 = vmatprep.subr.mxu0 0.0
      %752 = vmatpush1.xpose.msra.mxu0 0.0
      %753 = vmatprep.subr.mxu0 0.0
      %754 = vmatpush1.xpose.msra.mxu0 0.0
      %755 = vmatprep.subr.mxu0 0.0
      %756 = vmatpush1.xpose.msra.mxu0 0.0
      %757 = vmatprep.subr.mxu0 0.0
      %758 = vmatpush1.xpose.msra.mxu0 0.0
      %759 = vmatprep.subr.mxu0 0.0
      %760 = vmatpush1.xpose.msra.mxu0 0.0
      %761 = vmatprep.subr.mxu0 0.0
      %762 = vmatpush1.xpose.msra.mxu0 0.0
      %763 = vmatprep.subr.mxu0 0.0
      %764 = vmatpush1.xpose.msra.mxu0 0.0
      %765 = vmatprep.subr.mxu0 0.0
      %766 = vmatpush1.xpose.msra.mxu0 0.0
      %767 = vmatprep.subr.mxu0 0.0
      %768 = vmatpush1.xpose.msra.mxu0 %v735
      %769 = vmatprep.subr.mxu0 0.0
      %770 = vmatpush2.xpose.msra.mxu0 0.0
      %771 = vmatprep.subr.mxu0 0.0
      %772 = vmatpush2.xpose.msra.mxu0 0.0
      %773 = vmatprep.subr.mxu0 0.0
      %774 = vmatpush2.xpose.msra.mxu0 0.0
      %775 = vmatprep.subr.mxu0 0.0
      %776 = vmatpush2.xpose.msra.mxu0 0.0
      %777 = vmatprep.subr.mxu0 0.0
      %778 = vmatpush2.xpose.msra.mxu0 0.0
      %779 = vmatprep.subr.mxu0 0.0
      %780 = vmatpush2.xpose.msra.mxu0 0.0
      %781 = vmatprep.subr.mxu0 0.0
      %782 = vmatpush2.xpose.msra.mxu0 0.0
      %783 = vmatprep.subr.mxu0 0.0
      %784 = vmatpush2.xpose.msra.mxu0 0.0
      %785 = vmatprep.subr.mxu0 0.0
      %786 = vmatpush2.xpose.msra.mxu0 0.0
      %787 = vmatprep.subr.mxu0 0.0
      %788 = vmatpush2.xpose.msra.mxu0 0.0
      %789 = vmatprep.subr.mxu0 0.0
      %790 = vmatpush2.xpose.msra.mxu0 0.0
      %791 = vmatprep.subr.mxu0 0.0
      %792 = vmatpush2.xpose.msra.mxu0 0.0
      %793 = vmatprep.subr.mxu0 0.0
      %794 = vmatpush2.xpose.msra.mxu0 0.0
      %795 = vmatprep.subr.mxu0 0.0
      %796 = vmatpush2.xpose.msra.mxu0 0.0
      %797 = vmatprep.subr.mxu0 0.0
      %798 = vmatpush2.xpose.msra.mxu0 0.0
      %799 = vmatprep.subr.mxu0 0.0
      %800 = vmatpush2.xpose.msra.mxu0 0.0
      %801 = vmatprep.mubr.f32.mxu0 0.0
      %802 = vmatmul.mubr.f32.gmra.mxu0 %v733
      %v803 = vpop.f32.mrf.mxu0
      %v804 = vadd.f32 0.0, %v803
      %v805 = vpop.f32.mrf.mxu0
      %806 = vdwg.mxu0
      %v807 = vsel %vm658, %v645, 0
      %v809 = vsel %vm658, %v557, 0
      %811 = vmatprep.subr.mxu0 0.0
      %812 = vmatpush1.xpose.msra.mxu0 0.0
      %813 = vmatprep.subr.mxu0 0.0
      %814 = vmatpush1.xpose.msra.mxu0 0.0
      %815 = vmatprep.subr.mxu0 0.0
      %816 = vmatpush1.xpose.msra.mxu0 0.0
      %817 = vmatprep.subr.mxu0 0.0
      %818 = vmatpush1.xpose.msra.mxu0 0.0
      %819 = vmatprep.subr.mxu0 0.0
      %820 = vmatpush1.xpose.msra.mxu0 0.0
      %821 = vmatprep.subr.mxu0 0.0
      %822 = vmatpush1.xpose.msra.mxu0 0.0
      %823 = vmatprep.subr.mxu0 0.0
      %824 = vmatpush1.xpose.msra.mxu0 0.0
      %825 = vmatprep.subr.mxu0 0.0
      %826 = vmatpush1.xpose.msra.mxu0 0.0
      %827 = vmatprep.subr.mxu0 0.0
      %828 = vmatpush1.xpose.msra.mxu0 0.0
      %829 = vmatprep.subr.mxu0 0.0
      %830 = vmatpush1.xpose.msra.mxu0 0.0
      %831 = vmatprep.subr.mxu0 0.0
      %832 = vmatpush1.xpose.msra.mxu0 0.0
      %833 = vmatprep.subr.mxu0 0.0
      %834 = vmatpush1.xpose.msra.mxu0 0.0
      %835 = vmatprep.subr.mxu0 0.0
      %836 = vmatpush1.xpose.msra.mxu0 0.0
      %837 = vmatprep.subr.mxu0 0.0
      %838 = vmatpush1.xpose.msra.mxu0 0.0
      %839 = vmatprep.subr.mxu0 0.0
      %840 = vmatpush1.xpose.msra.mxu0 0.0
      %841 = vmatprep.subr.mxu0 0.0
      %842 = vmatpush1.xpose.msra.mxu0 %v809
      %843 = vmatprep.subr.mxu0 0.0
      %844 = vmatpush2.xpose.msra.mxu0 0.0
      %845 = vmatprep.subr.mxu0 0.0
      %846 = vmatpush2.xpose.msra.mxu0 0.0
      %847 = vmatprep.subr.mxu0 0.0
      %848 = vmatpush2.xpose.msra.mxu0 0.0
      %849 = vmatprep.subr.mxu0 0.0
      %850 = vmatpush2.xpose.msra.mxu0 0.0
      %851 = vmatprep.subr.mxu0 0.0
      %852 = vmatpush2.xpose.msra.mxu0 0.0
      %853 = vmatprep.subr.mxu0 0.0
      %854 = vmatpush2.xpose.msra.mxu0 0.0
      %855 = vmatprep.subr.mxu0 0.0
      %856 = vmatpush2.xpose.msra.mxu0 0.0
      %857 = vmatprep.subr.mxu0 0.0
      %858 = vmatpush2.xpose.msra.mxu0 0.0
      %859 = vmatprep.subr.mxu0 0.0
      %860 = vmatpush2.xpose.msra.mxu0 0.0
      %861 = vmatprep.subr.mxu0 0.0
      %862 = vmatpush2.xpose.msra.mxu0 0.0
      %863 = vmatprep.subr.mxu0 0.0
      %864 = vmatpush2.xpose.msra.mxu0 0.0
      %865 = vmatprep.subr.mxu0 0.0
      %866 = vmatpush2.xpose.msra.mxu0 0.0
      %867 = vmatprep.subr.mxu0 0.0
      %868 = vmatpush2.xpose.msra.mxu0 0.0
      %869 = vmatprep.subr.mxu0 0.0
      %870 = vmatpush2.xpose.msra.mxu0 0.0
      %871 = vmatprep.subr.mxu0 0.0
      %872 = vmatpush2.xpose.msra.mxu0 0.0
      %873 = vmatprep.subr.mxu0 0.0
      %874 = vmatpush2.xpose.msra.mxu0 0.0
      %875 = vmatprep.mubr.f32.mxu0 0.0
      %876 = vmatmul.mubr.f32.gmra.mxu0 %v807
      %v877 = vpop.f32.mrf.mxu0
      %v878 = vadd.f32 0.0, %v877
      %v879 = vpop.f32.mrf.mxu0
      %880 = vdwg.mxu0
      %v881 = vsel %vm658, %v649, 0
      %v883 = vsel %vm658, %v653, 0
      %885 = vmatprep.subr.mxu0 0.0
      %886 = vmatpush1.xpose.msra.mxu0 0.0
      %887 = vmatprep.subr.mxu0 0.0
      %888 = vmatpush1.xpose.msra.mxu0 0.0
      %889 = vmatprep.subr.mxu0 0.0
      %890 = vmatpush1.xpose.msra.mxu0 0.0
      %891 = vmatprep.subr.mxu0 0.0
      %892 = vmatpush1.xpose.msra.mxu0 0.0
      %893 = vmatprep.subr.mxu0 0.0
      %894 = vmatpush1.xpose.msra.mxu0 0.0
      %895 = vmatprep.subr.mxu0 0.0
      %896 = vmatpush1.xpose.msra.mxu0 0.0
      %897 = vmatprep.subr.mxu0 0.0
      %898 = vmatpush1.xpose.msra.mxu0 0.0
      %899 = vmatprep.subr.mxu0 0.0
      %900 = vmatpush1.xpose.msra.mxu0 0.0
      %901 = vmatprep.subr.mxu0 0.0
      %902 = vmatpush1.xpose.msra.mxu0 0.0
      %903 = vmatprep.subr.mxu0 0.0
      %904 = vmatpush1.xpose.msra.mxu0 0.0
      %905 = vmatprep.subr.mxu0 0.0
      %906 = vmatpush1.xpose.msra.mxu0 0.0
      %907 = vmatprep.subr.mxu0 0.0
      %908 = vmatpush1.xpose.msra.mxu0 0.0
      %909 = vmatprep.subr.mxu0 0.0
      %910 = vmatpush1.xpose.msra.mxu0 0.0
      %911 = vmatprep.subr.mxu0 0.0
      %912 = vmatpush1.xpose.msra.mxu0 0.0
      %913 = vmatprep.subr.mxu0 0.0
      %914 = vmatpush1.xpose.msra.mxu0 0.0
      %915 = vmatprep.subr.mxu0 0.0
      %916 = vmatpush1.xpose.msra.mxu0 %v883
      %917 = vmatprep.subr.mxu0 0.0
      %918 = vmatpush2.xpose.msra.mxu0 0.0
      %919 = vmatprep.subr.mxu0 0.0
      %920 = vmatpush2.xpose.msra.mxu0 0.0
      %921 = vmatprep.subr.mxu0 0.0
      %922 = vmatpush2.xpose.msra.mxu0 0.0
      %923 = vmatprep.subr.mxu0 0.0
      %924 = vmatpush2.xpose.msra.mxu0 0.0
      %925 = vmatprep.subr.mxu0 0.0
      %926 = vmatpush2.xpose.msra.mxu0 0.0
      %927 = vmatprep.subr.mxu0 0.0
      %928 = vmatpush2.xpose.msra.mxu0 0.0
      %929 = vmatprep.subr.mxu0 0.0
      %930 = vmatpush2.xpose.msra.mxu0 0.0
      %931 = vmatprep.subr.mxu0 0.0
      %932 = vmatpush2.xpose.msra.mxu0 0.0
      %933 = vmatprep.subr.mxu0 0.0
      %934 = vmatpush2.xpose.msra.mxu0 0.0
      %935 = vmatprep.subr.mxu0 0.0
      %936 = vmatpush2.xpose.msra.mxu0 0.0
      %937 = vmatprep.subr.mxu0 0.0
      %938 = vmatpush2.xpose.msra.mxu0 0.0
      %939 = vmatprep.subr.mxu0 0.0
      %940 = vmatpush2.xpose.msra.mxu0 0.0
      %941 = vmatprep.subr.mxu0 0.0
      %942 = vmatpush2.xpose.msra.mxu0 0.0
      %943 = vmatprep.subr.mxu0 0.0
      %944 = vmatpush2.xpose.msra.mxu0 0.0
      %945 = vmatprep.subr.mxu0 0.0
      %946 = vmatpush2.xpose.msra.mxu0 0.0
      %947 = vmatprep.subr.mxu0 0.0
      %948 = vmatpush2.xpose.msra.mxu0 0.0
      %949 = vmatprep.mubr.f32.mxu0 0.0
      %950 = vmatmul.mubr.f32.gmra.mxu0 %v881
      %v951 = vpop.f32.mrf.mxu0
      %v952 = vadd.f32 0.0, %v951
      %v953 = vpop.f32.mrf.mxu0
      %954 = vdwg.mxu0
      %955 = vrot.lane.b32.xlu0 %v644, 120
      %v956 = vpop.permute.xlu0 %955
      %957 = vrot.lane.b32.xlu0 %v552, 120
      %v958 = vpop.permute.xlu0 %957
      %v959 = vsel %vm658, %v956, 0
      %v961 = vsel %vm658, %v958, 0
      %963 = vmatprep.subr.mxu0 0.0
      %964 = vmatpush1.xpose.msra.mxu0 0.0
      %965 = vmatprep.subr.mxu0 0.0
      %966 = vmatpush1.xpose.msra.mxu0 0.0
      %967 = vmatprep.subr.mxu0 0.0
      %968 = vmatpush1.xpose.msra.mxu0 0.0
      %969 = vmatprep.subr.mxu0 0.0
      %970 = vmatpush1.xpose.msra.mxu0 0.0
      %971 = vmatprep.subr.mxu0 0.0
      %972 = vmatpush1.xpose.msra.mxu0 0.0
      %973 = vmatprep.subr.mxu0 0.0
      %974 = vmatpush1.xpose.msra.mxu0 0.0
      %975 = vmatprep.subr.mxu0 0.0
      %976 = vmatpush1.xpose.msra.mxu0 0.0
      %977 = vmatprep.subr.mxu0 0.0
      %978 = vmatpush1.xpose.msra.mxu0 0.0
      %979 = vmatprep.subr.mxu0 0.0
      %980 = vmatpush1.xpose.msra.mxu0 0.0
      %981 = vmatprep.subr.mxu0 0.0
      %982 = vmatpush1.xpose.msra.mxu0 0.0
      %983 = vmatprep.subr.mxu0 0.0
      %984 = vmatpush1.xpose.msra.mxu0 0.0
      %985 = vmatprep.subr.mxu0 0.0
      %986 = vmatpush1.xpose.msra.mxu0 0.0
      %987 = vmatprep.subr.mxu0 0.0
      %988 = vmatpush1.xpose.msra.mxu0 0.0
      %989 = vmatprep.subr.mxu0 0.0
      %990 = vmatpush1.xpose.msra.mxu0 0.0
      %991 = vmatprep.subr.mxu0 0.0
      %992 = vmatpush1.xpose.msra.mxu0 0.0
      %993 = vmatprep.subr.mxu0 0.0
      %994 = vmatpush1.xpose.msra.mxu0 %v961
      %995 = vmatprep.subr.mxu0 0.0
      %996 = vmatpush2.xpose.msra.mxu0 0.0
      %997 = vmatprep.subr.mxu0 0.0
      %998 = vmatpush2.xpose.msra.mxu0 0.0
      %999 = vmatprep.subr.mxu0 0.0
      %1000 = vmatpush2.xpose.msra.mxu0 0.0
      %1001 = vmatprep.subr.mxu0 0.0
      %1002 = vmatpush2.xpose.msra.mxu0 0.0
      %1003 = vmatprep.subr.mxu0 0.0
      %1004 = vmatpush2.xpose.msra.mxu0 0.0
      %1005 = vmatprep.subr.mxu0 0.0
      %1006 = vmatpush2.xpose.msra.mxu0 0.0
      %1007 = vmatprep.subr.mxu0 0.0
      %1008 = vmatpush2.xpose.msra.mxu0 0.0
      %1009 = vmatprep.subr.mxu0 0.0
      %1010 = vmatpush2.xpose.msra.mxu0 0.0
      %1011 = vmatprep.subr.mxu0 0.0
      %1012 = vmatpush2.xpose.msra.mxu0 0.0
      %1013 = vmatprep.subr.mxu0 0.0
      %1014 = vmatpush2.xpose.msra.mxu0 0.0
      %1015 = vmatprep.subr.mxu0 0.0
      %1016 = vmatpush2.xpose.msra.mxu0 0.0
      %1017 = vmatprep.subr.mxu0 0.0
      %1018 = vmatpush2.xpose.msra.mxu0 0.0
      %1019 = vmatprep.subr.mxu0 0.0
      %1020 = vmatpush2.xpose.msra.mxu0 0.0
      %1021 = vmatprep.subr.mxu0 0.0
      %1022 = vmatpush2.xpose.msra.mxu0 0.0
      %1023 = vmatprep.subr.mxu0 0.0
      %1024 = vmatpush2.xpose.msra.mxu0 0.0
      %1025 = vmatprep.subr.mxu0 0.0
      %1026 = vmatpush2.xpose.msra.mxu0 0.0
      %1027 = vmatprep.mubr.f32.mxu0 0.0
      %1028 = vmatmul.mubr.f32.gmra.mxu0 %v959
      %v1029 = vpop.f32.mrf.mxu0
      %v1030 = vadd.f32 0.0, %v1029
      %v1031 = vpop.f32.mrf.mxu0
      %1032 = vdwg.mxu0
      %1033 = vrot.lane.b32.xlu0 %v648, 120
      %v1034 = vpop.permute.xlu0 %1033
      %1035 = vrot.lane.b32.xlu0 %v652, 120
      %v1036 = vpop.permute.xlu0 %1035
      %v1037 = vsel %vm658, %v1034, 0
      %v1039 = vsel %vm658, %v1036, 0
      %1041 = vmatprep.subr.mxu0 0.0
      %1042 = vmatpush1.xpose.msra.mxu0 0.0
      %1043 = vmatprep.subr.mxu0 0.0
      %1044 = vmatpush1.xpose.msra.mxu0 0.0
      %1045 = vmatprep.subr.mxu0 0.0
      %1046 = vmatpush1.xpose.msra.mxu0 0.0
      %1047 = vmatprep.subr.mxu0 0.0
      %1048 = vmatpush1.xpose.msra.mxu0 0.0
      %1049 = vmatprep.subr.mxu0 0.0
      %1050 = vmatpush1.xpose.msra.mxu0 0.0
      %1051 = vmatprep.subr.mxu0 0.0
      %1052 = vmatpush1.xpose.msra.mxu0 0.0
      %1053 = vmatprep.subr.mxu0 0.0
      %1054 = vmatpush1.xpose.msra.mxu0 0.0
      %1055 = vmatprep.subr.mxu0 0.0
      %1056 = vmatpush1.xpose.msra.mxu0 0.0
      %1057 = vmatprep.subr.mxu0 0.0
      %1058 = vmatpush1.xpose.msra.mxu0 0.0
      %1059 = vmatprep.subr.mxu0 0.0
      %1060 = vmatpush1.xpose.msra.mxu0 0.0
      %1061 = vmatprep.subr.mxu0 0.0
      %1062 = vmatpush1.xpose.msra.mxu0 0.0
      %1063 = vmatprep.subr.mxu0 0.0
      %1064 = vmatpush1.xpose.msra.mxu0 0.0
      %1065 = vmatprep.subr.mxu0 0.0
      %1066 = vmatpush1.xpose.msra.mxu0 0.0
      %1067 = vmatprep.subr.mxu0 0.0
      %1068 = vmatpush1.xpose.msra.mxu0 0.0
      %1069 = vmatprep.subr.mxu0 0.0
      %1070 = vmatpush1.xpose.msra.mxu0 0.0
      %1071 = vmatprep.subr.mxu0 0.0
      %1072 = vmatpush1.xpose.msra.mxu0 %v1039
      %1073 = vmatprep.subr.mxu0 0.0
      %1074 = vmatpush2.xpose.msra.mxu0 0.0
      %1075 = vmatprep.subr.mxu0 0.0
      %1076 = vmatpush2.xpose.msra.mxu0 0.0
      %1077 = vmatprep.subr.mxu0 0.0
      %1078 = vmatpush2.xpose.msra.mxu0 0.0
      %1079 = vmatprep.subr.mxu0 0.0
      %1080 = vmatpush2.xpose.msra.mxu0 0.0
      %1081 = vmatprep.subr.mxu0 0.0
      %1082 = vmatpush2.xpose.msra.mxu0 0.0
      %1083 = vmatprep.subr.mxu0 0.0
      %1084 = vmatpush2.xpose.msra.mxu0 0.0
      %1085 = vmatprep.subr.mxu0 0.0
      %1086 = vmatpush2.xpose.msra.mxu0 0.0
      %1087 = vmatprep.subr.mxu0 0.0
      %1088 = vmatpush2.xpose.msra.mxu0 0.0
      %1089 = vmatprep.subr.mxu0 0.0
      %1090 = vmatpush2.xpose.msra.mxu0 0.0
      %1091 = vmatprep.subr.mxu0 0.0
      %1092 = vmatpush2.xpose.msra.mxu0 0.0
      %1093 = vmatprep.subr.mxu0 0.0
      %1094 = vmatpush2.xpose.msra.mxu0 0.0
      %1095 = vmatprep.subr.mxu0 0.0
      %1096 = vmatpush2.xpose.msra.mxu0 0.0
      %1097 = vmatprep.subr.mxu0 0.0
      %1098 = vmatpush2.xpose.msra.mxu0 0.0
      %1099 = vmatprep.subr.mxu0 0.0
      %1100 = vmatpush2.xpose.msra.mxu0 0.0
      %1101 = vmatprep.subr.mxu0 0.0
      %1102 = vmatpush2.xpose.msra.mxu0 0.0
      %1103 = vmatprep.subr.mxu0 0.0
      %1104 = vmatpush2.xpose.msra.mxu0 0.0
      %1105 = vmatprep.mubr.f32.mxu0 0.0
      %1106 = vmatmul.mubr.f32.gmra.mxu0 %v1037
      %v1107 = vpop.f32.mrf.mxu0
      %v1108 = vadd.f32 0.0, %v1107
      %v1109 = vpop.f32.mrf.mxu0
      %1110 = vdwg.mxu0
      %1111 = vrot.lane.b32.xlu0 %v645, 120
      %v1112 = vpop.permute.xlu0 %1111
      %1113 = vrot.lane.b32.xlu0 %v557, 120
      %v1114 = vpop.permute.xlu0 %1113
      %v1115 = vsel %vm658, %v1112, 0
      %v1117 = vsel %vm658, %v1114, 0
      %1119 = vmatprep.subr.mxu0 0.0
      %1120 = vmatpush1.xpose.msra.mxu0 0.0
      %1121 = vmatprep.subr.mxu0 0.0
      %1122 = vmatpush1.xpose.msra.mxu0 0.0
      %1123 = vmatprep.subr.mxu0 0.0
      %1124 = vmatpush1.xpose.msra.mxu0 0.0
      %1125 = vmatprep.subr.mxu0 0.0
      %1126 = vmatpush1.xpose.msra.mxu0 0.0
      %1127 = vmatprep.subr.mxu0 0.0
      %1128 = vmatpush1.xpose.msra.mxu0 0.0
      %1129 = vmatprep.subr.mxu0 0.0
      %1130 = vmatpush1.xpose.msra.mxu0 0.0
      %1131 = vmatprep.subr.mxu0 0.0
      %1132 = vmatpush1.xpose.msra.mxu0 0.0
      %1133 = vmatprep.subr.mxu0 0.0
      %1134 = vmatpush1.xpose.msra.mxu0 0.0
      %1135 = vmatprep.subr.mxu0 0.0
      %1136 = vmatpush1.xpose.msra.mxu0 0.0
      %1137 = vmatprep.subr.mxu0 0.0
      %1138 = vmatpush1.xpose.msra.mxu0 0.0
      %1139 = vmatprep.subr.mxu0 0.0
      %1140 = vmatpush1.xpose.msra.mxu0 0.0
      %1141 = vmatprep.subr.mxu0 0.0
      %1142 = vmatpush1.xpose.msra.mxu0 0.0
      %1143 = vmatprep.subr.mxu0 0.0
      %1144 = vmatpush1.xpose.msra.mxu0 0.0
      %1145 = vmatprep.subr.mxu0 0.0
      %1146 = vmatpush1.xpose.msra.mxu0 0.0
      %1147 = vmatprep.subr.mxu0 0.0
      %1148 = vmatpush1.xpose.msra.mxu0 0.0
      %1149 = vmatprep.subr.mxu0 0.0
      %1150 = vmatpush1.xpose.msra.mxu0 %v1117
      %1151 = vmatprep.subr.mxu0 0.0
      %1152 = vmatpush2.xpose.msra.mxu0 0.0
      %1153 = vmatprep.subr.mxu0 0.0
      %1154 = vmatpush2.xpose.msra.mxu0 0.0
      %1155 = vmatprep.subr.mxu0 0.0
      %1156 = vmatpush2.xpose.msra.mxu0 0.0
      %1157 = vmatprep.subr.mxu0 0.0
      %1158 = vmatpush2.xpose.msra.mxu0 0.0
      %1159 = vmatprep.subr.mxu0 0.0
      %1160 = vmatpush2.xpose.msra.mxu0 0.0
      %1161 = vmatprep.subr.mxu0 0.0
      %1162 = vmatpush2.xpose.msra.mxu0 0.0
      %1163 = vmatprep.subr.mxu0 0.0
      %1164 = vmatpush2.xpose.msra.mxu0 0.0
      %1165 = vmatprep.subr.mxu0 0.0
      %1166 = vmatpush2.xpose.msra.mxu0 0.0
      %1167 = vmatprep.subr.mxu0 0.0
      %1168 = vmatpush2.xpose.msra.mxu0 0.0
      %1169 = vmatprep.subr.mxu0 0.0
      %1170 = vmatpush2.xpose.msra.mxu0 0.0
      %1171 = vmatprep.subr.mxu0 0.0
      %1172 = vmatpush2.xpose.msra.mxu0 0.0
      %1173 = vmatprep.subr.mxu0 0.0
      %1174 = vmatpush2.xpose.msra.mxu0 0.0
      %1175 = vmatprep.subr.mxu0 0.0
      %1176 = vmatpush2.xpose.msra.mxu0 0.0
      %1177 = vmatprep.subr.mxu0 0.0
      %1178 = vmatpush2.xpose.msra.mxu0 0.0
      %1179 = vmatprep.subr.mxu0 0.0
      %1180 = vmatpush2.xpose.msra.mxu0 0.0
      %1181 = vmatprep.subr.mxu0 0.0
      %1182 = vmatpush2.xpose.msra.mxu0 0.0
      %1183 = vmatprep.mubr.f32.mxu0 0.0
      %1184 = vmatmul.mubr.f32.gmra.mxu0 %v1115
      %v1185 = vpop.f32.mrf.mxu0
      %v1186 = vadd.f32 0.0, %v1185
      %v1187 = vpop.f32.mrf.mxu0
      %1188 = vdwg.mxu0
      %1189 = vrot.lane.b32.xlu0 %v649, 120
      %v1190 = vpop.permute.xlu0 %1189
      %1191 = vrot.lane.b32.xlu0 %v653, 120
      %v1192 = vpop.permute.xlu0 %1191
      %v1193 = vsel %vm658, %v1190, 0
      %v1195 = vsel %vm658, %v1192, 0
      %1197 = vmatprep.subr.mxu0 0.0
      %1198 = vmatpush1.xpose.msra.mxu0 0.0
      %1199 = vmatprep.subr.mxu0 0.0
      %1200 = vmatpush1.xpose.msra.mxu0 0.0
      %1201 = vmatprep.subr.mxu0 0.0
      %1202 = vmatpush1.xpose.msra.mxu0 0.0
      %1203 = vmatprep.subr.mxu0 0.0
      %1204 = vmatpush1.xpose.msra.mxu0 0.0
      %1205 = vmatprep.subr.mxu0 0.0
      %1206 = vmatpush1.xpose.msra.mxu0 0.0
      %1207 = vmatprep.subr.mxu0 0.0
      %1208 = vmatpush1.xpose.msra.mxu0 0.0
      %1209 = vmatprep.subr.mxu0 0.0
      %1210 = vmatpush1.xpose.msra.mxu0 0.0
      %1211 = vmatprep.subr.mxu0 0.0
      %1212 = vmatpush1.xpose.msra.mxu0 0.0
      %1213 = vmatprep.subr.mxu0 0.0
      %1214 = vmatpush1.xpose.msra.mxu0 0.0
      %1215 = vmatprep.subr.mxu0 0.0
      %1216 = vmatpush1.xpose.msra.mxu0 0.0
      %1217 = vmatprep.subr.mxu0 0.0
      %1218 = vmatpush1.xpose.msra.mxu0 0.0
      %1219 = vmatprep.subr.mxu0 0.0
      %1220 = vmatpush1.xpose.msra.mxu0 0.0
      %1221 = vmatprep.subr.mxu0 0.0
      %1222 = vmatpush1.xpose.msra.mxu0 0.0
      %1223 = vmatprep.subr.mxu0 0.0
      %1224 = vmatpush1.xpose.msra.mxu0 0.0
      %1225 = vmatprep.subr.mxu0 0.0
      %1226 = vmatpush1.xpose.msra.mxu0 0.0
      %1227 = vmatprep.subr.mxu0 0.0
      %1228 = vmatpush1.xpose.msra.mxu0 %v1195
      %1229 = vmatprep.subr.mxu0 0.0
      %1230 = vmatpush2.xpose.msra.mxu0 0.0
      %1231 = vmatprep.subr.mxu0 0.0
      %1232 = vmatpush2.xpose.msra.mxu0 0.0
      %1233 = vmatprep.subr.mxu0 0.0
      %1234 = vmatpush2.xpose.msra.mxu0 0.0
      %1235 = vmatprep.subr.mxu0 0.0
      %1236 = vmatpush2.xpose.msra.mxu0 0.0
      %1237 = vmatprep.subr.mxu0 0.0
      %1238 = vmatpush2.xpose.msra.mxu0 0.0
      %1239 = vmatprep.subr.mxu0 0.0
      %1240 = vmatpush2.xpose.msra.mxu0 0.0
      %1241 = vmatprep.subr.mxu0 0.0
      %1242 = vmatpush2.xpose.msra.mxu0 0.0
      %1243 = vmatprep.subr.mxu0 0.0
      %1244 = vmatpush2.xpose.msra.mxu0 0.0
      %1245 = vmatprep.subr.mxu0 0.0
      %1246 = vmatpush2.xpose.msra.mxu0 0.0
      %1247 = vmatprep.subr.mxu0 0.0
      %1248 = vmatpush2.xpose.msra.mxu0 0.0
      %1249 = vmatprep.subr.mxu0 0.0
      %1250 = vmatpush2.xpose.msra.mxu0 0.0
      %1251 = vmatprep.subr.mxu0 0.0
      %1252 = vmatpush2.xpose.msra.mxu0 0.0
      %1253 = vmatprep.subr.mxu0 0.0
      %1254 = vmatpush2.xpose.msra.mxu0 0.0
      %1255 = vmatprep.subr.mxu0 0.0
      %1256 = vmatpush2.xpose.msra.mxu0 0.0
      %1257 = vmatprep.subr.mxu0 0.0
      %1258 = vmatpush2.xpose.msra.mxu0 0.0
      %1259 = vmatprep.subr.mxu0 0.0
      %1260 = vmatpush2.xpose.msra.mxu0 0.0
      %1261 = vmatprep.mubr.f32.mxu0 0.0
      %1262 = vmatmul.mubr.f32.gmra.mxu0 %v1193
      %v1263 = vpop.f32.mrf.mxu0
      %v1264 = vadd.f32 0.0, %v1263
      %v1265 = vpop.f32.mrf.mxu0
      %1266 = vdwg.mxu0
      %1267 = vrot.lane.b32.xlu0 %v644, 112
      %v1268 = vpop.permute.xlu0 %1267
      %1269 = vrot.lane.b32.xlu0 %v552, 112
      %v1270 = vpop.permute.xlu0 %1269
      %v1271 = vsel %vm658, %v1268, 0
      %v1273 = vsel %vm658, %v1270, 0
      %1275 = vmatprep.subr.mxu0 0.0
      %1276 = vmatpush1.xpose.msra.mxu0 0.0
      %1277 = vmatprep.subr.mxu0 0.0
      %1278 = vmatpush1.xpose.msra.mxu0 0.0
      %1279 = vmatprep.subr.mxu0 0.0
      %1280 = vmatpush1.xpose.msra.mxu0 0.0
      %1281 = vmatprep.subr.mxu0 0.0
      %1282 = vmatpush1.xpose.msra.mxu0 0.0
      %1283 = vmatprep.subr.mxu0 0.0
      %1284 = vmatpush1.xpose.msra.mxu0 0.0
      %1285 = vmatprep.subr.mxu0 0.0
      %1286 = vmatpush1.xpose.msra.mxu0 0.0
      %1287 = vmatprep.subr.mxu0 0.0
      %1288 = vmatpush1.xpose.msra.mxu0 0.0
      %1289 = vmatprep.subr.mxu0 0.0
      %1290 = vmatpush1.xpose.msra.mxu0 0.0
      %1291 = vmatprep.subr.mxu0 0.0
      %1292 = vmatpush1.xpose.msra.mxu0 0.0
      %1293 = vmatprep.subr.mxu0 0.0
      %1294 = vmatpush1.xpose.msra.mxu0 0.0
      %1295 = vmatprep.subr.mxu0 0.0
      %1296 = vmatpush1.xpose.msra.mxu0 0.0
      %1297 = vmatprep.subr.mxu0 0.0
      %1298 = vmatpush1.xpose.msra.mxu0 0.0
      %1299 = vmatprep.subr.mxu0 0.0
      %1300 = vmatpush1.xpose.msra.mxu0 0.0
      %1301 = vmatprep.subr.mxu0 0.0
      %1302 = vmatpush1.xpose.msra.mxu0 0.0
      %1303 = vmatprep.subr.mxu0 0.0
      %1304 = vmatpush1.xpose.msra.mxu0 0.0
      %1305 = vmatprep.subr.mxu0 0.0
      %1306 = vmatpush1.xpose.msra.mxu0 %v1273
      %1307 = vmatprep.subr.mxu0 0.0
      %1308 = vmatpush2.xpose.msra.mxu0 0.0
      %1309 = vmatprep.subr.mxu0 0.0
      %1310 = vmatpush2.xpose.msra.mxu0 0.0
      %1311 = vmatprep.subr.mxu0 0.0
      %1312 = vmatpush2.xpose.msra.mxu0 0.0
      %1313 = vmatprep.subr.mxu0 0.0
      %1314 = vmatpush2.xpose.msra.mxu0 0.0
      %1315 = vmatprep.subr.mxu0 0.0
      %1316 = vmatpush2.xpose.msra.mxu0 0.0
      %1317 = vmatprep.subr.mxu0 0.0
      %1318 = vmatpush2.xpose.msra.mxu0 0.0
      %1319 = vmatprep.subr.mxu0 0.0
      %1320 = vmatpush2.xpose.msra.mxu0 0.0
      %1321 = vmatprep.subr.mxu0 0.0
      %1322 = vmatpush2.xpose.msra.mxu0 0.0
      %1323 = vmatprep.subr.mxu0 0.0
      %1324 = vmatpush2.xpose.msra.mxu0 0.0
      %1325 = vmatprep.subr.mxu0 0.0
      %1326 = vmatpush2.xpose.msra.mxu0 0.0
      %1327 = vmatprep.subr.mxu0 0.0
      %1328 = vmatpush2.xpose.msra.mxu0 0.0
      %1329 = vmatprep.subr.mxu0 0.0
      %1330 = vmatpush2.xpose.msra.mxu0 0.0
      %1331 = vmatprep.subr.mxu0 0.0
      %1332 = vmatpush2.xpose.msra.mxu0 0.0
      %1333 = vmatprep.subr.mxu0 0.0
      %1334 = vmatpush2.xpose.msra.mxu0 0.0
      %1335 = vmatprep.subr.mxu0 0.0
      %1336 = vmatpush2.xpose.msra.mxu0 0.0
      %1337 = vmatprep.subr.mxu0 0.0
      %1338 = vmatpush2.xpose.msra.mxu0 0.0
      %1339 = vmatprep.mubr.f32.mxu0 0.0
      %1340 = vmatmul.mubr.f32.gmra.mxu0 %v1271
      %v1341 = vpop.f32.mrf.mxu0
      %v1342 = vadd.f32 0.0, %v1341
      %v1343 = vpop.f32.mrf.mxu0
      %1344 = vdwg.mxu0
      %1345 = vrot.lane.b32.xlu0 %v648, 112
      %v1346 = vpop.permute.xlu0 %1345
      %1347 = vrot.lane.b32.xlu0 %v652, 112
      %v1348 = vpop.permute.xlu0 %1347
      %v1349 = vsel %vm658, %v1346, 0
      %v1351 = vsel %vm658, %v1348, 0
      %1353 = vmatprep.subr.mxu0 0.0
      %1354 = vmatpush1.xpose.msra.mxu0 0.0
      %1355 = vmatprep.subr.mxu0 0.0
      %1356 = vmatpush1.xpose.msra.mxu0 0.0
      %1357 = vmatprep.subr.mxu0 0.0
      %1358 = vmatpush1.xpose.msra.mxu0 0.0
      %1359 = vmatprep.subr.mxu0 0.0
      %1360 = vmatpush1.xpose.msra.mxu0 0.0
      %1361 = vmatprep.subr.mxu0 0.0
      %1362 = vmatpush1.xpose.msra.mxu0 0.0
      %1363 = vmatprep.subr.mxu0 0.0
      %1364 = vmatpush1.xpose.msra.mxu0 0.0
      %1365 = vmatprep.subr.mxu0 0.0
      %1366 = vmatpush1.xpose.msra.mxu0 0.0
      %1367 = vmatprep.subr.mxu0 0.0
      %1368 = vmatpush1.xpose.msra.mxu0 0.0
      %1369 = vmatprep.subr.mxu0 0.0
      %1370 = vmatpush1.xpose.msra.mxu0 0.0
      %1371 = vmatprep.subr.mxu0 0.0
      %1372 = vmatpush1.xpose.msra.mxu0 0.0
      %1373 = vmatprep.subr.mxu0 0.0
      %1374 = vmatpush1.xpose.msra.mxu0 0.0
      %1375 = vmatprep.subr.mxu0 0.0
      %1376 = vmatpush1.xpose.msra.mxu0 0.0
      %1377 = vmatprep.subr.mxu0 0.0
      %1378 = vmatpush1.xpose.msra.mxu0 0.0
      %1379 = vmatprep.subr.mxu0 0.0
      %1380 = vmatpush1.xpose.msra.mxu0 0.0
      %1381 = vmatprep.subr.mxu0 0.0
      %1382 = vmatpush1.xpose.msra.mxu0 0.0
      %1383 = vmatprep.subr.mxu0 0.0
      %1384 = vmatpush1.xpose.msra.mxu0 %v1351
      %1385 = vmatprep.subr.mxu0 0.0
      %1386 = vmatpush2.xpose.msra.mxu0 0.0
      %1387 = vmatprep.subr.mxu0 0.0
      %1388 = vmatpush2.xpose.msra.mxu0 0.0
      %1389 = vmatprep.subr.mxu0 0.0
      %1390 = vmatpush2.xpose.msra.mxu0 0.0
      %1391 = vmatprep.subr.mxu0 0.0
      %1392 = vmatpush2.xpose.msra.mxu0 0.0
      %1393 = vmatprep.subr.mxu0 0.0
      %1394 = vmatpush2.xpose.msra.mxu0 0.0
      %1395 = vmatprep.subr.mxu0 0.0
      %1396 = vmatpush2.xpose.msra.mxu0 0.0
      %1397 = vmatprep.subr.mxu0 0.0
      %1398 = vmatpush2.xpose.msra.mxu0 0.0
      %1399 = vmatprep.subr.mxu0 0.0
      %1400 = vmatpush2.xpose.msra.mxu0 0.0
      %1401 = vmatprep.subr.mxu0 0.0
      %1402 = vmatpush2.xpose.msra.mxu0 0.0
      %1403 = vmatprep.subr.mxu0 0.0
      %1404 = vmatpush2.xpose.msra.mxu0 0.0
      %1405 = vmatprep.subr.mxu0 0.0
      %1406 = vmatpush2.xpose.msra.mxu0 0.0
      %1407 = vmatprep.subr.mxu0 0.0
      %1408 = vmatpush2.xpose.msra.mxu0 0.0
      %1409 = vmatprep.subr.mxu0 0.0
      %1410 = vmatpush2.xpose.msra.mxu0 0.0
      %1411 = vmatprep.subr.mxu0 0.0
      %1412 = vmatpush2.xpose.msra.mxu0 0.0
      %1413 = vmatprep.subr.mxu0 0.0
      %1414 = vmatpush2.xpose.msra.mxu0 0.0
      %1415 = vmatprep.subr.mxu0 0.0
      %1416 = vmatpush2.xpose.msra.mxu0 0.0
      %1417 = vmatprep.mubr.f32.mxu0 0.0
      %1418 = vmatmul.mubr.f32.gmra.mxu0 %v1349
      %v1419 = vpop.f32.mrf.mxu0
      %v1420 = vadd.f32 0.0, %v1419
      %v1421 = vpop.f32.mrf.mxu0
      %1422 = vdwg.mxu0
      %1423 = vrot.lane.b32.xlu0 %v645, 112
      %v1424 = vpop.permute.xlu0 %1423
      %1425 = vrot.lane.b32.xlu0 %v557, 112
      %v1426 = vpop.permute.xlu0 %1425
      %v1427 = vsel %vm658, %v1424, 0
      %v1429 = vsel %vm658, %v1426, 0
      %1431 = vmatprep.subr.mxu0 0.0
      %1432 = vmatpush1.xpose.msra.mxu0 0.0
      %1433 = vmatprep.subr.mxu0 0.0
      %1434 = vmatpush1.xpose.msra.mxu0 0.0
      %1435 = vmatprep.subr.mxu0 0.0
      %1436 = vmatpush1.xpose.msra.mxu0 0.0
      %1437 = vmatprep.subr.mxu0 0.0
      %1438 = vmatpush1.xpose.msra.mxu0 0.0
      %1439 = vmatprep.subr.mxu0 0.0
      %1440 = vmatpush1.xpose.msra.mxu0 0.0
      %1441 = vmatprep.subr.mxu0 0.0
      %1442 = vmatpush1.xpose.msra.mxu0 0.0
      %1443 = vmatprep.subr.mxu0 0.0
      %1444 = vmatpush1.xpose.msra.mxu0 0.0
      %1445 = vmatprep.subr.mxu0 0.0
      %1446 = vmatpush1.xpose.msra.mxu0 0.0
      %1447 = vmatprep.subr.mxu0 0.0
      %1448 = vmatpush1.xpose.msra.mxu0 0.0
      %1449 = vmatprep.subr.mxu0 0.0
      %1450 = vmatpush1.xpose.msra.mxu0 0.0
      %1451 = vmatprep.subr.mxu0 0.0
      %1452 = vmatpush1.xpose.msra.mxu0 0.0
      %1453 = vmatprep.subr.mxu0 0.0
      %1454 = vmatpush1.xpose.msra.mxu0 0.0
      %1455 = vmatprep.subr.mxu0 0.0
      %1456 = vmatpush1.xpose.msra.mxu0 0.0
      %1457 = vmatprep.subr.mxu0 0.0
      %1458 = vmatpush1.xpose.msra.mxu0 0.0
      %1459 = vmatprep.subr.mxu0 0.0
      %1460 = vmatpush1.xpose.msra.mxu0 0.0
      %1461 = vmatprep.subr.mxu0 0.0
      %1462 = vmatpush1.xpose.msra.mxu0 %v1429
      %1463 = vmatprep.subr.mxu0 0.0
      %1464 = vmatpush2.xpose.msra.mxu0 0.0
      %1465 = vmatprep.subr.mxu0 0.0
      %1466 = vmatpush2.xpose.msra.mxu0 0.0
      %1467 = vmatprep.subr.mxu0 0.0
      %1468 = vmatpush2.xpose.msra.mxu0 0.0
      %1469 = vmatprep.subr.mxu0 0.0
      %1470 = vmatpush2.xpose.msra.mxu0 0.0
      %1471 = vmatprep.subr.mxu0 0.0
      %1472 = vmatpush2.xpose.msra.mxu0 0.0
      %1473 = vmatprep.subr.mxu0 0.0
      %1474 = vmatpush2.xpose.msra.mxu0 0.0
      %1475 = vmatprep.subr.mxu0 0.0
      %1476 = vmatpush2.xpose.msra.mxu0 0.0
      %1477 = vmatprep.subr.mxu0 0.0
      %1478 = vmatpush2.xpose.msra.mxu0 0.0
      %1479 = vmatprep.subr.mxu0 0.0
      %1480 = vmatpush2.xpose.msra.mxu0 0.0
      %1481 = vmatprep.subr.mxu0 0.0
      %1482 = vmatpush2.xpose.msra.mxu0 0.0
      %1483 = vmatprep.subr.mxu0 0.0
      %1484 = vmatpush2.xpose.msra.mxu0 0.0
      %1485 = vmatprep.subr.mxu0 0.0
      %1486 = vmatpush2.xpose.msra.mxu0 0.0
      %1487 = vmatprep.subr.mxu0 0.0
      %1488 = vmatpush2.xpose.msra.mxu0 0.0
      %1489 = vmatprep.subr.mxu0 0.0
      %1490 = vmatpush2.xpose.msra.mxu0 0.0
      %1491 = vmatprep.subr.mxu0 0.0
      %1492 = vmatpush2.xpose.msra.mxu0 0.0
      %1493 = vmatprep.subr.mxu0 0.0
      %1494 = vmatpush2.xpose.msra.mxu0 0.0
      %1495 = vmatprep.mubr.f32.mxu0 0.0
      %1496 = vmatmul.mubr.f32.gmra.mxu0 %v1427
      %v1497 = vpop.f32.mrf.mxu0
      %v1498 = vadd.f32 0.0, %v1497
      %v1499 = vpop.f32.mrf.mxu0
      %1500 = vdwg.mxu0
      %1501 = vrot.lane.b32.xlu0 %v649, 112
      %v1502 = vpop.permute.xlu0 %1501
      %1503 = vrot.lane.b32.xlu0 %v653, 112
      %v1504 = vpop.permute.xlu0 %1503
      %v1505 = vsel %vm658, %v1502, 0
      %v1507 = vsel %vm658, %v1504, 0
      %1509 = vmatprep.subr.mxu0 0.0
      %1510 = vmatpush1.xpose.msra.mxu0 0.0
      %1511 = vmatprep.subr.mxu0 0.0
      %1512 = vmatpush1.xpose.msra.mxu0 0.0
      %1513 = vmatprep.subr.mxu0 0.0
      %1514 = vmatpush1.xpose.msra.mxu0 0.0
      %1515 = vmatprep.subr.mxu0 0.0
      %1516 = vmatpush1.xpose.msra.mxu0 0.0
      %1517 = vmatprep.subr.mxu0 0.0
      %1518 = vmatpush1.xpose.msra.mxu0 0.0
      %1519 = vmatprep.subr.mxu0 0.0
      %1520 = vmatpush1.xpose.msra.mxu0 0.0
      %1521 = vmatprep.subr.mxu0 0.0
      %1522 = vmatpush1.xpose.msra.mxu0 0.0
      %1523 = vmatprep.subr.mxu0 0.0
      %1524 = vmatpush1.xpose.msra.mxu0 0.0
      %1525 = vmatprep.subr.mxu0 0.0
      %1526 = vmatpush1.xpose.msra.mxu0 0.0
      %1527 = vmatprep.subr.mxu0 0.0
      %1528 = vmatpush1.xpose.msra.mxu0 0.0
      %1529 = vmatprep.subr.mxu0 0.0
      %1530 = vmatpush1.xpose.msra.mxu0 0.0
      %1531 = vmatprep.subr.mxu0 0.0
      %1532 = vmatpush1.xpose.msra.mxu0 0.0
      %1533 = vmatprep.subr.mxu0 0.0
      %1534 = vmatpush1.xpose.msra.mxu0 0.0
      %1535 = vmatprep.subr.mxu0 0.0
      %1536 = vmatpush1.xpose.msra.mxu0 0.0
      %1537 = vmatprep.subr.mxu0 0.0
      %1538 = vmatpush1.xpose.msra.mxu0 0.0
      %1539 = vmatprep.subr.mxu0 0.0
      %1540 = vmatpush1.xpose.msra.mxu0 %v1507
      %1541 = vmatprep.subr.mxu0 0.0
      %1542 = vmatpush2.xpose.msra.mxu0 0.0
      %1543 = vmatprep.subr.mxu0 0.0
      %1544 = vmatpush2.xpose.msra.mxu0 0.0
      %1545 = vmatprep.subr.mxu0 0.0
      %1546 = vmatpush2.xpose.msra.mxu0 0.0
      %1547 = vmatprep.subr.mxu0 0.0
      %1548 = vmatpush2.xpose.msra.mxu0 0.0
      %1549 = vmatprep.subr.mxu0 0.0
      %1550 = vmatpush2.xpose.msra.mxu0 0.0
      %1551 = vmatprep.subr.mxu0 0.0
      %1552 = vmatpush2.xpose.msra.mxu0 0.0
      %1553 = vmatprep.subr.mxu0 0.0
      %1554 = vmatpush2.xpose.msra.mxu0 0.0
      %1555 = vmatprep.subr.mxu0 0.0
      %1556 = vmatpush2.xpose.msra.mxu0 0.0
      %1557 = vmatprep.subr.mxu0 0.0
      %1558 = vmatpush2.xpose.msra.mxu0 0.0
      %1559 = vmatprep.subr.mxu0 0.0
      %1560 = vmatpush2.xpose.msra.mxu0 0.0
      %1561 = vmatprep.subr.mxu0 0.0
      %1562 = vmatpush2.xpose.msra.mxu0 0.0
      %1563 = vmatprep.subr.mxu0 0.0
      %1564 = vmatpush2.xpose.msra.mxu0 0.0
      %1565 = vmatprep.subr.mxu0 0.0
      %1566 = vmatpush2.xpose.msra.mxu0 0.0
      %1567 = vmatprep.subr.mxu0 0.0
      %1568 = vmatpush2.xpose.msra.mxu0 0.0
      %1569 = vmatprep.subr.mxu0 0.0
      %1570 = vmatpush2.xpose.msra.mxu0 0.0
      %1571 = vmatprep.subr.mxu0 0.0
      %1572 = vmatpush2.xpose.msra.mxu0 0.0
      %1573 = vmatprep.mubr.f32.mxu0 0.0
      %1574 = vmatmul.mubr.f32.gmra.mxu0 %v1505
      %v1575 = vpop.f32.mrf.mxu0
      %v1576 = vadd.f32 0.0, %v1575
      %v1577 = vpop.f32.mrf.mxu0
      %1578 = vdwg.mxu0
      %1579 = vrot.lane.b32.xlu0 %v644, 104
      %v1580 = vpop.permute.xlu0 %1579
      %1581 = vrot.lane.b32.xlu0 %v552, 104
      %v1582 = vpop.permute.xlu0 %1581
      %v1583 = vsel %vm658, %v1580, 0
      %v1585 = vsel %vm658, %v1582, 0
      %1587 = vmatprep.subr.mxu0 0.0
      %1588 = vmatpush1.xpose.msra.mxu0 0.0
      %1589 = vmatprep.subr.mxu0 0.0
      %1590 = vmatpush1.xpose.msra.mxu0 0.0
      %1591 = vmatprep.subr.mxu0 0.0
      %1592 = vmatpush1.xpose.msra.mxu0 0.0
      %1593 = vmatprep.subr.mxu0 0.0
      %1594 = vmatpush1.xpose.msra.mxu0 0.0
      %1595 = vmatprep.subr.mxu0 0.0
      %1596 = vmatpush1.xpose.msra.mxu0 0.0
      %1597 = vmatprep.subr.mxu0 0.0
      %1598 = vmatpush1.xpose.msra.mxu0 0.0
      %1599 = vmatprep.subr.mxu0 0.0
      %1600 = vmatpush1.xpose.msra.mxu0 0.0
      %1601 = vmatprep.subr.mxu0 0.0
      %1602 = vmatpush1.xpose.msra.mxu0 0.0
      %1603 = vmatprep.subr.mxu0 0.0
      %1604 = vmatpush1.xpose.msra.mxu0 0.0
      %1605 = vmatprep.subr.mxu0 0.0
      %1606 = vmatpush1.xpose.msra.mxu0 0.0
      %1607 = vmatprep.subr.mxu0 0.0
      %1608 = vmatpush1.xpose.msra.mxu0 0.0
      %1609 = vmatprep.subr.mxu0 0.0
      %1610 = vmatpush1.xpose.msra.mxu0 0.0
      %1611 = vmatprep.subr.mxu0 0.0
      %1612 = vmatpush1.xpose.msra.mxu0 0.0
      %1613 = vmatprep.subr.mxu0 0.0
      %1614 = vmatpush1.xpose.msra.mxu0 0.0
      %1615 = vmatprep.subr.mxu0 0.0
      %1616 = vmatpush1.xpose.msra.mxu0 0.0
      %1617 = vmatprep.subr.mxu0 0.0
      %1618 = vmatpush1.xpose.msra.mxu0 %v1585
      %1619 = vmatprep.subr.mxu0 0.0
      %1620 = vmatpush2.xpose.msra.mxu0 0.0
      %1621 = vmatprep.subr.mxu0 0.0
      %1622 = vmatpush2.xpose.msra.mxu0 0.0
      %1623 = vmatprep.subr.mxu0 0.0
      %1624 = vmatpush2.xpose.msra.mxu0 0.0
      %1625 = vmatprep.subr.mxu0 0.0
      %1626 = vmatpush2.xpose.msra.mxu0 0.0
      %1627 = vmatprep.subr.mxu0 0.0
      %1628 = vmatpush2.xpose.msra.mxu0 0.0
      %1629 = vmatprep.subr.mxu0 0.0
      %1630 = vmatpush2.xpose.msra.mxu0 0.0
      %1631 = vmatprep.subr.mxu0 0.0
      %1632 = vmatpush2.xpose.msra.mxu0 0.0
      %1633 = vmatprep.subr.mxu0 0.0
      %1634 = vmatpush2.xpose.msra.mxu0 0.0
      %1635 = vmatprep.subr.mxu0 0.0
      %1636 = vmatpush2.xpose.msra.mxu0 0.0
      %1637 = vmatprep.subr.mxu0 0.0
      %1638 = vmatpush2.xpose.msra.mxu0 0.0
      %1639 = vmatprep.subr.mxu0 0.0
      %1640 = vmatpush2.xpose.msra.mxu0 0.0
      %1641 = vmatprep.subr.mxu0 0.0
      %1642 = vmatpush2.xpose.msra.mxu0 0.0
      %1643 = vmatprep.subr.mxu0 0.0
      %1644 = vmatpush2.xpose.msra.mxu0 0.0
      %1645 = vmatprep.subr.mxu0 0.0
      %1646 = vmatpush2.xpose.msra.mxu0 0.0
      %1647 = vmatprep.subr.mxu0 0.0
      %1648 = vmatpush2.xpose.msra.mxu0 0.0
      %1649 = vmatprep.subr.mxu0 0.0
      %1650 = vmatpush2.xpose.msra.mxu0 0.0
      %1651 = vmatprep.mubr.f32.mxu0 0.0
      %1652 = vmatmul.mubr.f32.gmra.mxu0 %v1583
      %v1653 = vpop.f32.mrf.mxu0
      %v1654 = vadd.f32 0.0, %v1653
      %v1655 = vpop.f32.mrf.mxu0
      %1656 = vdwg.mxu0
      %1657 = vrot.lane.b32.xlu0 %v648, 104
      %v1658 = vpop.permute.xlu0 %1657
      %1659 = vrot.lane.b32.xlu0 %v652, 104
      %v1660 = vpop.permute.xlu0 %1659
      %v1661 = vsel %vm658, %v1658, 0
      %v1663 = vsel %vm658, %v1660, 0
      %1665 = vmatprep.subr.mxu0 0.0
      %1666 = vmatpush1.xpose.msra.mxu0 0.0
      %1667 = vmatprep.subr.mxu0 0.0
      %1668 = vmatpush1.xpose.msra.mxu0 0.0
      %1669 = vmatprep.subr.mxu0 0.0
      %1670 = vmatpush1.xpose.msra.mxu0 0.0
      %1671 = vmatprep.subr.mxu0 0.0
      %1672 = vmatpush1.xpose.msra.mxu0 0.0
      %1673 = vmatprep.subr.mxu0 0.0
      %1674 = vmatpush1.xpose.msra.mxu0 0.0
      %1675 = vmatprep.subr.mxu0 0.0
      %1676 = vmatpush1.xpose.msra.mxu0 0.0
      %1677 = vmatprep.subr.mxu0 0.0
      %1678 = vmatpush1.xpose.msra.mxu0 0.0
      %1679 = vmatprep.subr.mxu0 0.0
      %1680 = vmatpush1.xpose.msra.mxu0 0.0
      %1681 = vmatprep.subr.mxu0 0.0
      %1682 = vmatpush1.xpose.msra.mxu0 0.0
      %1683 = vmatprep.subr.mxu0 0.0
      %1684 = vmatpush1.xpose.msra.mxu0 0.0
      %1685 = vmatprep.subr.mxu0 0.0
      %1686 = vmatpush1.xpose.msra.mxu0 0.0
      %1687 = vmatprep.subr.mxu0 0.0
      %1688 = vmatpush1.xpose.msra.mxu0 0.0
      %1689 = vmatprep.subr.mxu0 0.0
      %1690 = vmatpush1.xpose.msra.mxu0 0.0
      %1691 = vmatprep.subr.mxu0 0.0
      %1692 = vmatpush1.xpose.msra.mxu0 0.0
      %1693 = vmatprep.subr.mxu0 0.0
      %1694 = vmatpush1.xpose.msra.mxu0 0.0
      %1695 = vmatprep.subr.mxu0 0.0
      %1696 = vmatpush1.xpose.msra.mxu0 %v1663
      %1697 = vmatprep.subr.mxu0 0.0
      %1698 = vmatpush2.xpose.msra.mxu0 0.0
      %1699 = vmatprep.subr.mxu0 0.0
      %1700 = vmatpush2.xpose.msra.mxu0 0.0
      %1701 = vmatprep.subr.mxu0 0.0
      %1702 = vmatpush2.xpose.msra.mxu0 0.0
      %1703 = vmatprep.subr.mxu0 0.0
      %1704 = vmatpush2.xpose.msra.mxu0 0.0
      %1705 = vmatprep.subr.mxu0 0.0
      %1706 = vmatpush2.xpose.msra.mxu0 0.0
      %1707 = vmatprep.subr.mxu0 0.0
      %1708 = vmatpush2.xpose.msra.mxu0 0.0
      %1709 = vmatprep.subr.mxu0 0.0
      %1710 = vmatpush2.xpose.msra.mxu0 0.0
      %1711 = vmatprep.subr.mxu0 0.0
      %1712 = vmatpush2.xpose.msra.mxu0 0.0
      %1713 = vmatprep.subr.mxu0 0.0
      %1714 = vmatpush2.xpose.msra.mxu0 0.0
      %1715 = vmatprep.subr.mxu0 0.0
      %1716 = vmatpush2.xpose.msra.mxu0 0.0
      %1717 = vmatprep.subr.mxu0 0.0
      %1718 = vmatpush2.xpose.msra.mxu0 0.0
      %1719 = vmatprep.subr.mxu0 0.0
      %1720 = vmatpush2.xpose.msra.mxu0 0.0
      %1721 = vmatprep.subr.mxu0 0.0
      %1722 = vmatpush2.xpose.msra.mxu0 0.0
      %1723 = vmatprep.subr.mxu0 0.0
      %1724 = vmatpush2.xpose.msra.mxu0 0.0
      %1725 = vmatprep.subr.mxu0 0.0
      %1726 = vmatpush2.xpose.msra.mxu0 0.0
      %1727 = vmatprep.subr.mxu0 0.0
      %1728 = vmatpush2.xpose.msra.mxu0 0.0
      %1729 = vmatprep.mubr.f32.mxu0 0.0
      %1730 = vmatmul.mubr.f32.gmra.mxu0 %v1661
      %v1731 = vpop.f32.mrf.mxu0
      %v1732 = vadd.f32 0.0, %v1731
      %v1733 = vpop.f32.mrf.mxu0
      %1734 = vdwg.mxu0
      %1735 = vrot.lane.b32.xlu0 %v645, 104
      %v1736 = vpop.permute.xlu0 %1735
      %1737 = vrot.lane.b32.xlu0 %v557, 104
      %v1738 = vpop.permute.xlu0 %1737
      %v1739 = vsel %vm658, %v1736, 0
      %v1741 = vsel %vm658, %v1738, 0
      %1743 = vmatprep.subr.mxu0 0.0
      %1744 = vmatpush1.xpose.msra.mxu0 0.0
      %1745 = vmatprep.subr.mxu0 0.0
      %1746 = vmatpush1.xpose.msra.mxu0 0.0
      %1747 = vmatprep.subr.mxu0 0.0
      %1748 = vmatpush1.xpose.msra.mxu0 0.0
      %1749 = vmatprep.subr.mxu0 0.0
      %1750 = vmatpush1.xpose.msra.mxu0 0.0
      %1751 = vmatprep.subr.mxu0 0.0
      %1752 = vmatpush1.xpose.msra.mxu0 0.0
      %1753 = vmatprep.subr.mxu0 0.0
      %1754 = vmatpush1.xpose.msra.mxu0 0.0
      %1755 = vmatprep.subr.mxu0 0.0
      %1756 = vmatpush1.xpose.msra.mxu0 0.0
      %1757 = vmatprep.subr.mxu0 0.0
      %1758 = vmatpush1.xpose.msra.mxu0 0.0
      %1759 = vmatprep.subr.mxu0 0.0
      %1760 = vmatpush1.xpose.msra.mxu0 0.0
      %1761 = vmatprep.subr.mxu0 0.0
      %1762 = vmatpush1.xpose.msra.mxu0 0.0
      %1763 = vmatprep.subr.mxu0 0.0
      %1764 = vmatpush1.xpose.msra.mxu0 0.0
      %1765 = vmatprep.subr.mxu0 0.0
      %1766 = vmatpush1.xpose.msra.mxu0 0.0
      %1767 = vmatprep.subr.mxu0 0.0
      %1768 = vmatpush1.xpose.msra.mxu0 0.0
      %1769 = vmatprep.subr.mxu0 0.0
      %1770 = vmatpush1.xpose.msra.mxu0 0.0
      %1771 = vmatprep.subr.mxu0 0.0
      %1772 = vmatpush1.xpose.msra.mxu0 0.0
      %1773 = vmatprep.subr.mxu0 0.0
      %1774 = vmatpush1.xpose.msra.mxu0 %v1741
      %1775 = vmatprep.subr.mxu0 0.0
      %1776 = vmatpush2.xpose.msra.mxu0 0.0
      %1777 = vmatprep.subr.mxu0 0.0
      %1778 = vmatpush2.xpose.msra.mxu0 0.0
      %1779 = vmatprep.subr.mxu0 0.0
      %1780 = vmatpush2.xpose.msra.mxu0 0.0
      %1781 = vmatprep.subr.mxu0 0.0
      %1782 = vmatpush2.xpose.msra.mxu0 0.0
      %1783 = vmatprep.subr.mxu0 0.0
      %1784 = vmatpush2.xpose.msra.mxu0 0.0
      %1785 = vmatprep.subr.mxu0 0.0
      %1786 = vmatpush2.xpose.msra.mxu0 0.0
      %1787 = vmatprep.subr.mxu0 0.0
      %1788 = vmatpush2.xpose.msra.mxu0 0.0
      %1789 = vmatprep.subr.mxu0 0.0
      %1790 = vmatpush2.xpose.msra.mxu0 0.0
      %1791 = vmatprep.subr.mxu0 0.0
      %1792 = vmatpush2.xpose.msra.mxu0 0.0
      %1793 = vmatprep.subr.mxu0 0.0
      %1794 = vmatpush2.xpose.msra.mxu0 0.0
      %1795 = vmatprep.subr.mxu0 0.0
      %1796 = vmatpush2.xpose.msra.mxu0 0.0
      %1797 = vmatprep.subr.mxu0 0.0
      %1798 = vmatpush2.xpose.msra.mxu0 0.0
      %1799 = vmatprep.subr.mxu0 0.0
      %1800 = vmatpush2.xpose.msra.mxu0 0.0
      %1801 = vmatprep.subr.mxu0 0.0
      %1802 = vmatpush2.xpose.msra.mxu0 0.0
      %1803 = vmatprep.subr.mxu0 0.0
      %1804 = vmatpush2.xpose.msra.mxu0 0.0
      %1805 = vmatprep.subr.mxu0 0.0
      %1806 = vmatpush2.xpose.msra.mxu0 0.0
      %1807 = vmatprep.mubr.f32.mxu0 0.0
      %1808 = vmatmul.mubr.f32.gmra.mxu0 %v1739
      %v1809 = vpop.f32.mrf.mxu0
      %v1810 = vadd.f32 0.0, %v1809
      %v1811 = vpop.f32.mrf.mxu0
      %1812 = vdwg.mxu0
      %1813 = vrot.lane.b32.xlu0 %v649, 104
      %v1814 = vpop.permute.xlu0 %1813
      %1815 = vrot.lane.b32.xlu0 %v653, 104
      %v1816 = vpop.permute.xlu0 %1815
      %v1817 = vsel %vm658, %v1814, 0
      %v1819 = vsel %vm658, %v1816, 0
      %1821 = vmatprep.subr.mxu0 0.0
      %1822 = vmatpush1.xpose.msra.mxu0 0.0
      %1823 = vmatprep.subr.mxu0 0.0
      %1824 = vmatpush1.xpose.msra.mxu0 0.0
      %1825 = vmatprep.subr.mxu0 0.0
      %1826 = vmatpush1.xpose.msra.mxu0 0.0
      %1827 = vmatprep.subr.mxu0 0.0
      %1828 = vmatpush1.xpose.msra.mxu0 0.0
      %1829 = vmatprep.subr.mxu0 0.0
      %1830 = vmatpush1.xpose.msra.mxu0 0.0
      %1831 = vmatprep.subr.mxu0 0.0
      %1832 = vmatpush1.xpose.msra.mxu0 0.0
      %1833 = vmatprep.subr.mxu0 0.0
      %1834 = vmatpush1.xpose.msra.mxu0 0.0
      %1835 = vmatprep.subr.mxu0 0.0
      %1836 = vmatpush1.xpose.msra.mxu0 0.0
      %1837 = vmatprep.subr.mxu0 0.0
      %1838 = vmatpush1.xpose.msra.mxu0 0.0
      %1839 = vmatprep.subr.mxu0 0.0
      %1840 = vmatpush1.xpose.msra.mxu0 0.0
      %1841 = vmatprep.subr.mxu0 0.0
      %1842 = vmatpush1.xpose.msra.mxu0 0.0
      %1843 = vmatprep.subr.mxu0 0.0
      %1844 = vmatpush1.xpose.msra.mxu0 0.0
      %1845 = vmatprep.subr.mxu0 0.0
      %1846 = vmatpush1.xpose.msra.mxu0 0.0
      %1847 = vmatprep.subr.mxu0 0.0
      %1848 = vmatpush1.xpose.msra.mxu0 0.0
      %1849 = vmatprep.subr.mxu0 0.0
      %1850 = vmatpush1.xpose.msra.mxu0 0.0
      %1851 = vmatprep.subr.mxu0 0.0
      %1852 = vmatpush1.xpose.msra.mxu0 %v1819
      %1853 = vmatprep.subr.mxu0 0.0
      %1854 = vmatpush2.xpose.msra.mxu0 0.0
      %1855 = vmatprep.subr.mxu0 0.0
      %1856 = vmatpush2.xpose.msra.mxu0 0.0
      %1857 = vmatprep.subr.mxu0 0.0
      %1858 = vmatpush2.xpose.msra.mxu0 0.0
      %1859 = vmatprep.subr.mxu0 0.0
      %1860 = vmatpush2.xpose.msra.mxu0 0.0
      %1861 = vmatprep.subr.mxu0 0.0
      %1862 = vmatpush2.xpose.msra.mxu0 0.0
      %1863 = vmatprep.subr.mxu0 0.0
      %1864 = vmatpush2.xpose.msra.mxu0 0.0
      %1865 = vmatprep.subr.mxu0 0.0
      %1866 = vmatpush2.xpose.msra.mxu0 0.0
      %1867 = vmatprep.subr.mxu0 0.0
      %1868 = vmatpush2.xpose.msra.mxu0 0.0
      %1869 = vmatprep.subr.mxu0 0.0
      %1870 = vmatpush2.xpose.msra.mxu0 0.0
      %1871 = vmatprep.subr.mxu0 0.0
      %1872 = vmatpush2.xpose.msra.mxu0 0.0
      %1873 = vmatprep.subr.mxu0 0.0
      %1874 = vmatpush2.xpose.msra.mxu0 0.0
      %1875 = vmatprep.subr.mxu0 0.0
      %1876 = vmatpush2.xpose.msra.mxu0 0.0
      %1877 = vmatprep.subr.mxu0 0.0
      %1878 = vmatpush2.xpose.msra.mxu0 0.0
      %1879 = vmatprep.subr.mxu0 0.0
      %1880 = vmatpush2.xpose.msra.mxu0 0.0
      %1881 = vmatprep.subr.mxu0 0.0
      %1882 = vmatpush2.xpose.msra.mxu0 0.0
      %1883 = vmatprep.subr.mxu0 0.0
      %1884 = vmatpush2.xpose.msra.mxu0 0.0
      %1885 = vmatprep.mubr.f32.mxu0 0.0
      %1886 = vmatmul.mubr.f32.gmra.mxu0 %v1817
      %v1887 = vpop.f32.mrf.mxu0
      %v1888 = vadd.f32 0.0, %v1887
      %v1889 = vpop.f32.mrf.mxu0
      %1890 = vdwg.mxu0
      %1891 = vrot.lane.b32.xlu0 %v636, 120
      %v1892 = vpop.permute.xlu0 %1891
      %1893 = vrot.lane.b32.xlu0 %v656, 120
      %v1894 = vpop.permute.xlu0 %1893
      %1895 = vrot.lane.b32.xlu0 %v641, 120
      %v1896 = vpop.permute.xlu0 %1895
      %1897 = vrot.lane.b32.xlu0 %v657, 120
      %v1898 = vpop.permute.xlu0 %1897
      %1899 = vrot.lane.b32.xlu0 %v636, 112
      %v1900 = vpop.permute.xlu0 %1899
      %1901 = vrot.lane.b32.xlu0 %v656, 112
      %v1902 = vpop.permute.xlu0 %1901
      %1903 = vrot.lane.b32.xlu0 %v641, 112
      %v1904 = vpop.permute.xlu0 %1903
      %1905 = vrot.lane.b32.xlu0 %v657, 112
      %v1906 = vpop.permute.xlu0 %1905
      %1907 = vrot.lane.b32.xlu0 %v636, 104
      %v1908 = vpop.permute.xlu0 %1907
      %1909 = vrot.lane.b32.xlu0 %v656, 104
      %v1910 = vpop.permute.xlu0 %1909
      %1911 = vrot.lane.b32.xlu0 %v641, 104
      %v1912 = vpop.permute.xlu0 %1911
      %1913 = vrot.lane.b32.xlu0 %v657, 104
      %v1914 = vpop.permute.xlu0 %1913
      %vm1915 = vcmask 27648
      %v1916 = vsel %vm1915, %v730, -inf
      %1917 = vmax.xlane.f32.xlu0 %v1916
      %v1918 = vpop.xlane.xlu0 %1917
      %v1919 = vsel %vm1915, %v804, -inf
      %1920 = vmax.xlane.f32.xlu0 %v1919
      %v1921 = vpop.xlane.xlu0 %1920
      %v1922 = vsel %vm1915, %v878, -inf
      %1923 = vmax.xlane.f32.xlu0 %v1922
      %v1924 = vpop.xlane.xlu0 %1923
      %v1925 = vsel %vm1915, %v952, -inf
      %1926 = vmax.xlane.f32.xlu0 %v1925
      %v1927 = vpop.xlane.xlu0 %1926
      %v1928 = vsel %vm1915, %v1030, -inf
      %1929 = vmax.xlane.f32.xlu0 %v1928
      %v1930 = vpop.xlane.xlu0 %1929
      %v1931 = vsel %vm1915, %v1108, -inf
      %1932 = vmax.xlane.f32.xlu0 %v1931
      %v1933 = vpop.xlane.xlu0 %1932
      %v1934 = vsel %vm1915, %v1186, -inf
      %1935 = vmax.xlane.f32.xlu0 %v1934
      %v1936 = vpop.xlane.xlu0 %1935
      %v1937 = vsel %vm1915, %v1264, -inf
      %1938 = vmax.xlane.f32.xlu0 %v1937
      %v1939 = vpop.xlane.xlu0 %1938
      %v1940 = vsel %vm1915, %v1342, -inf
      %1941 = vmax.xlane.f32.xlu0 %v1940
      %v1942 = vpop.xlane.xlu0 %1941
      %v1943 = vsel %vm1915, %v1420, -inf
      %1944 = vmax.xlane.f32.xlu0 %v1943
      %v1945 = vpop.xlane.xlu0 %1944
      %v1946 = vsel %vm1915, %v1498, -inf
      %1947 = vmax.xlane.f32.xlu0 %v1946
      %v1948 = vpop.xlane.xlu0 %1947
      %v1949 = vsel %vm1915, %v1576, -inf
      %1950 = vmax.xlane.f32.xlu0 %v1949
      %v1951 = vpop.xlane.xlu0 %1950
      %v1952 = vsel %vm1915, %v1654, -inf
      %1953 = vmax.xlane.f32.xlu0 %v1952
      %v1954 = vpop.xlane.xlu0 %1953
      %v1955 = vsel %vm1915, %v1732, -inf
      %1956 = vmax.xlane.f32.xlu0 %v1955
      %v1957 = vpop.xlane.xlu0 %1956
      %v1958 = vsel %vm1915, %v1810, -inf
      %1959 = vmax.xlane.f32.xlu0 %v1958
      %v1960 = vpop.xlane.xlu0 %1959
      %v1961 = vsel %vm1915, %v1888, -inf
      %1962 = vmax.xlane.f32.xlu0 %v1961
      %v1963 = vpop.xlane.xlu0 %1962
      %v1964 = vsub.f32 %v730, %v1918
      %v1965 = vsub.f32 %v804, %v1921
      %v1966 = vsub.f32 %v878, %v1924
      %v1967 = vsub.f32 %v952, %v1927
      %v1968 = vsub.f32 %v1030, %v1930
      %v1969 = vsub.f32 %v1108, %v1933
      %v1970 = vsub.f32 %v1186, %v1936
      %v1971 = vsub.f32 %v1264, %v1939
      %v1972 = vsub.f32 %v1342, %v1942
      %v1973 = vsub.f32 %v1420, %v1945
      %v1974 = vsub.f32 %v1498, %v1948
      %v1975 = vsub.f32 %v1576, %v1951
      %v1976 = vsub.f32 %v1654, %v1954
      %v1977 = vsub.f32 %v1732, %v1957
      %v1978 = vsub.f32 %v1810, %v1960
      %v1979 = vsub.f32 %v1888, %v1963
      %v1980 = vmul.f32 %v1964, 1.442695
      %v1981 = vpow.pop %v1980
      %v1982 = vmul.f32 %v1965, 1.442695
      %v1983 = vpow.pop %v1982
      %v1984 = vmul.f32 %v1966, 1.442695
      %v1985 = vpow.pop %v1984
      %v1986 = vmul.f32 %v1967, 1.442695
      %v1987 = vpow.pop %v1986
      %v1988 = vmul.f32 %v1968, 1.442695
      %v1989 = vpow.pop %v1988
      %v1990 = vmul.f32 %v1969, 1.442695
      %v1991 = vpow.pop %v1990
      %v1992 = vmul.f32 %v1970, 1.442695
      %v1993 = vpow.pop %v1992
      %v1994 = vmul.f32 %v1971, 1.442695
      %v1995 = vpow.pop %v1994
      %v1996 = vmul.f32 %v1972, 1.442695
      %v1997 = vpow.pop %v1996
      %v1998 = vmul.f32 %v1973, 1.442695
      %v1999 = vpow.pop %v1998
      %v2000 = vmul.f32 %v1974, 1.442695
      %v2001 = vpow.pop %v2000
      %v2002 = vmul.f32 %v1975, 1.442695
      %v2003 = vpow.pop %v2002
      %v2004 = vmul.f32 %v1976, 1.442695
      %v2005 = vpow.pop %v2004
      %v2006 = vmul.f32 %v1977, 1.442695
      %v2007 = vpow.pop %v2006
      %v2008 = vmul.f32 %v1978, 1.442695
      %v2009 = vpow.pop %v2008
      %v2010 = vmul.f32 %v1979, 1.442695
      %v2011 = vpow.pop %v2010
      %v2012 = vsel %vm1915, %v1981, 0.0
      %2013 = vadd.xlane.f32.xlu0 %v2012
      %v2014 = vpop.xlane.xlu0 %2013
      %v2015 = vsel %vm1915, %v1983, 0.0
      %2016 = vadd.xlane.f32.xlu0 %v2015
      %v2017 = vpop.xlane.xlu0 %2016
      %v2018 = vsel %vm1915, %v1985, 0.0
      %2019 = vadd.xlane.f32.xlu0 %v2018
      %v2020 = vpop.xlane.xlu0 %2019
      %v2021 = vsel %vm1915, %v1987, 0.0
      %2022 = vadd.xlane.f32.xlu0 %v2021
      %v2023 = vpop.xlane.xlu0 %2022
      %v2024 = vsel %vm1915, %v1989, 0.0
      %2025 = vadd.xlane.f32.xlu0 %v2024
      %v2026 = vpop.xlane.xlu0 %2025
      %v2027 = vsel %vm1915, %v1991, 0.0
      %2028 = vadd.xlane.f32.xlu0 %v2027
      %v2029 = vpop.xlane.xlu0 %2028
      %v2030 = vsel %vm1915, %v1993, 0.0
      %2031 = vadd.xlane.f32.xlu0 %v2030
      %v2032 = vpop.xlane.xlu0 %2031
      %v2033 = vsel %vm1915, %v1995, 0.0
      %2034 = vadd.xlane.f32.xlu0 %v2033
      %v2035 = vpop.xlane.xlu0 %2034
      %v2036 = vsel %vm1915, %v1997, 0.0
      %2037 = vadd.xlane.f32.xlu0 %v2036
      %v2038 = vpop.xlane.xlu0 %2037
      %v2039 = vsel %vm1915, %v1999, 0.0
      %2040 = vadd.xlane.f32.xlu0 %v2039
      %v2041 = vpop.xlane.xlu0 %2040
      %v2042 = vsel %vm1915, %v2001, 0.0
      %2043 = vadd.xlane.f32.xlu0 %v2042
      %v2044 = vpop.xlane.xlu0 %2043
      %v2045 = vsel %vm1915, %v2003, 0.0
      %2046 = vadd.xlane.f32.xlu0 %v2045
      %v2047 = vpop.xlane.xlu0 %2046
      %v2048 = vsel %vm1915, %v2005, 0.0
      %2049 = vadd.xlane.f32.xlu0 %v2048
      %v2050 = vpop.xlane.xlu0 %2049
      %v2051 = vsel %vm1915, %v2007, 0.0
      %2052 = vadd.xlane.f32.xlu0 %v2051
      %v2053 = vpop.xlane.xlu0 %2052
      %v2054 = vsel %vm1915, %v2009, 0.0
      %2055 = vadd.xlane.f32.xlu0 %v2054
      %v2056 = vpop.xlane.xlu0 %2055
      %v2057 = vsel %vm1915, %v2011, 0.0
      %2058 = vadd.xlane.f32.xlu0 %v2057
      %v2059 = vpop.xlane.xlu0 %2058
      %v2060 = vrcp.pop %v2014
      %v2061 = vrcp.pop %v2017
      %v2062 = vrcp.pop %v2020
      %v2063 = vrcp.pop %v2023
      %v2064 = vrcp.pop %v2026
      %v2065 = vrcp.pop %v2029
      %v2066 = vrcp.pop %v2032
      %v2067 = vrcp.pop %v2035
      %v2068 = vrcp.pop %v2038
      %v2069 = vrcp.pop %v2041
      %v2070 = vrcp.pop %v2044
      %v2071 = vrcp.pop %v2047
      %v2072 = vrcp.pop %v2050
      %v2073 = vrcp.pop %v2053
      %v2074 = vrcp.pop %v2056
      %v2075 = vrcp.pop %v2059
      %v2076 = vmul.f32 %v1981, %v2060
      %v2077 = vmul.f32 %v1983, %v2061
      %v2078 = vmul.f32 %v1985, %v2062
      %v2079 = vmul.f32 %v1987, %v2063
      %v2080 = vmul.f32 %v1989, %v2064
      %v2081 = vmul.f32 %v1991, %v2065
      %v2082 = vmul.f32 %v1993, %v2066
      %v2083 = vmul.f32 %v1995, %v2067
      %v2084 = vmul.f32 %v1997, %v2068
      %v2085 = vmul.f32 %v1999, %v2069
      %v2086 = vmul.f32 %v2001, %v2070
      %v2087 = vmul.f32 %v2003, %v2071
      %v2088 = vmul.f32 %v2005, %v2072
      %v2089 = vmul.f32 %v2007, %v2073
      %v2090 = vmul.f32 %v2009, %v2074
      %v2091 = vmul.f32 %v2011, %v2075
      %vm2092 = vcmask 31744
      %v2094 = vsel %vm2092, %v2076, 0
      %vm2096 = vcmask 1043456
      %v2097 = vsel %vm2096, %v636, 0
      %2099 = vmatprep.subr.mxu0 0.0
      %2100 = vmatpush1.msra.mxu0 0.0
      %2101 = vmatprep.subr.mxu0 0.0
      %2102 = vmatpush1.msra.mxu0 0.0
      %2103 = vmatprep.subr.mxu0 0.0
      %2104 = vmatpush1.msra.mxu0 0.0
      %2105 = vmatprep.subr.mxu0 0.0
      %2106 = vmatpush1.msra.mxu0 0.0
      %2107 = vmatprep.subr.mxu0 0.0
      %2108 = vmatpush1.msra.mxu0 0.0
      %2109 = vmatprep.subr.mxu0 0.0
      %2110 = vmatpush1.msra.mxu0 0.0
      %2111 = vmatprep.subr.mxu0 0.0
      %2112 = vmatpush1.msra.mxu0 0.0
      %2113 = vmatprep.subr.mxu0 0.0
      %2114 = vmatpush1.msra.mxu0 0.0
      %2115 = vmatprep.subr.mxu0 0.0
      %2116 = vmatpush1.msra.mxu0 0.0
      %2117 = vmatprep.subr.mxu0 0.0
      %2118 = vmatpush1.msra.mxu0 0.0
      %2119 = vmatprep.subr.mxu0 0.0
      %2120 = vmatpush1.msra.mxu0 0.0
      %2121 = vmatprep.subr.mxu0 0.0
      %2122 = vmatpush1.msra.mxu0 0.0
      %2123 = vmatprep.subr.mxu0 0.0
      %2124 = vmatpush1.msra.mxu0 0.0
      %2125 = vmatprep.subr.mxu0 0.0
      %2126 = vmatpush1.msra.mxu0 0.0
      %2127 = vmatprep.subr.mxu0 0.0
      %2128 = vmatpush1.msra.mxu0 0.0
      %2129 = vmatprep.subr.mxu0 0.0
      %2130 = vmatpush1.msra.mxu0 %v2097
      %2131 = vmatprep.subr.mxu0 0.0
      %2132 = vmatpush2.msra.mxu0 0.0
      %2133 = vmatprep.subr.mxu0 0.0
      %2134 = vmatpush2.msra.mxu0 0.0
      %2135 = vmatprep.subr.mxu0 0.0
      %2136 = vmatpush2.msra.mxu0 0.0
      %2137 = vmatprep.subr.mxu0 0.0
      %2138 = vmatpush2.msra.mxu0 0.0
      %2139 = vmatprep.subr.mxu0 0.0
      %2140 = vmatpush2.msra.mxu0 0.0
      %2141 = vmatprep.subr.mxu0 0.0
      %2142 = vmatpush2.msra.mxu0 0.0
      %2143 = vmatprep.subr.mxu0 0.0
      %2144 = vmatpush2.msra.mxu0 0.0
      %2145 = vmatprep.subr.mxu0 0.0
      %2146 = vmatpush2.msra.mxu0 0.0
      %2147 = vmatprep.subr.mxu0 0.0
      %2148 = vmatpush2.msra.mxu0 0.0
      %2149 = vmatprep.subr.mxu0 0.0
      %2150 = vmatpush2.msra.mxu0 0.0
      %2151 = vmatprep.subr.mxu0 0.0
      %2152 = vmatpush2.msra.mxu0 0.0
      %2153 = vmatprep.subr.mxu0 0.0
      %2154 = vmatpush2.msra.mxu0 0.0
      %2155 = vmatprep.subr.mxu0 0.0
      %2156 = vmatpush2.msra.mxu0 0.0
      %2157 = vmatprep.subr.mxu0 0.0
      %2158 = vmatpush2.msra.mxu0 0.0
      %2159 = vmatprep.subr.mxu0 0.0
      %2160 = vmatpush2.msra.mxu0 0.0
      %2161 = vmatprep.subr.mxu0 0.0
      %2162 = vmatpush2.msra.mxu0 0.0
      %2163 = vmatprep.mubr.f32.mxu0 0.0
      %2164 = vmatmul.mubr.f32.gmra.mxu0 %v2094
      %v2165 = vpop.f32.mrf.mxu0
      %v2166 = vadd.f32 0.0, %v2165
      %v2167 = vpop.f32.mrf.mxu0
      %2168 = vdwg.mxu0
      %v2170 = vsel %vm2092, %v2077, 0
      %v2172 = vsel %vm2096, %v656, 0
      %2174 = vmatprep.subr.mxu0 0.0
      %2175 = vmatpush1.msra.mxu0 0.0
      %2176 = vmatprep.subr.mxu0 0.0
      %2177 = vmatpush1.msra.mxu0 0.0
      %2178 = vmatprep.subr.mxu0 0.0
      %2179 = vmatpush1.msra.mxu0 0.0
      %2180 = vmatprep.subr.mxu0 0.0
      %2181 = vmatpush1.msra.mxu0 0.0
      %2182 = vmatprep.subr.mxu0 0.0
      %2183 = vmatpush1.msra.mxu0 0.0
      %2184 = vmatprep.subr.mxu0 0.0
      %2185 = vmatpush1.msra.mxu0 0.0
      %2186 = vmatprep.subr.mxu0 0.0
      %2187 = vmatpush1.msra.mxu0 0.0
      %2188 = vmatprep.subr.mxu0 0.0
      %2189 = vmatpush1.msra.mxu0 0.0
      %2190 = vmatprep.subr.mxu0 0.0
      %2191 = vmatpush1.msra.mxu0 0.0
      %2192 = vmatprep.subr.mxu0 0.0
      %2193 = vmatpush1.msra.mxu0 0.0
      %2194 = vmatprep.subr.mxu0 0.0
      %2195 = vmatpush1.msra.mxu0 0.0
      %2196 = vmatprep.subr.mxu0 0.0
      %2197 = vmatpush1.msra.mxu0 0.0
      %2198 = vmatprep.subr.mxu0 0.0
      %2199 = vmatpush1.msra.mxu0 0.0
      %2200 = vmatprep.subr.mxu0 0.0
      %2201 = vmatpush1.msra.mxu0 0.0
      %2202 = vmatprep.subr.mxu0 0.0
      %2203 = vmatpush1.msra.mxu0 0.0
      %2204 = vmatprep.subr.mxu0 0.0
      %2205 = vmatpush1.msra.mxu0 %v2172
      %2206 = vmatprep.subr.mxu0 0.0
      %2207 = vmatpush2.msra.mxu0 0.0
      %2208 = vmatprep.subr.mxu0 0.0
      %2209 = vmatpush2.msra.mxu0 0.0
      %2210 = vmatprep.subr.mxu0 0.0
      %2211 = vmatpush2.msra.mxu0 0.0
      %2212 = vmatprep.subr.mxu0 0.0
      %2213 = vmatpush2.msra.mxu0 0.0
      %2214 = vmatprep.subr.mxu0 0.0
      %2215 = vmatpush2.msra.mxu0 0.0
      %2216 = vmatprep.subr.mxu0 0.0
      %2217 = vmatpush2.msra.mxu0 0.0
      %2218 = vmatprep.subr.mxu0 0.0
      %2219 = vmatpush2.msra.mxu0 0.0
      %2220 = vmatprep.subr.mxu0 0.0
      %2221 = vmatpush2.msra.mxu0 0.0
      %2222 = vmatprep.subr.mxu0 0.0
      %2223 = vmatpush2.msra.mxu0 0.0
      %2224 = vmatprep.subr.mxu0 0.0
      %2225 = vmatpush2.msra.mxu0 0.0
      %2226 = vmatprep.subr.mxu0 0.0
      %2227 = vmatpush2.msra.mxu0 0.0
      %2228 = vmatprep.subr.mxu0 0.0
      %2229 = vmatpush2.msra.mxu0 0.0
      %2230 = vmatprep.subr.mxu0 0.0
      %2231 = vmatpush2.msra.mxu0 0.0
      %2232 = vmatprep.subr.mxu0 0.0
      %2233 = vmatpush2.msra.mxu0 0.0
      %2234 = vmatprep.subr.mxu0 0.0
      %2235 = vmatpush2.msra.mxu0 0.0
      %2236 = vmatprep.subr.mxu0 0.0
      %2237 = vmatpush2.msra.mxu0 0.0
      %2238 = vmatprep.mubr.f32.mxu0 0.0
      %2239 = vmatmul.mubr.f32.gmra.mxu0 %v2170
      %v2240 = vpop.f32.mrf.mxu0
      %v2241 = vadd.f32 0.0, %v2240
      %v2242 = vpop.f32.mrf.mxu0
      %2243 = vdwg.mxu0
      %v2245 = vsel %vm2092, %v2078, 0
      %v2247 = vsel %vm2096, %v641, 0
      %2249 = vmatprep.subr.mxu0 0.0
      %2250 = vmatpush1.msra.mxu0 0.0
      %2251 = vmatprep.subr.mxu0 0.0
      %2252 = vmatpush1.msra.mxu0 0.0
      %2253 = vmatprep.subr.mxu0 0.0
      %2254 = vmatpush1.msra.mxu0 0.0
      %2255 = vmatprep.subr.mxu0 0.0
      %2256 = vmatpush1.msra.mxu0 0.0
      %2257 = vmatprep.subr.mxu0 0.0
      %2258 = vmatpush1.msra.mxu0 0.0
      %2259 = vmatprep.subr.mxu0 0.0
      %2260 = vmatpush1.msra.mxu0 0.0
      %2261 = vmatprep.subr.mxu0 0.0
      %2262 = vmatpush1.msra.mxu0 0.0
      %2263 = vmatprep.subr.mxu0 0.0
      %2264 = vmatpush1.msra.mxu0 0.0
      %2265 = vmatprep.subr.mxu0 0.0
      %2266 = vmatpush1.msra.mxu0 0.0
      %2267 = vmatprep.subr.mxu0 0.0
      %2268 = vmatpush1.msra.mxu0 0.0
      %2269 = vmatprep.subr.mxu0 0.0
      %2270 = vmatpush1.msra.mxu0 0.0
      %2271 = vmatprep.subr.mxu0 0.0
      %2272 = vmatpush1.msra.mxu0 0.0
      %2273 = vmatprep.subr.mxu0 0.0
      %2274 = vmatpush1.msra.mxu0 0.0
      %2275 = vmatprep.subr.mxu0 0.0
      %2276 = vmatpush1.msra.mxu0 0.0
      %2277 = vmatprep.subr.mxu0 0.0
      %2278 = vmatpush1.msra.mxu0 0.0
      %2279 = vmatprep.subr.mxu0 0.0
      %2280 = vmatpush1.msra.mxu0 %v2247
      %2281 = vmatprep.subr.mxu0 0.0
      %2282 = vmatpush2.msra.mxu0 0.0
      %2283 = vmatprep.subr.mxu0 0.0
      %2284 = vmatpush2.msra.mxu0 0.0
      %2285 = vmatprep.subr.mxu0 0.0
      %2286 = vmatpush2.msra.mxu0 0.0
      %2287 = vmatprep.subr.mxu0 0.0
      %2288 = vmatpush2.msra.mxu0 0.0
      %2289 = vmatprep.subr.mxu0 0.0
      %2290 = vmatpush2.msra.mxu0 0.0
      %2291 = vmatprep.subr.mxu0 0.0
      %2292 = vmatpush2.msra.mxu0 0.0
      %2293 = vmatprep.subr.mxu0 0.0
      %2294 = vmatpush2.msra.mxu0 0.0
      %2295 = vmatprep.subr.mxu0 0.0
      %2296 = vmatpush2.msra.mxu0 0.0
      %2297 = vmatprep.subr.mxu0 0.0
      %2298 = vmatpush2.msra.mxu0 0.0
      %2299 = vmatprep.subr.mxu0 0.0
      %2300 = vmatpush2.msra.mxu0 0.0
      %2301 = vmatprep.subr.mxu0 0.0
      %2302 = vmatpush2.msra.mxu0 0.0
      %2303 = vmatprep.subr.mxu0 0.0
      %2304 = vmatpush2.msra.mxu0 0.0
      %2305 = vmatprep.subr.mxu0 0.0
      %2306 = vmatpush2.msra.mxu0 0.0
      %2307 = vmatprep.subr.mxu0 0.0
      %2308 = vmatpush2.msra.mxu0 0.0
      %2309 = vmatprep.subr.mxu0 0.0
      %2310 = vmatpush2.msra.mxu0 0.0
      %2311 = vmatprep.subr.mxu0 0.0
      %2312 = vmatpush2.msra.mxu0 0.0
      %2313 = vmatprep.mubr.f32.mxu0 0.0
      %2314 = vmatmul.mubr.f32.gmra.mxu0 %v2245
      %v2315 = vpop.f32.mrf.mxu0
      %v2316 = vadd.f32 0.0, %v2315
      %v2317 = vpop.f32.mrf.mxu0
      %2318 = vdwg.mxu0
      %v2320 = vsel %vm2092, %v2079, 0
      %v2322 = vsel %vm2096, %v657, 0
      %2324 = vmatprep.subr.mxu0 0.0
      %2325 = vmatpush1.msra.mxu0 0.0
      %2326 = vmatprep.subr.mxu0 0.0
      %2327 = vmatpush1.msra.mxu0 0.0
      %2328 = vmatprep.subr.mxu0 0.0
      %2329 = vmatpush1.msra.mxu0 0.0
      %2330 = vmatprep.subr.mxu0 0.0
      %2331 = vmatpush1.msra.mxu0 0.0
      %2332 = vmatprep.subr.mxu0 0.0
      %2333 = vmatpush1.msra.mxu0 0.0
      %2334 = vmatprep.subr.mxu0 0.0
      %2335 = vmatpush1.msra.mxu0 0.0
      %2336 = vmatprep.subr.mxu0 0.0
      %2337 = vmatpush1.msra.mxu0 0.0
      %2338 = vmatprep.subr.mxu0 0.0
      %2339 = vmatpush1.msra.mxu0 0.0
      %2340 = vmatprep.subr.mxu0 0.0
      %2341 = vmatpush1.msra.mxu0 0.0
      %2342 = vmatprep.subr.mxu0 0.0
      %2343 = vmatpush1.msra.mxu0 0.0
      %2344 = vmatprep.subr.mxu0 0.0
      %2345 = vmatpush1.msra.mxu0 0.0
      %2346 = vmatprep.subr.mxu0 0.0
      %2347 = vmatpush1.msra.mxu0 0.0
      %2348 = vmatprep.subr.mxu0 0.0
      %2349 = vmatpush1.msra.mxu0 0.0
      %2350 = vmatprep.subr.mxu0 0.0
      %2351 = vmatpush1.msra.mxu0 0.0
      %2352 = vmatprep.subr.mxu0 0.0
      %2353 = vmatpush1.msra.mxu0 0.0
      %2354 = vmatprep.subr.mxu0 0.0
      %2355 = vmatpush1.msra.mxu0 %v2322
      %2356 = vmatprep.subr.mxu0 0.0
      %2357 = vmatpush2.msra.mxu0 0.0
      %2358 = vmatprep.subr.mxu0 0.0
      %2359 = vmatpush2.msra.mxu0 0.0
      %2360 = vmatprep.subr.mxu0 0.0
      %2361 = vmatpush2.msra.mxu0 0.0
      %2362 = vmatprep.subr.mxu0 0.0
      %2363 = vmatpush2.msra.mxu0 0.0
      %2364 = vmatprep.subr.mxu0 0.0
      %2365 = vmatpush2.msra.mxu0 0.0
      %2366 = vmatprep.subr.mxu0 0.0
      %2367 = vmatpush2.msra.mxu0 0.0
      %2368 = vmatprep.subr.mxu0 0.0
      %2369 = vmatpush2.msra.mxu0 0.0
      %2370 = vmatprep.subr.mxu0 0.0
      %2371 = vmatpush2.msra.mxu0 0.0
      %2372 = vmatprep.subr.mxu0 0.0
      %2373 = vmatpush2.msra.mxu0 0.0
      %2374 = vmatprep.subr.mxu0 0.0
      %2375 = vmatpush2.msra.mxu0 0.0
      %2376 = vmatprep.subr.mxu0 0.0
      %2377 = vmatpush2.msra.mxu0 0.0
      %2378 = vmatprep.subr.mxu0 0.0
      %2379 = vmatpush2.msra.mxu0 0.0
      %2380 = vmatprep.subr.mxu0 0.0
      %2381 = vmatpush2.msra.mxu0 0.0
      %2382 = vmatprep.subr.mxu0 0.0
      %2383 = vmatpush2.msra.mxu0 0.0
      %2384 = vmatprep.subr.mxu0 0.0
      %2385 = vmatpush2.msra.mxu0 0.0
      %2386 = vmatprep.subr.mxu0 0.0
      %2387 = vmatpush2.msra.mxu0 0.0
      %2388 = vmatprep.mubr.f32.mxu0 0.0
      %2389 = vmatmul.mubr.f32.gmra.mxu0 %v2320
      %v2390 = vpop.f32.mrf.mxu0
      %v2391 = vadd.f32 0.0, %v2390
      %v2392 = vpop.f32.mrf.mxu0
      %2393 = vdwg.mxu0
      %v2395 = vsel %vm2092, %v2080, 0
      %v2397 = vsel %vm2096, %v1892, 0
      %2399 = vmatprep.subr.mxu0 0.0
      %2400 = vmatpush1.msra.mxu0 0.0
      %2401 = vmatprep.subr.mxu0 0.0
      %2402 = vmatpush1.msra.mxu0 0.0
      %2403 = vmatprep.subr.mxu0 0.0
      %2404 = vmatpush1.msra.mxu0 0.0
      %2405 = vmatprep.subr.mxu0 0.0
      %2406 = vmatpush1.msra.mxu0 0.0
      %2407 = vmatprep.subr.mxu0 0.0
      %2408 = vmatpush1.msra.mxu0 0.0
      %2409 = vmatprep.subr.mxu0 0.0
      %2410 = vmatpush1.msra.mxu0 0.0
      %2411 = vmatprep.subr.mxu0 0.0
      %2412 = vmatpush1.msra.mxu0 0.0
      %2413 = vmatprep.subr.mxu0 0.0
      %2414 = vmatpush1.msra.mxu0 0.0
      %2415 = vmatprep.subr.mxu0 0.0
      %2416 = vmatpush1.msra.mxu0 0.0
      %2417 = vmatprep.subr.mxu0 0.0
      %2418 = vmatpush1.msra.mxu0 0.0
      %2419 = vmatprep.subr.mxu0 0.0
      %2420 = vmatpush1.msra.mxu0 0.0
      %2421 = vmatprep.subr.mxu0 0.0
      %2422 = vmatpush1.msra.mxu0 0.0
      %2423 = vmatprep.subr.mxu0 0.0
      %2424 = vmatpush1.msra.mxu0 0.0
      %2425 = vmatprep.subr.mxu0 0.0
      %2426 = vmatpush1.msra.mxu0 0.0
      %2427 = vmatprep.subr.mxu0 0.0
      %2428 = vmatpush1.msra.mxu0 0.0
      %2429 = vmatprep.subr.mxu0 0.0
      %2430 = vmatpush1.msra.mxu0 %v2397
      %2431 = vmatprep.subr.mxu0 0.0
      %2432 = vmatpush2.msra.mxu0 0.0
      %2433 = vmatprep.subr.mxu0 0.0
      %2434 = vmatpush2.msra.mxu0 0.0
      %2435 = vmatprep.subr.mxu0 0.0
      %2436 = vmatpush2.msra.mxu0 0.0
      %2437 = vmatprep.subr.mxu0 0.0
      %2438 = vmatpush2.msra.mxu0 0.0
      %2439 = vmatprep.subr.mxu0 0.0
      %2440 = vmatpush2.msra.mxu0 0.0
      %2441 = vmatprep.subr.mxu0 0.0
      %2442 = vmatpush2.msra.mxu0 0.0
      %2443 = vmatprep.subr.mxu0 0.0
      %2444 = vmatpush2.msra.mxu0 0.0
      %2445 = vmatprep.subr.mxu0 0.0
      %2446 = vmatpush2.msra.mxu0 0.0
      %2447 = vmatprep.subr.mxu0 0.0
      %2448 = vmatpush2.msra.mxu0 0.0
      %2449 = vmatprep.subr.mxu0 0.0
      %2450 = vmatpush2.msra.mxu0 0.0
      %2451 = vmatprep.subr.mxu0 0.0
      %2452 = vmatpush2.msra.mxu0 0.0
      %2453 = vmatprep.subr.mxu0 0.0
      %2454 = vmatpush2.msra.mxu0 0.0
      %2455 = vmatprep.subr.mxu0 0.0
      %2456 = vmatpush2.msra.mxu0 0.0
      %2457 = vmatprep.subr.mxu0 0.0
      %2458 = vmatpush2.msra.mxu0 0.0
      %2459 = vmatprep.subr.mxu0 0.0
      %2460 = vmatpush2.msra.mxu0 0.0
      %2461 = vmatprep.subr.mxu0 0.0
      %2462 = vmatpush2.msra.mxu0 0.0
      %2463 = vmatprep.mubr.f32.mxu0 0.0
      %2464 = vmatmul.mubr.f32.gmra.mxu0 %v2395
      %v2465 = vpop.f32.mrf.mxu0
      %v2466 = vadd.f32 0.0, %v2465
      %v2467 = vpop.f32.mrf.mxu0
      %2468 = vdwg.mxu0
      %v2470 = vsel %vm2092, %v2081, 0
      %v2472 = vsel %vm2096, %v1894, 0
      %2474 = vmatprep.subr.mxu0 0.0
      %2475 = vmatpush1.msra.mxu0 0.0
      %2476 = vmatprep.subr.mxu0 0.0
      %2477 = vmatpush1.msra.mxu0 0.0
      %2478 = vmatprep.subr.mxu0 0.0
      %2479 = vmatpush1.msra.mxu0 0.0
      %2480 = vmatprep.subr.mxu0 0.0
      %2481 = vmatpush1.msra.mxu0 0.0
      %2482 = vmatprep.subr.mxu0 0.0
      %2483 = vmatpush1.msra.mxu0 0.0
      %2484 = vmatprep.subr.mxu0 0.0
      %2485 = vmatpush1.msra.mxu0 0.0
      %2486 = vmatprep.subr.mxu0 0.0
      %2487 = vmatpush1.msra.mxu0 0.0
      %2488 = vmatprep.subr.mxu0 0.0
      %2489 = vmatpush1.msra.mxu0 0.0
      %2490 = vmatprep.subr.mxu0 0.0
      %2491 = vmatpush1.msra.mxu0 0.0
      %2492 = vmatprep.subr.mxu0 0.0
      %2493 = vmatpush1.msra.mxu0 0.0
      %2494 = vmatprep.subr.mxu0 0.0
      %2495 = vmatpush1.msra.mxu0 0.0
      %2496 = vmatprep.subr.mxu0 0.0
      %2497 = vmatpush1.msra.mxu0 0.0
      %2498 = vmatprep.subr.mxu0 0.0
      %2499 = vmatpush1.msra.mxu0 0.0
      %2500 = vmatprep.subr.mxu0 0.0
      %2501 = vmatpush1.msra.mxu0 0.0
      %2502 = vmatprep.subr.mxu0 0.0
      %2503 = vmatpush1.msra.mxu0 0.0
      %2504 = vmatprep.subr.mxu0 0.0
      %2505 = vmatpush1.msra.mxu0 %v2472
      %2506 = vmatprep.subr.mxu0 0.0
      %2507 = vmatpush2.msra.mxu0 0.0
      %2508 = vmatprep.subr.mxu0 0.0
      %2509 = vmatpush2.msra.mxu0 0.0
      %2510 = vmatprep.subr.mxu0 0.0
      %2511 = vmatpush2.msra.mxu0 0.0
      %2512 = vmatprep.subr.mxu0 0.0
      %2513 = vmatpush2.msra.mxu0 0.0
      %2514 = vmatprep.subr.mxu0 0.0
      %2515 = vmatpush2.msra.mxu0 0.0
      %2516 = vmatprep.subr.mxu0 0.0
      %2517 = vmatpush2.msra.mxu0 0.0
      %2518 = vmatprep.subr.mxu0 0.0
      %2519 = vmatpush2.msra.mxu0 0.0
      %2520 = vmatprep.subr.mxu0 0.0
      %2521 = vmatpush2.msra.mxu0 0.0
      %2522 = vmatprep.subr.mxu0 0.0
      %2523 = vmatpush2.msra.mxu0 0.0
      %2524 = vmatprep.subr.mxu0 0.0
      %2525 = vmatpush2.msra.mxu0 0.0
      %2526 = vmatprep.subr.mxu0 0.0
      %2527 = vmatpush2.msra.mxu0 0.0
      %2528 = vmatprep.subr.mxu0 0.0
      %2529 = vmatpush2.msra.mxu0 0.0
      %2530 = vmatprep.subr.mxu0 0.0
      %2531 = vmatpush2.msra.mxu0 0.0
      %2532 = vmatprep.subr.mxu0 0.0
      %2533 = vmatpush2.msra.mxu0 0.0
      %2534 = vmatprep.subr.mxu0 0.0
      %2535 = vmatpush2.msra.mxu0 0.0
      %2536 = vmatprep.subr.mxu0 0.0
      %2537 = vmatpush2.msra.mxu0 0.0
      %2538 = vmatprep.mubr.f32.mxu0 0.0
      %2539 = vmatmul.mubr.f32.gmra.mxu0 %v2470
      %v2540 = vpop.f32.mrf.mxu0
      %v2541 = vadd.f32 0.0, %v2540
      %v2542 = vpop.f32.mrf.mxu0
      %2543 = vdwg.mxu0
      %v2545 = vsel %vm2092, %v2082, 0
      %v2547 = vsel %vm2096, %v1896, 0
      %2549 = vmatprep.subr.mxu0 0.0
      %2550 = vmatpush1.msra.mxu0 0.0
      %2551 = vmatprep.subr.mxu0 0.0
      %2552 = vmatpush1.msra.mxu0 0.0
      %2553 = vmatprep.subr.mxu0 0.0
      %2554 = vmatpush1.msra.mxu0 0.0
      %2555 = vmatprep.subr.mxu0 0.0
      %2556 = vmatpush1.msra.mxu0 0.0
      %2557 = vmatprep.subr.mxu0 0.0
      %2558 = vmatpush1.msra.mxu0 0.0
      %2559 = vmatprep.subr.mxu0 0.0
      %2560 = vmatpush1.msra.mxu0 0.0
      %2561 = vmatprep.subr.mxu0 0.0
      %2562 = vmatpush1.msra.mxu0 0.0
      %2563 = vmatprep.subr.mxu0 0.0
      %2564 = vmatpush1.msra.mxu0 0.0
      %2565 = vmatprep.subr.mxu0 0.0
      %2566 = vmatpush1.msra.mxu0 0.0
      %2567 = vmatprep.subr.mxu0 0.0
      %2568 = vmatpush1.msra.mxu0 0.0
      %2569 = vmatprep.subr.mxu0 0.0
      %2570 = vmatpush1.msra.mxu0 0.0
      %2571 = vmatprep.subr.mxu0 0.0
      %2572 = vmatpush1.msra.mxu0 0.0
      %2573 = vmatprep.subr.mxu0 0.0
      %2574 = vmatpush1.msra.mxu0 0.0
      %2575 = vmatprep.subr.mxu0 0.0
      %2576 = vmatpush1.msra.mxu0 0.0
      %2577 = vmatprep.subr.mxu0 0.0
      %2578 = vmatpush1.msra.mxu0 0.0
      %2579 = vmatprep.subr.mxu0 0.0
      %2580 = vmatpush1.msra.mxu0 %v2547
      %2581 = vmatprep.subr.mxu0 0.0
      %2582 = vmatpush2.msra.mxu0 0.0
      %2583 = vmatprep.subr.mxu0 0.0
      %2584 = vmatpush2.msra.mxu0 0.0
      %2585 = vmatprep.subr.mxu0 0.0
      %2586 = vmatpush2.msra.mxu0 0.0
      %2587 = vmatprep.subr.mxu0 0.0
      %2588 = vmatpush2.msra.mxu0 0.0
      %2589 = vmatprep.subr.mxu0 0.0
      %2590 = vmatpush2.msra.mxu0 0.0
      %2591 = vmatprep.subr.mxu0 0.0
      %2592 = vmatpush2.msra.mxu0 0.0
      %2593 = vmatprep.subr.mxu0 0.0
      %2594 = vmatpush2.msra.mxu0 0.0
      %2595 = vmatprep.subr.mxu0 0.0
      %2596 = vmatpush2.msra.mxu0 0.0
      %2597 = vmatprep.subr.mxu0 0.0
      %2598 = vmatpush2.msra.mxu0 0.0
      %2599 = vmatprep.subr.mxu0 0.0
      %2600 = vmatpush2.msra.mxu0 0.0
      %2601 = vmatprep.subr.mxu0 0.0
      %2602 = vmatpush2.msra.mxu0 0.0
      %2603 = vmatprep.subr.mxu0 0.0
      %2604 = vmatpush2.msra.mxu0 0.0
      %2605 = vmatprep.subr.mxu0 0.0
      %2606 = vmatpush2.msra.mxu0 0.0
      %2607 = vmatprep.subr.mxu0 0.0
      %2608 = vmatpush2.msra.mxu0 0.0
      %2609 = vmatprep.subr.mxu0 0.0
      %2610 = vmatpush2.msra.mxu0 0.0
      %2611 = vmatprep.subr.mxu0 0.0
      %2612 = vmatpush2.msra.mxu0 0.0
      %2613 = vmatprep.mubr.f32.mxu0 0.0
      %2614 = vmatmul.mubr.f32.gmra.mxu0 %v2545
      %v2615 = vpop.f32.mrf.mxu0
      %v2616 = vadd.f32 0.0, %v2615
      %v2617 = vpop.f32.mrf.mxu0
      %2618 = vdwg.mxu0
      %v2620 = vsel %vm2092, %v2083, 0
      %v2622 = vsel %vm2096, %v1898, 0
      %2624 = vmatprep.subr.mxu0 0.0
      %2625 = vmatpush1.msra.mxu0 0.0
      %2626 = vmatprep.subr.mxu0 0.0
      %2627 = vmatpush1.msra.mxu0 0.0
      %2628 = vmatprep.subr.mxu0 0.0
      %2629 = vmatpush1.msra.mxu0 0.0
      %2630 = vmatprep.subr.mxu0 0.0
      %2631 = vmatpush1.msra.mxu0 0.0
      %2632 = vmatprep.subr.mxu0 0.0
      %2633 = vmatpush1.msra.mxu0 0.0
      %2634 = vmatprep.subr.mxu0 0.0
      %2635 = vmatpush1.msra.mxu0 0.0
      %2636 = vmatprep.subr.mxu0 0.0
      %2637 = vmatpush1.msra.mxu0 0.0
      %2638 = vmatprep.subr.mxu0 0.0
      %2639 = vmatpush1.msra.mxu0 0.0
      %2640 = vmatprep.subr.mxu0 0.0
      %2641 = vmatpush1.msra.mxu0 0.0
      %2642 = vmatprep.subr.mxu0 0.0
      %2643 = vmatpush1.msra.mxu0 0.0
      %2644 = vmatprep.subr.mxu0 0.0
      %2645 = vmatpush1.msra.mxu0 0.0
      %2646 = vmatprep.subr.mxu0 0.0
      %2647 = vmatpush1.msra.mxu0 0.0
      %2648 = vmatprep.subr.mxu0 0.0
      %2649 = vmatpush1.msra.mxu0 0.0
      %2650 = vmatprep.subr.mxu0 0.0
      %2651 = vmatpush1.msra.mxu0 0.0
      %2652 = vmatprep.subr.mxu0 0.0
      %2653 = vmatpush1.msra.mxu0 0.0
      %2654 = vmatprep.subr.mxu0 0.0
      %2655 = vmatpush1.msra.mxu0 %v2622
      %2656 = vmatprep.subr.mxu0 0.0
      %2657 = vmatpush2.msra.mxu0 0.0
      %2658 = vmatprep.subr.mxu0 0.0
      %2659 = vmatpush2.msra.mxu0 0.0
      %2660 = vmatprep.subr.mxu0 0.0
      %2661 = vmatpush2.msra.mxu0 0.0
      %2662 = vmatprep.subr.mxu0 0.0
      %2663 = vmatpush2.msra.mxu0 0.0
      %2664 = vmatprep.subr.mxu0 0.0
      %2665 = vmatpush2.msra.mxu0 0.0
      %2666 = vmatprep.subr.mxu0 0.0
      %2667 = vmatpush2.msra.mxu0 0.0
      %2668 = vmatprep.subr.mxu0 0.0
      %2669 = vmatpush2.msra.mxu0 0.0
      %2670 = vmatprep.subr.mxu0 0.0
      %2671 = vmatpush2.msra.mxu0 0.0
      %2672 = vmatprep.subr.mxu0 0.0
      %2673 = vmatpush2.msra.mxu0 0.0
      %2674 = vmatprep.subr.mxu0 0.0
      %2675 = vmatpush2.msra.mxu0 0.0
      %2676 = vmatprep.subr.mxu0 0.0
      %2677 = vmatpush2.msra.mxu0 0.0
      %2678 = vmatprep.subr.mxu0 0.0
      %2679 = vmatpush2.msra.mxu0 0.0
      %2680 = vmatprep.subr.mxu0 0.0
      %2681 = vmatpush2.msra.mxu0 0.0
      %2682 = vmatprep.subr.mxu0 0.0
      %2683 = vmatpush2.msra.mxu0 0.0
      %2684 = vmatprep.subr.mxu0 0.0
      %2685 = vmatpush2.msra.mxu0 0.0
      %2686 = vmatprep.subr.mxu0 0.0
      %2687 = vmatpush2.msra.mxu0 0.0
      %2688 = vmatprep.mubr.f32.mxu0 0.0
      %2689 = vmatmul.mubr.f32.gmra.mxu0 %v2620
      %v2690 = vpop.f32.mrf.mxu0
      %v2691 = vadd.f32 0.0, %v2690
      %v2692 = vpop.f32.mrf.mxu0
      %2693 = vdwg.mxu0
      %v2695 = vsel %vm2092, %v2084, 0
      %v2697 = vsel %vm2096, %v1900, 0
      %2699 = vmatprep.subr.mxu0 0.0
      %2700 = vmatpush1.msra.mxu0 0.0
      %2701 = vmatprep.subr.mxu0 0.0
      %2702 = vmatpush1.msra.mxu0 0.0
      %2703 = vmatprep.subr.mxu0 0.0
      %2704 = vmatpush1.msra.mxu0 0.0
      %2705 = vmatprep.subr.mxu0 0.0
      %2706 = vmatpush1.msra.mxu0 0.0
      %2707 = vmatprep.subr.mxu0 0.0
      %2708 = vmatpush1.msra.mxu0 0.0
      %2709 = vmatprep.subr.mxu0 0.0
      %2710 = vmatpush1.msra.mxu0 0.0
      %2711 = vmatprep.subr.mxu0 0.0
      %2712 = vmatpush1.msra.mxu0 0.0
      %2713 = vmatprep.subr.mxu0 0.0
      %2714 = vmatpush1.msra.mxu0 0.0
      %2715 = vmatprep.subr.mxu0 0.0
      %2716 = vmatpush1.msra.mxu0 0.0
      %2717 = vmatprep.subr.mxu0 0.0
      %2718 = vmatpush1.msra.mxu0 0.0
      %2719 = vmatprep.subr.mxu0 0.0
      %2720 = vmatpush1.msra.mxu0 0.0
      %2721 = vmatprep.subr.mxu0 0.0
      %2722 = vmatpush1.msra.mxu0 0.0
      %2723 = vmatprep.subr.mxu0 0.0
      %2724 = vmatpush1.msra.mxu0 0.0
      %2725 = vmatprep.subr.mxu0 0.0
      %2726 = vmatpush1.msra.mxu0 0.0
      %2727 = vmatprep.subr.mxu0 0.0
      %2728 = vmatpush1.msra.mxu0 0.0
      %2729 = vmatprep.subr.mxu0 0.0
      %2730 = vmatpush1.msra.mxu0 %v2697
      %2731 = vmatprep.subr.mxu0 0.0
      %2732 = vmatpush2.msra.mxu0 0.0
      %2733 = vmatprep.subr.mxu0 0.0
      %2734 = vmatpush2.msra.mxu0 0.0
      %2735 = vmatprep.subr.mxu0 0.0
      %2736 = vmatpush2.msra.mxu0 0.0
      %2737 = vmatprep.subr.mxu0 0.0
      %2738 = vmatpush2.msra.mxu0 0.0
      %2739 = vmatprep.subr.mxu0 0.0
      %2740 = vmatpush2.msra.mxu0 0.0
      %2741 = vmatprep.subr.mxu0 0.0
      %2742 = vmatpush2.msra.mxu0 0.0
      %2743 = vmatprep.subr.mxu0 0.0
      %2744 = vmatpush2.msra.mxu0 0.0
      %2745 = vmatprep.subr.mxu0 0.0
      %2746 = vmatpush2.msra.mxu0 0.0
      %2747 = vmatprep.subr.mxu0 0.0
      %2748 = vmatpush2.msra.mxu0 0.0
      %2749 = vmatprep.subr.mxu0 0.0
      %2750 = vmatpush2.msra.mxu0 0.0
      %2751 = vmatprep.subr.mxu0 0.0
      %2752 = vmatpush2.msra.mxu0 0.0
      %2753 = vmatprep.subr.mxu0 0.0
      %2754 = vmatpush2.msra.mxu0 0.0
      %2755 = vmatprep.subr.mxu0 0.0
      %2756 = vmatpush2.msra.mxu0 0.0
      %2757 = vmatprep.subr.mxu0 0.0
      %2758 = vmatpush2.msra.mxu0 0.0
      %2759 = vmatprep.subr.mxu0 0.0
      %2760 = vmatpush2.msra.mxu0 0.0
      %2761 = vmatprep.subr.mxu0 0.0
      %2762 = vmatpush2.msra.mxu0 0.0
      %2763 = vmatprep.mubr.f32.mxu0 0.0
      %2764 = vmatmul.mubr.f32.gmra.mxu0 %v2695
      %v2765 = vpop.f32.mrf.mxu0
      %v2766 = vadd.f32 0.0, %v2765
      %v2767 = vpop.f32.mrf.mxu0
      %2768 = vdwg.mxu0
      %v2770 = vsel %vm2092, %v2085, 0
      %v2772 = vsel %vm2096, %v1902, 0
      %2774 = vmatprep.subr.mxu0 0.0
      %2775 = vmatpush1.msra.mxu0 0.0
      %2776 = vmatprep.subr.mxu0 0.0
      %2777 = vmatpush1.msra.mxu0 0.0
      %2778 = vmatprep.subr.mxu0 0.0
      %2779 = vmatpush1.msra.mxu0 0.0
      %2780 = vmatprep.subr.mxu0 0.0
      %2781 = vmatpush1.msra.mxu0 0.0
      %2782 = vmatprep.subr.mxu0 0.0
      %2783 = vmatpush1.msra.mxu0 0.0
      %2784 = vmatprep.subr.mxu0 0.0
      %2785 = vmatpush1.msra.mxu0 0.0
      %2786 = vmatprep.subr.mxu0 0.0
      %2787 = vmatpush1.msra.mxu0 0.0
      %2788 = vmatprep.subr.mxu0 0.0
      %2789 = vmatpush1.msra.mxu0 0.0
      %2790 = vmatprep.subr.mxu0 0.0
      %2791 = vmatpush1.msra.mxu0 0.0
      %2792 = vmatprep.subr.mxu0 0.0
      %2793 = vmatpush1.msra.mxu0 0.0
      %2794 = vmatprep.subr.mxu0 0.0
      %2795 = vmatpush1.msra.mxu0 0.0
      %2796 = vmatprep.subr.mxu0 0.0
      %2797 = vmatpush1.msra.mxu0 0.0
      %2798 = vmatprep.subr.mxu0 0.0
      %2799 = vmatpush1.msra.mxu0 0.0
      %2800 = vmatprep.subr.mxu0 0.0
      %2801 = vmatpush1.msra.mxu0 0.0
      %2802 = vmatprep.subr.mxu0 0.0
      %2803 = vmatpush1.msra.mxu0 0.0
      %2804 = vmatprep.subr.mxu0 0.0
      %2805 = vmatpush1.msra.mxu0 %v2772
      %2806 = vmatprep.subr.mxu0 0.0
      %2807 = vmatpush2.msra.mxu0 0.0
      %2808 = vmatprep.subr.mxu0 0.0
      %2809 = vmatpush2.msra.mxu0 0.0
      %2810 = vmatprep.subr.mxu0 0.0
      %2811 = vmatpush2.msra.mxu0 0.0
      %2812 = vmatprep.subr.mxu0 0.0
      %2813 = vmatpush2.msra.mxu0 0.0
      %2814 = vmatprep.subr.mxu0 0.0
      %2815 = vmatpush2.msra.mxu0 0.0
      %2816 = vmatprep.subr.mxu0 0.0
      %2817 = vmatpush2.msra.mxu0 0.0
      %2818 = vmatprep.subr.mxu0 0.0
      %2819 = vmatpush2.msra.mxu0 0.0
      %2820 = vmatprep.subr.mxu0 0.0
      %2821 = vmatpush2.msra.mxu0 0.0
      %2822 = vmatprep.subr.mxu0 0.0
      %2823 = vmatpush2.msra.mxu0 0.0
      %2824 = vmatprep.subr.mxu0 0.0
      %2825 = vmatpush2.msra.mxu0 0.0
      %2826 = vmatprep.subr.mxu0 0.0
      %2827 = vmatpush2.msra.mxu0 0.0
      %2828 = vmatprep.subr.mxu0 0.0
      %2829 = vmatpush2.msra.mxu0 0.0
      %2830 = vmatprep.subr.mxu0 0.0
      %2831 = vmatpush2.msra.mxu0 0.0
      %2832 = vmatprep.subr.mxu0 0.0
      %2833 = vmatpush2.msra.mxu0 0.0
      %2834 = vmatprep.subr.mxu0 0.0
      %2835 = vmatpush2.msra.mxu0 0.0
      %2836 = vmatprep.subr.mxu0 0.0
      %2837 = vmatpush2.msra.mxu0 0.0
      %2838 = vmatprep.mubr.f32.mxu0 0.0
      %2839 = vmatmul.mubr.f32.gmra.mxu0 %v2770
      %v2840 = vpop.f32.mrf.mxu0
      %v2841 = vadd.f32 0.0, %v2840
      %v2842 = vpop.f32.mrf.mxu0
      %2843 = vdwg.mxu0
      %v2845 = vsel %vm2092, %v2086, 0
      %v2847 = vsel %vm2096, %v1904, 0
      %2849 = vmatprep.subr.mxu0 0.0
      %2850 = vmatpush1.msra.mxu0 0.0
      %2851 = vmatprep.subr.mxu0 0.0
      %2852 = vmatpush1.msra.mxu0 0.0
      %2853 = vmatprep.subr.mxu0 0.0
      %2854 = vmatpush1.msra.mxu0 0.0
      %2855 = vmatprep.subr.mxu0 0.0
      %2856 = vmatpush1.msra.mxu0 0.0
      %2857 = vmatprep.subr.mxu0 0.0
      %2858 = vmatpush1.msra.mxu0 0.0
      %2859 = vmatprep.subr.mxu0 0.0
      %2860 = vmatpush1.msra.mxu0 0.0
      %2861 = vmatprep.subr.mxu0 0.0
      %2862 = vmatpush1.msra.mxu0 0.0
      %2863 = vmatprep.subr.mxu0 0.0
      %2864 = vmatpush1.msra.mxu0 0.0
      %2865 = vmatprep.subr.mxu0 0.0
      %2866 = vmatpush1.msra.mxu0 0.0
      %2867 = vmatprep.subr.mxu0 0.0
      %2868 = vmatpush1.msra.mxu0 0.0
      %2869 = vmatprep.subr.mxu0 0.0
      %2870 = vmatpush1.msra.mxu0 0.0
      %2871 = vmatprep.subr.mxu0 0.0
      %2872 = vmatpush1.msra.mxu0 0.0
      %2873 = vmatprep.subr.mxu0 0.0
      %2874 = vmatpush1.msra.mxu0 0.0
      %2875 = vmatprep.subr.mxu0 0.0
      %2876 = vmatpush1.msra.mxu0 0.0
      %2877 = vmatprep.subr.mxu0 0.0
      %2878 = vmatpush1.msra.mxu0 0.0
      %2879 = vmatprep.subr.mxu0 0.0
      %2880 = vmatpush1.msra.mxu0 %v2847
      %2881 = vmatprep.subr.mxu0 0.0
      %2882 = vmatpush2.msra.mxu0 0.0
      %2883 = vmatprep.subr.mxu0 0.0
      %2884 = vmatpush2.msra.mxu0 0.0
      %2885 = vmatprep.subr.mxu0 0.0
      %2886 = vmatpush2.msra.mxu0 0.0
      %2887 = vmatprep.subr.mxu0 0.0
      %2888 = vmatpush2.msra.mxu0 0.0
      %2889 = vmatprep.subr.mxu0 0.0
      %2890 = vmatpush2.msra.mxu0 0.0
      %2891 = vmatprep.subr.mxu0 0.0
      %2892 = vmatpush2.msra.mxu0 0.0
      %2893 = vmatprep.subr.mxu0 0.0
      %2894 = vmatpush2.msra.mxu0 0.0
      %2895 = vmatprep.subr.mxu0 0.0
      %2896 = vmatpush2.msra.mxu0 0.0
      %2897 = vmatprep.subr.mxu0 0.0
      %2898 = vmatpush2.msra.mxu0 0.0
      %2899 = vmatprep.subr.mxu0 0.0
      %2900 = vmatpush2.msra.mxu0 0.0
      %2901 = vmatprep.subr.mxu0 0.0
      %2902 = vmatpush2.msra.mxu0 0.0
      %2903 = vmatprep.subr.mxu0 0.0
      %2904 = vmatpush2.msra.mxu0 0.0
      %2905 = vmatprep.subr.mxu0 0.0
      %2906 = vmatpush2.msra.mxu0 0.0
      %2907 = vmatprep.subr.mxu0 0.0
      %2908 = vmatpush2.msra.mxu0 0.0
      %2909 = vmatprep.subr.mxu0 0.0
      %2910 = vmatpush2.msra.mxu0 0.0
      %2911 = vmatprep.subr.mxu0 0.0
      %2912 = vmatpush2.msra.mxu0 0.0
      %2913 = vmatprep.mubr.f32.mxu0 0.0
      %2914 = vmatmul.mubr.f32.gmra.mxu0 %v2845
      %v2915 = vpop.f32.mrf.mxu0
      %v2916 = vadd.f32 0.0, %v2915
      %v2917 = vpop.f32.mrf.mxu0
      %2918 = vdwg.mxu0
      %v2920 = vsel %vm2092, %v2087, 0
      %v2922 = vsel %vm2096, %v1906, 0
      %2924 = vmatprep.subr.mxu0 0.0
      %2925 = vmatpush1.msra.mxu0 0.0
      %2926 = vmatprep.subr.mxu0 0.0
      %2927 = vmatpush1.msra.mxu0 0.0
      %2928 = vmatprep.subr.mxu0 0.0
      %2929 = vmatpush1.msra.mxu0 0.0
      %2930 = vmatprep.subr.mxu0 0.0
      %2931 = vmatpush1.msra.mxu0 0.0
      %2932 = vmatprep.subr.mxu0 0.0
      %2933 = vmatpush1.msra.mxu0 0.0
      %2934 = vmatprep.subr.mxu0 0.0
      %2935 = vmatpush1.msra.mxu0 0.0
      %2936 = vmatprep.subr.mxu0 0.0
      %2937 = vmatpush1.msra.mxu0 0.0
      %2938 = vmatprep.subr.mxu0 0.0
      %2939 = vmatpush1.msra.mxu0 0.0
      %2940 = vmatprep.subr.mxu0 0.0
      %2941 = vmatpush1.msra.mxu0 0.0
      %2942 = vmatprep.subr.mxu0 0.0
      %2943 = vmatpush1.msra.mxu0 0.0
      %2944 = vmatprep.subr.mxu0 0.0
      %2945 = vmatpush1.msra.mxu0 0.0
      %2946 = vmatprep.subr.mxu0 0.0
      %2947 = vmatpush1.msra.mxu0 0.0
      %2948 = vmatprep.subr.mxu0 0.0
      %2949 = vmatpush1.msra.mxu0 0.0
      %2950 = vmatprep.subr.mxu0 0.0
      %2951 = vmatpush1.msra.mxu0 0.0
      %2952 = vmatprep.subr.mxu0 0.0
      %2953 = vmatpush1.msra.mxu0 0.0
      %2954 = vmatprep.subr.mxu0 0.0
      %2955 = vmatpush1.msra.mxu0 %v2922
      %2956 = vmatprep.subr.mxu0 0.0
      %2957 = vmatpush2.msra.mxu0 0.0
      %2958 = vmatprep.subr.mxu0 0.0
      %2959 = vmatpush2.msra.mxu0 0.0
      %2960 = vmatprep.subr.mxu0 0.0
      %2961 = vmatpush2.msra.mxu0 0.0
      %2962 = vmatprep.subr.mxu0 0.0
      %2963 = vmatpush2.msra.mxu0 0.0
      %2964 = vmatprep.subr.mxu0 0.0
      %2965 = vmatpush2.msra.mxu0 0.0
      %2966 = vmatprep.subr.mxu0 0.0
      %2967 = vmatpush2.msra.mxu0 0.0
      %2968 = vmatprep.subr.mxu0 0.0
      %2969 = vmatpush2.msra.mxu0 0.0
      %2970 = vmatprep.subr.mxu0 0.0
      %2971 = vmatpush2.msra.mxu0 0.0
      %2972 = vmatprep.subr.mxu0 0.0
      %2973 = vmatpush2.msra.mxu0 0.0
      %2974 = vmatprep.subr.mxu0 0.0
      %2975 = vmatpush2.msra.mxu0 0.0
      %2976 = vmatprep.subr.mxu0 0.0
      %2977 = vmatpush2.msra.mxu0 0.0
      %2978 = vmatprep.subr.mxu0 0.0
      %2979 = vmatpush2.msra.mxu0 0.0
      %2980 = vmatprep.subr.mxu0 0.0
      %2981 = vmatpush2.msra.mxu0 0.0
      %2982 = vmatprep.subr.mxu0 0.0
      %2983 = vmatpush2.msra.mxu0 0.0
      %2984 = vmatprep.subr.mxu0 0.0
      %2985 = vmatpush2.msra.mxu0 0.0
      %2986 = vmatprep.subr.mxu0 0.0
      %2987 = vmatpush2.msra.mxu0 0.0
      %2988 = vmatprep.mubr.f32.mxu0 0.0
      %2989 = vmatmul.mubr.f32.gmra.mxu0 %v2920
      %v2990 = vpop.f32.mrf.mxu0
      %v2991 = vadd.f32 0.0, %v2990
      %v2992 = vpop.f32.mrf.mxu0
      %2993 = vdwg.mxu0
      %v2995 = vsel %vm2092, %v2088, 0
      %v2997 = vsel %vm2096, %v1908, 0
      %2999 = vmatprep.subr.mxu0 0.0
      %3000 = vmatpush1.msra.mxu0 0.0
      %3001 = vmatprep.subr.mxu0 0.0
      %3002 = vmatpush1.msra.mxu0 0.0
      %3003 = vmatprep.subr.mxu0 0.0
      %3004 = vmatpush1.msra.mxu0 0.0
      %3005 = vmatprep.subr.mxu0 0.0
      %3006 = vmatpush1.msra.mxu0 0.0
      %3007 = vmatprep.subr.mxu0 0.0
      %3008 = vmatpush1.msra.mxu0 0.0
      %3009 = vmatprep.subr.mxu0 0.0
      %3010 = vmatpush1.msra.mxu0 0.0
      %3011 = vmatprep.subr.mxu0 0.0
      %3012 = vmatpush1.msra.mxu0 0.0
      %3013 = vmatprep.subr.mxu0 0.0
      %3014 = vmatpush1.msra.mxu0 0.0
      %3015 = vmatprep.subr.mxu0 0.0
      %3016 = vmatpush1.msra.mxu0 0.0
      %3017 = vmatprep.subr.mxu0 0.0
      %3018 = vmatpush1.msra.mxu0 0.0
      %3019 = vmatprep.subr.mxu0 0.0
      %3020 = vmatpush1.msra.mxu0 0.0
      %3021 = vmatprep.subr.mxu0 0.0
      %3022 = vmatpush1.msra.mxu0 0.0
      %3023 = vmatprep.subr.mxu0 0.0
      %3024 = vmatpush1.msra.mxu0 0.0
      %3025 = vmatprep.subr.mxu0 0.0
      %3026 = vmatpush1.msra.mxu0 0.0
      %3027 = vmatprep.subr.mxu0 0.0
      %3028 = vmatpush1.msra.mxu0 0.0
      %3029 = vmatprep.subr.mxu0 0.0
      %3030 = vmatpush1.msra.mxu0 %v2997
      %3031 = vmatprep.subr.mxu0 0.0
      %3032 = vmatpush2.msra.mxu0 0.0
      %3033 = vmatprep.subr.mxu0 0.0
      %3034 = vmatpush2.msra.mxu0 0.0
      %3035 = vmatprep.subr.mxu0 0.0
      %3036 = vmatpush2.msra.mxu0 0.0
      %3037 = vmatprep.subr.mxu0 0.0
      %3038 = vmatpush2.msra.mxu0 0.0
      %3039 = vmatprep.subr.mxu0 0.0
      %3040 = vmatpush2.msra.mxu0 0.0
      %3041 = vmatprep.subr.mxu0 0.0
      %3042 = vmatpush2.msra.mxu0 0.0
      %3043 = vmatprep.subr.mxu0 0.0
      %3044 = vmatpush2.msra.mxu0 0.0
      %3045 = vmatprep.subr.mxu0 0.0
      %3046 = vmatpush2.msra.mxu0 0.0
      %3047 = vmatprep.subr.mxu0 0.0
      %3048 = vmatpush2.msra.mxu0 0.0
      %3049 = vmatprep.subr.mxu0 0.0
      %3050 = vmatpush2.msra.mxu0 0.0
      %3051 = vmatprep.subr.mxu0 0.0
      %3052 = vmatpush2.msra.mxu0 0.0
      %3053 = vmatprep.subr.mxu0 0.0
      %3054 = vmatpush2.msra.mxu0 0.0
      %3055 = vmatprep.subr.mxu0 0.0
      %3056 = vmatpush2.msra.mxu0 0.0
      %3057 = vmatprep.subr.mxu0 0.0
      %3058 = vmatpush2.msra.mxu0 0.0
      %3059 = vmatprep.subr.mxu0 0.0
      %3060 = vmatpush2.msra.mxu0 0.0
      %3061 = vmatprep.subr.mxu0 0.0
      %3062 = vmatpush2.msra.mxu0 0.0
      %3063 = vmatprep.mubr.f32.mxu0 0.0
      %3064 = vmatmul.mubr.f32.gmra.mxu0 %v2995
      %v3065 = vpop.f32.mrf.mxu0
      %v3066 = vadd.f32 0.0, %v3065
      %v3067 = vpop.f32.mrf.mxu0
      %3068 = vdwg.mxu0
      %v3070 = vsel %vm2092, %v2089, 0
      %v3072 = vsel %vm2096, %v1910, 0
      %3074 = vmatprep.subr.mxu0 0.0
      %3075 = vmatpush1.msra.mxu0 0.0
      %3076 = vmatprep.subr.mxu0 0.0
      %3077 = vmatpush1.msra.mxu0 0.0
      %3078 = vmatprep.subr.mxu0 0.0
      %3079 = vmatpush1.msra.mxu0 0.0
      %3080 = vmatprep.subr.mxu0 0.0
      %3081 = vmatpush1.msra.mxu0 0.0
      %3082 = vmatprep.subr.mxu0 0.0
      %3083 = vmatpush1.msra.mxu0 0.0
      %3084 = vmatprep.subr.mxu0 0.0
      %3085 = vmatpush1.msra.mxu0 0.0
      %3086 = vmatprep.subr.mxu0 0.0
      %3087 = vmatpush1.msra.mxu0 0.0
      %3088 = vmatprep.subr.mxu0 0.0
      %3089 = vmatpush1.msra.mxu0 0.0
      %3090 = vmatprep.subr.mxu0 0.0
      %3091 = vmatpush1.msra.mxu0 0.0
      %3092 = vmatprep.subr.mxu0 0.0
      %3093 = vmatpush1.msra.mxu0 0.0
      %3094 = vmatprep.subr.mxu0 0.0
      %3095 = vmatpush1.msra.mxu0 0.0
      %3096 = vmatprep.subr.mxu0 0.0
      %3097 = vmatpush1.msra.mxu0 0.0
      %3098 = vmatprep.subr.mxu0 0.0
      %3099 = vmatpush1.msra.mxu0 0.0
      %3100 = vmatprep.subr.mxu0 0.0
      %3101 = vmatpush1.msra.mxu0 0.0
      %3102 = vmatprep.subr.mxu0 0.0
      %3103 = vmatpush1.msra.mxu0 0.0
      %3104 = vmatprep.subr.mxu0 0.0
      %3105 = vmatpush1.msra.mxu0 %v3072
      %3106 = vmatprep.subr.mxu0 0.0
      %3107 = vmatpush2.msra.mxu0 0.0
      %3108 = vmatprep.subr.mxu0 0.0
      %3109 = vmatpush2.msra.mxu0 0.0
      %3110 = vmatprep.subr.mxu0 0.0
      %3111 = vmatpush2.msra.mxu0 0.0
      %3112 = vmatprep.subr.mxu0 0.0
      %3113 = vmatpush2.msra.mxu0 0.0
      %3114 = vmatprep.subr.mxu0 0.0
      %3115 = vmatpush2.msra.mxu0 0.0
      %3116 = vmatprep.subr.mxu0 0.0
      %3117 = vmatpush2.msra.mxu0 0.0
      %3118 = vmatprep.subr.mxu0 0.0
      %3119 = vmatpush2.msra.mxu0 0.0
      %3120 = vmatprep.subr.mxu0 0.0
      %3121 = vmatpush2.msra.mxu0 0.0
      %3122 = vmatprep.subr.mxu0 0.0
      %3123 = vmatpush2.msra.mxu0 0.0
      %3124 = vmatprep.subr.mxu0 0.0
      %3125 = vmatpush2.msra.mxu0 0.0
      %3126 = vmatprep.subr.mxu0 0.0
      %3127 = vmatpush2.msra.mxu0 0.0
      %3128 = vmatprep.subr.mxu0 0.0
      %3129 = vmatpush2.msra.mxu0 0.0
      %3130 = vmatprep.subr.mxu0 0.0
      %3131 = vmatpush2.msra.mxu0 0.0
      %3132 = vmatprep.subr.mxu0 0.0
      %3133 = vmatpush2.msra.mxu0 0.0
      %3134 = vmatprep.subr.mxu0 0.0
      %3135 = vmatpush2.msra.mxu0 0.0
      %3136 = vmatprep.subr.mxu0 0.0
      %3137 = vmatpush2.msra.mxu0 0.0
      %3138 = vmatprep.mubr.f32.mxu0 0.0
      %3139 = vmatmul.mubr.f32.gmra.mxu0 %v3070
      %v3140 = vpop.f32.mrf.mxu0
      %v3141 = vadd.f32 0.0, %v3140
      %v3142 = vpop.f32.mrf.mxu0
      %3143 = vdwg.mxu0
      %v3145 = vsel %vm2092, %v2090, 0
      %v3147 = vsel %vm2096, %v1912, 0
      %3149 = vmatprep.subr.mxu0 0.0
      %3150 = vmatpush1.msra.mxu0 0.0
      %3151 = vmatprep.subr.mxu0 0.0
      %3152 = vmatpush1.msra.mxu0 0.0
      %3153 = vmatprep.subr.mxu0 0.0
      %3154 = vmatpush1.msra.mxu0 0.0
      %3155 = vmatprep.subr.mxu0 0.0
      %3156 = vmatpush1.msra.mxu0 0.0
      %3157 = vmatprep.subr.mxu0 0.0
      %3158 = vmatpush1.msra.mxu0 0.0
      %3159 = vmatprep.subr.mxu0 0.0
      %3160 = vmatpush1.msra.mxu0 0.0
      %3161 = vmatprep.subr.mxu0 0.0
      %3162 = vmatpush1.msra.mxu0 0.0
      %3163 = vmatprep.subr.mxu0 0.0
      %3164 = vmatpush1.msra.mxu0 0.0
      %3165 = vmatprep.subr.mxu0 0.0
      %3166 = vmatpush1.msra.mxu0 0.0
      %3167 = vmatprep.subr.mxu0 0.0
      %3168 = vmatpush1.msra.mxu0 0.0
      %3169 = vmatprep.subr.mxu0 0.0
      %3170 = vmatpush1.msra.mxu0 0.0
      %3171 = vmatprep.subr.mxu0 0.0
      %3172 = vmatpush1.msra.mxu0 0.0
      %3173 = vmatprep.subr.mxu0 0.0
      %3174 = vmatpush1.msra.mxu0 0.0
      %3175 = vmatprep.subr.mxu0 0.0
      %3176 = vmatpush1.msra.mxu0 0.0
      %3177 = vmatprep.subr.mxu0 0.0
      %3178 = vmatpush1.msra.mxu0 0.0
      %3179 = vmatprep.subr.mxu0 0.0
      %3180 = vmatpush1.msra.mxu0 %v3147
      %3181 = vmatprep.subr.mxu0 0.0
      %3182 = vmatpush2.msra.mxu0 0.0
      %3183 = vmatprep.subr.mxu0 0.0
      %3184 = vmatpush2.msra.mxu0 0.0
      %3185 = vmatprep.subr.mxu0 0.0
      %3186 = vmatpush2.msra.mxu0 0.0
      %3187 = vmatprep.subr.mxu0 0.0
      %3188 = vmatpush2.msra.mxu0 0.0
      %3189 = vmatprep.subr.mxu0 0.0
      %3190 = vmatpush2.msra.mxu0 0.0
      %3191 = vmatprep.subr.mxu0 0.0
      %3192 = vmatpush2.msra.mxu0 0.0
      %3193 = vmatprep.subr.mxu0 0.0
      %3194 = vmatpush2.msra.mxu0 0.0
      %3195 = vmatprep.subr.mxu0 0.0
      %3196 = vmatpush2.msra.mxu0 0.0
      %3197 = vmatprep.subr.mxu0 0.0
      %3198 = vmatpush2.msra.mxu0 0.0
      %3199 = vmatprep.subr.mxu0 0.0
      %3200 = vmatpush2.msra.mxu0 0.0
      %3201 = vmatprep.subr.mxu0 0.0
      %3202 = vmatpush2.msra.mxu0 0.0
      %3203 = vmatprep.subr.mxu0 0.0
      %3204 = vmatpush2.msra.mxu0 0.0
      %3205 = vmatprep.subr.mxu0 0.0
      %3206 = vmatpush2.msra.mxu0 0.0
      %3207 = vmatprep.subr.mxu0 0.0
      %3208 = vmatpush2.msra.mxu0 0.0
      %3209 = vmatprep.subr.mxu0 0.0
      %3210 = vmatpush2.msra.mxu0 0.0
      %3211 = vmatprep.subr.mxu0 0.0
      %3212 = vmatpush2.msra.mxu0 0.0
      %3213 = vmatprep.mubr.f32.mxu0 0.0
      %3214 = vmatmul.mubr.f32.gmra.mxu0 %v3145
      %v3215 = vpop.f32.mrf.mxu0
      %v3216 = vadd.f32 0.0, %v3215
      %v3217 = vpop.f32.mrf.mxu0
      %3218 = vdwg.mxu0
      %v3220 = vsel %vm2092, %v2091, 0
      %v3222 = vsel %vm2096, %v1914, 0
      %3224 = vmatprep.subr.mxu0 0.0
      %3225 = vmatpush1.msra.mxu0 0.0
      %3226 = vmatprep.subr.mxu0 0.0
      %3227 = vmatpush1.msra.mxu0 0.0
      %3228 = vmatprep.subr.mxu0 0.0
      %3229 = vmatpush1.msra.mxu0 0.0
      %3230 = vmatprep.subr.mxu0 0.0
      %3231 = vmatpush1.msra.mxu0 0.0
      %3232 = vmatprep.subr.mxu0 0.0
      %3233 = vmatpush1.msra.mxu0 0.0
      %3234 = vmatprep.subr.mxu0 0.0
      %3235 = vmatpush1.msra.mxu0 0.0
      %3236 = vmatprep.subr.mxu0 0.0
      %3237 = vmatpush1.msra.mxu0 0.0
      %3238 = vmatprep.subr.mxu0 0.0
      %3239 = vmatpush1.msra.mxu0 0.0
      %3240 = vmatprep.subr.mxu0 0.0
      %3241 = vmatpush1.msra.mxu0 0.0
      %3242 = vmatprep.subr.mxu0 0.0
      %3243 = vmatpush1.msra.mxu0 0.0
      %3244 = vmatprep.subr.mxu0 0.0
      %3245 = vmatpush1.msra.mxu0 0.0
      %3246 = vmatprep.subr.mxu0 0.0
      %3247 = vmatpush1.msra.mxu0 0.0
      %3248 = vmatprep.subr.mxu0 0.0
      %3249 = vmatpush1.msra.mxu0 0.0
      %3250 = vmatprep.subr.mxu0 0.0
      %3251 = vmatpush1.msra.mxu0 0.0
      %3252 = vmatprep.subr.mxu0 0.0
      %3253 = vmatpush1.msra.mxu0 0.0
      %3254 = vmatprep.subr.mxu0 0.0
      %3255 = vmatpush1.msra.mxu0 %v3222
      %3256 = vmatprep.subr.mxu0 0.0
      %3257 = vmatpush2.msra.mxu0 0.0
      %3258 = vmatprep.subr.mxu0 0.0
      %3259 = vmatpush2.msra.mxu0 0.0
      %3260 = vmatprep.subr.mxu0 0.0
      %3261 = vmatpush2.msra.mxu0 0.0
      %3262 = vmatprep.subr.mxu0 0.0
      %3263 = vmatpush2.msra.mxu0 0.0
      %3264 = vmatprep.subr.mxu0 0.0
      %3265 = vmatpush2.msra.mxu0 0.0
      %3266 = vmatprep.subr.mxu0 0.0
      %3267 = vmatpush2.msra.mxu0 0.0
      %3268 = vmatprep.subr.mxu0 0.0
      %3269 = vmatpush2.msra.mxu0 0.0
      %3270 = vmatprep.subr.mxu0 0.0
      %3271 = vmatpush2.msra.mxu0 0.0
      %3272 = vmatprep.subr.mxu0 0.0
      %3273 = vmatpush2.msra.mxu0 0.0
      %3274 = vmatprep.subr.mxu0 0.0
      %3275 = vmatpush2.msra.mxu0 0.0
      %3276 = vmatprep.subr.mxu0 0.0
      %3277 = vmatpush2.msra.mxu0 0.0
      %3278 = vmatprep.subr.mxu0 0.0
      %3279 = vmatpush2.msra.mxu0 0.0
      %3280 = vmatprep.subr.mxu0 0.0
      %3281 = vmatpush2.msra.mxu0 0.0
      %3282 = vmatprep.subr.mxu0 0.0
      %3283 = vmatpush2.msra.mxu0 0.0
      %3284 = vmatprep.subr.mxu0 0.0
      %3285 = vmatpush2.msra.mxu0 0.0
      %3286 = vmatprep.subr.mxu0 0.0
      %3287 = vmatpush2.msra.mxu0 0.0
      %3288 = vmatprep.mubr.f32.mxu0 0.0
      %3289 = vmatmul.mubr.f32.gmra.mxu0 %v3220
      %v3290 = vpop.f32.mrf.mxu0
      %v3291 = vadd.f32 0.0, %v3290
      %v3292 = vpop.f32.mrf.mxu0
      %3293 = vdwg.mxu0
      %v3298 = vcombine.low %v2166, %v2241
      %v3299 = vcombine.low %v2316, %v2391
      %v3306 = vcombine.low %v2466, %v2541
      %v3307 = vcombine.low %v2616, %v2691
      %3308 = vrot.lane.b32.xlu0 %v3306, 8
      %v3309 = vpop.permute.xlu0 %3308
      %3310 = vrot.lane.b32.xlu0 %v3307, 8
      %v3311 = vpop.permute.xlu0 %3310
      %v3318 = vcombine.low %v2766, %v2841
      %v3319 = vcombine.low %v2916, %v2991
      %3320 = vrot.lane.b32.xlu0 %v3318, 16
      %v3321 = vpop.permute.xlu0 %3320
      %3322 = vrot.lane.b32.xlu0 %v3319, 16
      %v3323 = vpop.permute.xlu0 %3322
      %v3330 = vcombine.low %v3066, %v3141
      %v3331 = vcombine.low %v3216, %v3291
      %3332 = vrot.lane.b32.xlu0 %v3330, 24
      %v3333 = vpop.permute.xlu0 %3332
      %3334 = vrot.lane.b32.xlu0 %v3331, 24
      %v3335 = vpop.permute.xlu0 %3334
      %v3338 = vsel %vm658, %v3298, %v3309
      %v3339 = vsel %vm658, %v3299, %v3311
      %vm3340 = vcmask 130048
      %v3341 = vsel %vm3340, %v3338, %v3321
      %v3342 = vsel %vm3340, %v3339, %v3323
      %vm3343 = vcmask 195584
      %v3344 = vsel %vm3343, %v3341, %v3333
      %v3345 = vsel %vm3343, %v3342, %v3335
      %v3346 = vld [vmem:[%s5] sm:$0xff]
      %v3347 = vld [vmem:[%s5 + $0x8] sm:$0xff]
      %v3348 = vld [vmem:[%s5 + $0x10] sm:$0xff]
      %v3349 = vld [vmem:[%s5 + $0x18] sm:$0xff]
      %v3350 = vld [vmem:[%s6] sm:$0x1]
      %v3352 = vlaneseq
      %v3353 = vshrl.u32 %v3352, 7
      %v3354 = vsub.s32 0, %v3353
      %v3355 = vrot.slane %v3350, %v3354
      %v3358 = vsel %vm396, %v3344, 0
      %v3361 = vsel %vm396, %v3345, 0
      %3363 = vmatprep.subr.mxu0 0.0
      %3364 = vmatpush1.msra.mxu0 0.0
      %3365 = vmatprep.subr.mxu0 0.0
      %3366 = vmatpush1.msra.mxu0 0.0
      %3367 = vmatprep.subr.mxu0 0.0
      %3368 = vmatpush1.msra.mxu0 0.0
      %3369 = vmatprep.subr.mxu0 0.0
      %3370 = vmatpush1.msra.mxu0 0.0
      %3371 = vmatprep.subr.mxu0 0.0
      %3372 = vmatpush1.msra.mxu0 0.0
      %3373 = vmatprep.subr.mxu0 0.0
      %3374 = vmatpush1.msra.mxu0 0.0
      %3375 = vmatprep.subr.mxu0 0.0
      %3376 = vmatpush1.msra.mxu0 0.0
      %3377 = vmatprep.subr.mxu0 0.0
      %3378 = vmatpush1.msra.mxu0 0.0
      %3379 = vmatprep.subr.mxu0 0.0
      %3380 = vmatpush1.msra.mxu0 0.0
      %3381 = vmatprep.subr.mxu0 0.0
      %3382 = vmatpush1.msra.mxu0 0.0
      %3383 = vmatprep.subr.mxu0 0.0
      %3384 = vmatpush1.msra.mxu0 0.0
      %3385 = vmatprep.subr.mxu0 0.0
      %3386 = vmatpush1.msra.mxu0 0.0
      %3387 = vmatprep.subr.mxu0 0.0
      %3388 = vmatpush1.msra.mxu0 %v3349
      %3389 = vmatprep.subr.mxu0 0.0
      %3390 = vmatpush1.msra.mxu0 %v3348
      %3391 = vmatprep.subr.mxu0 0.0
      %3392 = vmatpush1.msra.mxu0 %v3347
      %3393 = vmatprep.subr.mxu0 0.0
      %3394 = vmatpush1.msra.mxu0 %v3346
      %3395 = vmatprep.subr.mxu0 0.0
      %3396 = vmatpush2.msra.mxu0 0.0
      %3397 = vmatprep.subr.mxu0 0.0
      %3398 = vmatpush2.msra.mxu0 0.0
      %3399 = vmatprep.subr.mxu0 0.0
      %3400 = vmatpush2.msra.mxu0 0.0
      %3401 = vmatprep.subr.mxu0 0.0
      %3402 = vmatpush2.msra.mxu0 0.0
      %3403 = vmatprep.subr.mxu0 0.0
      %3404 = vmatpush2.msra.mxu0 0.0
      %3405 = vmatprep.subr.mxu0 0.0
      %3406 = vmatpush2.msra.mxu0 0.0
      %3407 = vmatprep.subr.mxu0 0.0
      %3408 = vmatpush2.msra.mxu0 0.0
      %3409 = vmatprep.subr.mxu0 0.0
      %3410 = vmatpush2.msra.mxu0 0.0
      %3411 = vmatprep.subr.mxu0 0.0
      %3412 = vmatpush2.msra.mxu0 0.0
      %3413 = vmatprep.subr.mxu0 0.0
      %3414 = vmatpush2.msra.mxu0 0.0
      %3415 = vmatprep.subr.mxu0 0.0
      %3416 = vmatpush2.msra.mxu0 0.0
      %3417 = vmatprep.subr.mxu0 0.0
      %3418 = vmatpush2.msra.mxu0 0.0
      %3419 = vmatprep.subr.mxu0 0.0
      %3420 = vmatpush2.msra.mxu0 0.0
      %3421 = vmatprep.subr.mxu0 0.0
      %3422 = vmatpush2.msra.mxu0 0.0
      %3423 = vmatprep.subr.mxu0 0.0
      %3424 = vmatpush2.msra.mxu0 0.0
      %3425 = vmatprep.subr.mxu0 0.0
      %3426 = vmatpush2.msra.mxu0 0.0
      %3427 = vmatprep.mubr.f32.mxu0 0.0
      %3428 = vmatmul.mubr.f32.gmra.mxu0 %v3358
      %v3429 = vpop.f32.mrf.mxu0
      %v3430 = vadd.f32 %v3355, %v3429
      %v3431 = vpop.f32.mrf.mxu0
      %3432 = vmatprep.mubr.f32.mxu0 0.0
      %3433 = vmatmul.mubr.f32.gmra.mxu0 %v3361
      %v3434 = vpop.f32.mrf.mxu0
      %v3435 = vadd.f32 %v3355, %v3434
      %v3436 = vpop.f32.mrf.mxu0
      %3437 = vdwg.mxu0
      %v3438 = vld [vmem:[%s7] sm:$0xff]
      %v3439 = vld [vmem:[%s7 + $0x8] sm:$0xff]
      %v3440 = vld [vmem:[%s7 + $0x10] sm:$0xff]
      %v3441 = vld [vmem:[%s7 + $0x18] sm:$0xff]
      %v3442 = vld [vmem:[%s8] sm:$0x1]
      %v3444 = vlaneseq
      %v3445 = vshrl.u32 %v3444, 7
      %v3446 = vsub.s32 0, %v3445
      %v3447 = vrot.slane %v3442, %v3446
      %v3450 = vsel %vm396, %v3430, 0
      %v3453 = vsel %vm396, %v3435, 0
      %3455 = vmatprep.subr.mxu0 0.0
      %3456 = vmatpush1.msra.mxu0 0.0
      %3457 = vmatprep.subr.mxu0 0.0
      %3458 = vmatpush1.msra.mxu0 0.0
      %3459 = vmatprep.subr.mxu0 0.0
      %3460 = vmatpush1.msra.mxu0 0.0
      %3461 = vmatprep.subr.mxu0 0.0
      %3462 = vmatpush1.msra.mxu0 0.0
      %3463 = vmatprep.subr.mxu0 0.0
      %3464 = vmatpush1.msra.mxu0 0.0
      %3465 = vmatprep.subr.mxu0 0.0
      %3466 = vmatpush1.msra.mxu0 0.0
      %3467 = vmatprep.subr.mxu0 0.0
      %3468 = vmatpush1.msra.mxu0 0.0
      %3469 = vmatprep.subr.mxu0 0.0
      %3470 = vmatpush1.msra.mxu0 0.0
      %3471 = vmatprep.subr.mxu0 0.0
      %3472 = vmatpush1.msra.mxu0 0.0
      %3473 = vmatprep.subr.mxu0 0.0
      %3474 = vmatpush1.msra.mxu0 0.0
      %3475 = vmatprep.subr.mxu0 0.0
      %3476 = vmatpush1.msra.mxu0 0.0
      %3477 = vmatprep.subr.mxu0 0.0
      %3478 = vmatpush1.msra.mxu0 0.0
      %3479 = vmatprep.subr.mxu0 0.0
      %3480 = vmatpush1.msra.mxu0 %v3441
      %3481 = vmatprep.subr.mxu0 0.0
      %3482 = vmatpush1.msra.mxu0 %v3440
      %3483 = vmatprep.subr.mxu0 0.0
      %3484 = vmatpush1.msra.mxu0 %v3439
      %3485 = vmatprep.subr.mxu0 0.0
      %3486 = vmatpush1.msra.mxu0 %v3438
      %3487 = vmatprep.subr.mxu0 0.0
      %3488 = vmatpush2.msra.mxu0 0.0
      %3489 = vmatprep.subr.mxu0 0.0
      %3490 = vmatpush2.msra.mxu0 0.0
      %3491 = vmatprep.subr.mxu0 0.0
      %3492 = vmatpush2.msra.mxu0 0.0
      %3493 = vmatprep.subr.mxu0 0.0
      %3494 = vmatpush2.msra.mxu0 0.0
      %3495 = vmatprep.subr.mxu0 0.0
      %3496 = vmatpush2.msra.mxu0 0.0
      %3497 = vmatprep.subr.mxu0 0.0
      %3498 = vmatpush2.msra.mxu0 0.0
      %3499 = vmatprep.subr.mxu0 0.0
      %3500 = vmatpush2.msra.mxu0 0.0
      %3501 = vmatprep.subr.mxu0 0.0
      %3502 = vmatpush2.msra.mxu0 0.0
      %3503 = vmatprep.subr.mxu0 0.0
      %3504 = vmatpush2.msra.mxu0 0.0
      %3505 = vmatprep.subr.mxu0 0.0
      %3506 = vmatpush2.msra.mxu0 0.0
      %3507 = vmatprep.subr.mxu0 0.0
      %3508 = vmatpush2.msra.mxu0 0.0
      %3509 = vmatprep.subr.mxu0 0.0
      %3510 = vmatpush2.msra.mxu0 0.0
      %3511 = vmatprep.subr.mxu0 0.0
      %3512 = vmatpush2.msra.mxu0 0.0
      %3513 = vmatprep.subr.mxu0 0.0
      %3514 = vmatpush2.msra.mxu0 0.0
      %3515 = vmatprep.subr.mxu0 0.0
      %3516 = vmatpush2.msra.mxu0 0.0
      %3517 = vmatprep.subr.mxu0 0.0
      %3518 = vmatpush2.msra.mxu0 0.0
      %3519 = vmatprep.mubr.f32.mxu0 0.0
      %3520 = vmatmul.mubr.f32.gmra.mxu0 %v3450
      %v3521 = vpop.f32.mrf.mxu0
      %v3522 = vadd.f32 %v3447, %v3521
      %v3523 = vpop.f32.mrf.mxu0
      %3524 = vmatprep.mubr.f32.mxu0 0.0
      %3525 = vmatmul.mubr.f32.gmra.mxu0 %v3453
      %v3526 = vpop.f32.mrf.mxu0
      %v3527 = vadd.f32 %v3447, %v3526
      %v3528 = vpop.f32.mrf.mxu0
      %3529 = vdwg.mxu0
      %3530 = vst.msk [vmem:[%s369] sm:$0xff] %vm3340, %v3522
      %3531 = vst.msk [vmem:[%s369 + $0x8] sm:$0xff] %vm3340, %v3527
      %v3532 = vcombine.low %v2076, %v2077
      %v3533 = vcombine.low %v2078, %v2079
      %v3534 = vcombine.low %v2080, %v2081
      %v3535 = vcombine.low %v2082, %v2083
      %v3536 = vcombine.low %v2084, %v2085
      %v3537 = vcombine.low %v2086, %v2087
      %v3538 = vcombine.low %v2088, %v2089
      %v3539 = vcombine.low %v2090, %v2091
      %v3548 = vsel %vm2092, %v3532, 0.0
      %v3549 = vsel %vm2092, %v3534, 0.0
      %v3550 = vadd.f32 %v3548, %v3549
      %v3551 = vsel %vm2092, %v3536, 0.0
      %v3552 = vadd.f32 %v3550, %v3551
      %v3553 = vsel %vm2092, %v3538, 0.0
      %v3554 = vadd.f32 %v3552, %v3553
      %v3555 = vsel %vm2092, %v3533, 0.0
      %v3556 = vsel %vm2092, %v3535, 0.0
      %v3557 = vadd.f32 %v3555, %v3556
      %v3558 = vsel %vm2092, %v3537, 0.0
      %v3559 = vadd.f32 %v3557, %v3558
      %v3560 = vsel %vm2092, %v3539, 0.0
      %v3561 = vadd.f32 %v3559, %v3560
      %v3562 = vrcp.pop 4.0
      %v3563 = vmul.f32 %v3554, %v3562
      %v3564 = vmul.f32 %v3561, %v3562
      %3565 = vst.msk [vmem:[%s375] sm:$0xff] %vm2092, %v3563
      %3566 = vst.msk [vmem:[%s375 + $0x8] sm:$0xff] %vm2092, %v3564
      %s3567 = smul.u32 2, %s22
      %p3568 = scmp.lt.s32.totalorder %s3567, 7
      %s3569 = scalar_select %p3568, %s3567, 7
      %s3570 = smul.addr %s3569, 8
      %s3571 = scalar_lea.vmem %s9, %s3570
      %s3572 = smul.u32 2, %s22
      %p3573 = scmp.lt.s32.totalorder %s3572, 7
      %s3574 = scalar_select %p3573, %s3572, 7
      %s3575 = smul.addr %s3574, 8
      %s3576 = scalar_lea.vmem %s10, %s3575
      // Predicated region
      $region57: #{multiscale_encoder.3} parent=55 // pred_check
        %p3577 = pneg %p234
      $region58: #{multiscale_encoder.3} parent=55 // pred_check_branch
        %3579 = sbr.rel (%p3577) target = $region60
      $region59: #{multiscale_encoder.3} parent=55 // pred_region
        %s3580 = smul.u32 2, %s22
      $region60: #{multiscale_encoder.3} parent=55 // pred_fallthru
        _
      // Predicated region
      $region61: #{multiscale_encoder.3} parent=55 // pred_check
        %p3581 = pneg %p260
      $region62: #{multiscale_encoder.3} parent=55 // pred_check_branch
        %3583 = sbr.rel (%p3581) target = $region64
      $region63: #{multiscale_encoder.3} parent=55 // pred_region
        %s3584 = smul.u32 2, %s22
      $region64: #{multiscale_encoder.3} parent=55 // pred_fallthru
        _
    $region56: #{multiscale_encoder.3} parent=5 // pred_fallthru
      _
    %p3585 = scmp.le.s32.totalorder 2, %s17
    // Predicated region
    $region65: #{multiscale_encoder.3} parent=5 // pred_check
      %p3586 = pneg %p3585
    $region66: #{multiscale_encoder.3} parent=5 // pred_check_branch
      %3588 = sbr.rel (%p3586) target = $region68
    $region67: #{multiscale_encoder.3} parent=5 // pred_region
      %s3589 = ssub.s32 %s17, 2
      // Predicated region
      $region69: #{multiscale_encoder.3} parent=67 // pred_check
        %p3590 = pneg %p240
      $region70: #{multiscale_encoder.3} parent=67 // pred_check_branch
        %3592 = sbr.rel (%p3590) target = $region72
      $region71: #{multiscale_encoder.3} parent=67 // pred_region
        %s3593 = smul.u32 2, %s23
        %p3594 = scmp.lt.s32.totalorder %s3593, 7
        %s3595 = scalar_select %p3594, %s3593, 7
        %s3596 = smul.addr %s3595, 8
        %s3597 = scalar_lea.vmem %s9, %s3596
      $region72: #{multiscale_encoder.3} parent=67 // pred_fallthru
        _
      // Predicated region
      $region73: #{multiscale_encoder.3} parent=67 // pred_check
        %p3598 = pneg %p266
      $region74: #{multiscale_encoder.3} parent=67 // pred_check_branch
        %3600 = sbr.rel (%p3598) target = $region76
      $region75: #{multiscale_encoder.3} parent=67 // pred_region
        %s3601 = smul.u32 2, %s23
        %p3602 = scmp.lt.s32.totalorder %s3601, 7
        %s3603 = scalar_select %p3602, %s3601, 7
        %s3604 = smul.addr %s3603, 8
        %s3605 = scalar_lea.vmem %s10, %s3604
      $region76: #{multiscale_encoder.3} parent=67 // pred_fallthru
        _
    $region68: #{multiscale_encoder.3} parent=5 // pred_fallthru
      _
  $region6: #{multiscale_encoder.3} parent=0 // loop_footer
    %s21 = sadd.s32 1, %s17
  $region7: #{multiscale_encoder.3} parent=0 // loop_footer_branch
    %16 = sbr.rel target = $region3
  $region8: #{multiscale_encoder.3} parent=0 // loop_exit
    _

</llo_original>
